<compile_context>
chip_gen: v7x
topology: tpu7x:2x2x1
jax: 0.10.0
libtpu: 0.0.40
codegen_flags: <defaults>
</compile_context>

<pallas_src>
import functools

import jax
import jax.numpy as jnp
from jax.experimental import pallas as pl
from jax.experimental.pallas import tpu as pltpu


# ----------------------------------------------------------------------------
# Kernel 1: one transformer layer per grid step.  grid = (B, L); the residual
# activation persists in a VMEM scratch across the (inner, "arbitrary") layer axis.
# ----------------------------------------------------------------------------
def _layer_kernel(emb_ref,                       # (1, T, C)    f32
                  ln1w_ref, ln1b_ref,            # (1, 1, C)    f32
                  wqkv_ref, bqkv_ref,            # (1, C, 3C)  bf16, (1, 1, 3C) f32
                  wo_ref, bo_ref,                # (1, C, C)   bf16, (1, 1, C)  f32
                  ln2w_ref, ln2b_ref,            # (1, 1, C)    f32
                  wf1_ref, bf1_ref,              # (1, C, 4C)  bf16, (1, 1, 4C) f32
                  wf2_ref, bf2_ref,              # (1, 4C, C)  bf16, (1, 1, C)  f32
                  h_out_ref,                     # (1, T, C)    f32 (final hidden state)
                  x_scratch,                     # (T, C)       f32 residual accumulator
                  *, num_heads):
    l = pl.program_id(1)
    n_layers = pl.num_programs(1)
    T, C = x_scratch.shape
    hd = C // num_heads
    scale = 1.0 / (hd ** 0.5)

    @pl.when(l == 0)
    def _():
        x_scratch[...] = emb_ref[0]

    x = x_scratch[...]                           # (T, C) f32

    # causal mask (row >= col) with 2-D iota (TPU requirement).
    row = jax.lax.broadcasted_iota(jnp.int32, (T, T), 0)
    col = jax.lax.broadcasted_iota(jnp.int32, (T, T), 1)
    causal = (row >= col)[None, :, :]            # (1, T, T)

    def layernorm(v, w_ref, b_ref):              # f32 statistics
        mu = jnp.mean(v, axis=-1, keepdims=True)
        var = jnp.mean((v - mu) ** 2, axis=-1, keepdims=True)
        return (v - mu) * jax.lax.rsqrt(var + 1e-5) * w_ref[0] + b_ref[0]

    # ---- causal multi-head self-attention (pre-LN, residual) ----
    h_in = layernorm(x, ln1w_ref, ln1b_ref).astype(jnp.bfloat16)
    qkv = jnp.dot(h_in, wqkv_ref[0], preferred_element_type=jnp.float32) + bqkv_ref[0]

    # batched heads: (T, C) -> (H, T, hd); scale folded into q before the score matmul.
    q = (qkv[:, 0 * C:1 * C] * scale).reshape(T, num_heads, hd)
    k = qkv[:, 1 * C:2 * C].reshape(T, num_heads, hd)
    v = qkv[:, 2 * C:3 * C].reshape(T, num_heads, hd)
    q = jnp.transpose(q, (1, 0, 2)).astype(jnp.bfloat16)      # (H, T, hd)
    k = jnp.transpose(k, (1, 0, 2)).astype(jnp.bfloat16)
    v = jnp.transpose(v, (1, 0, 2)).astype(jnp.bfloat16)

    s = jnp.einsum('htd,hsd->hts', q, k,
                   preferred_element_type=jnp.float32)        # (H, T, T) f32
    s = jnp.where(causal, s, jnp.float32(-1e30))
    m = jnp.max(s, axis=-1, keepdims=True)
    p = jnp.exp(s - m)
    denom = jnp.sum(p, axis=-1, keepdims=True)
    p = p * pl.reciprocal(denom, approx=True)                 # EUP divide
    o = jnp.einsum('hts,hsd->htd', p.astype(jnp.bfloat16), v,
                   preferred_element_type=jnp.float32)        # (H, T, hd) f32
    attn = jnp.transpose(o, (1, 0, 2)).reshape(T, C).astype(jnp.bfloat16)
    x = x + jnp.dot(attn, wo_ref[0], preferred_element_type=jnp.float32) + bo_ref[0]

    # ---- MLP (pre-LN, residual) ----
    h2 = layernorm(x, ln2w_ref, ln2b_ref).astype(jnp.bfloat16)
    f = jnp.dot(h2, wf1_ref[0], preferred_element_type=jnp.float32) + bf1_ref[0]
    f = jnp.maximum(f, 0.0).astype(jnp.bfloat16)              # ReLU
    x = x + jnp.dot(f, wf2_ref[0], preferred_element_type=jnp.float32) + bf2_ref[0]

    x_scratch[...] = x

    @pl.when(l == n_layers - 1)
    def _():
        h_out_ref[0] = x


# ----------------------------------------------------------------------------
# Kernel 2: vocab projection, tiled over V so output stores are lane-dense and
# w_out never has to be fully resident in VMEM.
# ----------------------------------------------------------------------------
def _proj_kernel(h_ref, w_ref, b_ref, out_ref):
    h = h_ref[0].astype(jnp.bfloat16)                                   # (T, C)
    logits = jnp.dot(h, w_ref[...], preferred_element_type=jnp.float32) # (T, TV)
    out_ref[0] = logits + b_ref[...]


# ----------------------------------------------------------------------------
# Wrapper: embedding gather (glue) + two pallas_calls.
# ----------------------------------------------------------------------------
def decoder_forward(x_ids, params, *, num_heads):
    B, T = x_ids.shape
    L, _, C = params["w_o"].shape
    V = params["w_out"].shape[1]

    # glue: embedding lookups (gather) + positional add; heavy math is in-kernel.
    tok = jnp.take(params["tok_emb"], x_ids, axis=0)                    # (B, T, C)
    pos = params["pos_emb"][:T]                                         # (T, C)
    emb = (tok + pos[None, :, :]).astype(jnp.float32)

    def layer_spec(shape):
        blk = (1,) + tuple(shape[1:])
        return pl.BlockSpec(blk, lambda b, l: (l, 0, 0))

    kernel = functools.partial(_layer_kernel, num_heads=num_heads)

    hidden = pl.pallas_call(
        kernel,
        out_shape=jax.ShapeDtypeStruct((B, T, C), jnp.float32),
        grid=(B, L),
        in_specs=[
            pl.BlockSpec((1, T, C), lambda b, l: (b, 0, 0)),            # emb
            layer_spec(params["ln1_w"].shape), layer_spec(params["ln1_b"].shape),
            layer_spec(params["w_qkv"].shape), layer_spec(params["b_qkv"].shape),
            layer_spec(params["w_o"].shape), layer_spec(params["b_o"].shape),
            layer_spec(params["ln2_w"].shape), layer_spec(params["ln2_b"].shape),
            layer_spec(params["w_ff1"].shape), layer_spec(params["b_ff1"].shape),
            layer_spec(params["w_ff2"].shape), layer_spec(params["b_ff2"].shape),
        ],
        out_specs=pl.BlockSpec((1, T, C), lambda b, l: (b, 0, 0)),
        scratch_shapes=[pltpu.VMEM((T, C), jnp.float32)],               # residual
        compiler_params=pltpu.CompilerParams(
            dimension_semantics=("parallel", "arbitrary")),
    )(emb,
      params["ln1_w"], params["ln1_b"],
      params["w_qkv"], params["b_qkv"],
      params["w_o"], params["b_o"],
      params["ln2_w"], params["ln2_b"],
      params["w_ff1"], params["b_ff1"],
      params["w_ff2"], params["b_ff2"])

    # choose a vocab tile: multiple of 128 when possible, else full V (toy sizes).
    if V % 128 == 0:
        TV = min(V, 2048)
        while V % TV != 0:
            TV //= 2
    else:
        TV = V
    nV = V // TV

    logits = pl.pallas_call(
        _proj_kernel,
        out_shape=jax.ShapeDtypeStruct((B, T, V), jnp.float32),
        grid=(B, nV),
        in_specs=[
            pl.BlockSpec((1, T, C), lambda b, j: (b, 0, 0)),            # hidden
            pl.BlockSpec((C, TV), lambda b, j: (0, j)),                 # w_out tile
            pl.BlockSpec((1, TV), lambda b, j: (0, j)),                 # b_out tile
        ],
        out_specs=pl.BlockSpec((1, T, TV), lambda b, j: (b, 0, j)),
        compiler_params=pltpu.CompilerParams(
            dimension_semantics=("parallel", "parallel")),
    )(hidden, params["w_out"], params["b_out"])
    return logits


def compute_loss(logits, y):
    # glue: F.cross_entropy(logits.view(-1,V), y.view(-1), ignore_index=-1, reduction='sum')
    B, T, V = logits.shape
    flat = logits.reshape(-1, V)
    tgt = y.reshape(-1)
    valid = tgt != -1
    tgt_safe = jnp.where(valid, tgt, 0)
    logz = jax.nn.logsumexp(flat, axis=-1)
    picked = jnp.take_along_axis(flat, tgt_safe[:, None], axis=-1)[:, 0]
    nll = jnp.where(valid, logz - picked, 0.0)
    return jnp.sum(nll)


def init_params(key, vocab_size, channel_size, block_length, n_layers):
    C, V, L = channel_size, vocab_size, n_layers
    ks = jax.random.split(key, 8)
    s = 0.02

    def w(k, shape):  # matmul weights stored in bf16 (MXU-native, half the DMA bytes)
        return (s * jax.random.normal(k, shape, jnp.float32)).astype(jnp.bfloat16)

    params = {
        "tok_emb": s * jax.random.normal(ks[0], (V, C), jnp.float32),
        "pos_emb": s * jax.random.normal(ks[1], (block_length, C), jnp.float32),
        "ln1_w": jnp.ones((L, 1, C), jnp.float32),
        "ln1_b": jnp.zeros((L, 1, C), jnp.float32),
        "w_qkv": w(ks[2], (L, C, 3 * C)),
        "b_qkv": jnp.zeros((L, 1, 3 * C), jnp.float32),
        "w_o": w(ks[3], (L, C, C)),
        "b_o": jnp.zeros((L, 1, C), jnp.float32),
        "ln2_w": jnp.ones((L, 1, C), jnp.float32),
        "ln2_b": jnp.zeros((L, 1, C), jnp.float32),
        "w_ff1": w(ks[4], (L, C, 4 * C)),
        "b_ff1": jnp.zeros((L, 1, 4 * C), jnp.float32),
        "w_ff2": w(ks[5], (L, 4 * C, C)),
        "b_ff2": jnp.zeros((L, 1, C), jnp.float32),
        "w_out": w(ks[6], (C, V)),
        "b_out": jnp.zeros((1, V), jnp.float32),
    }
    return params


if __name__ == "__main__":
    # small but lane-friendly shapes (C, 4C, V multiples of 128; T multiple of 8)
    vocab_size = 128
    channel_size = 128
    block_length = 16
    num_heads = 4
    n_layers = 2
    batch = 2

    key = jax.random.PRNGKey(0)
    kp, kx, ky = jax.random.split(key, 3)
    params = init_params(kp, vocab_size, channel_size, block_length, n_layers)

    x = jax.random.randint(kx, (batch, block_length), 0, vocab_size, dtype=jnp.int32)
    y = jax.random.randint(ky, (batch, block_length), 0, vocab_size, dtype=jnp.int32)

    logits = decoder_forward(x, params, num_heads=num_heads)
    logits = jax.block_until_ready(logits)
    loss = jax.block_until_ready(compute_loss(logits, y))

    assert logits.shape == (batch, block_length, vocab_size)
    assert bool(jnp.isfinite(loss))
    print("KERNEL_OK")
</pallas_src>

<mosaic_0001>
module attributes {stable_mosaic.version = 11 : i64} {
  func.func @_layer_kernel(%arg0: i32, %arg1: i32, %arg2: memref<1x16x128xf32, #tpu.memory_space<vmem>>, %arg3: memref<1x1x128xf32, #tpu.memory_space<vmem>>, %arg4: memref<1x1x128xf32, #tpu.memory_space<vmem>>, %arg5: memref<1x128x384xbf16, #tpu.memory_space<vmem>>, %arg6: memref<1x1x384xf32, #tpu.memory_space<vmem>>, %arg7: memref<1x128x128xbf16, #tpu.memory_space<vmem>>, %arg8: memref<1x1x128xf32, #tpu.memory_space<vmem>>, %arg9: memref<1x1x128xf32, #tpu.memory_space<vmem>>, %arg10: memref<1x1x128xf32, #tpu.memory_space<vmem>>, %arg11: memref<1x128x512xbf16, #tpu.memory_space<vmem>>, %arg12: memref<1x1x512xf32, #tpu.memory_space<vmem>>, %arg13: memref<1x512x128xbf16, #tpu.memory_space<vmem>>, %arg14: memref<1x1x128xf32, #tpu.memory_space<vmem>>, %arg15: memref<1x16x128xf32, #tpu.memory_space<vmem>>, %arg16: memref<16x128xf32, #tpu.memory_space<vmem>>) attributes {dimension_semantics = [#tpu.dimension_semantics<parallel>, #tpu.dimension_semantics<arbitrary>], iteration_bounds = array<i64: 2, 2>, scalar_prefetch = 0 : i64, scratch_operands = 1 : i64, tpu.core_type = #tpu.core_type<tc>, window_params = [{transform_indices = @transform_0, window_bounds = array<i64: 1, 16, 128>}, {transform_indices = @transform_1, window_bounds = array<i64: 1, 1, 128>}, {transform_indices = @transform_2, window_bounds = array<i64: 1, 1, 128>}, {transform_indices = @transform_3, window_bounds = array<i64: 1, 128, 384>}, {transform_indices = @transform_4, window_bounds = array<i64: 1, 1, 384>}, {transform_indices = @transform_5, window_bounds = array<i64: 1, 128, 128>}, {transform_indices = @transform_6, window_bounds = array<i64: 1, 1, 128>}, {transform_indices = @transform_7, window_bounds = array<i64: 1, 1, 128>}, {transform_indices = @transform_8, window_bounds = array<i64: 1, 1, 128>}, {transform_indices = @transform_9, window_bounds = array<i64: 1, 128, 512>}, {transform_indices = @transform_10, window_bounds = array<i64: 1, 1, 512>}, {transform_indices = @transform_11, window_bounds = array<i64: 1, 512, 128>}, {transform_indices = @transform_12, window_bounds = array<i64: 1, 1, 128>}, {transform_indices = @transform_13, window_bounds = array<i64: 1, 16, 128>}]} {
    %c0_i32 = arith.constant 0 : i32
    %0 = arith.cmpi eq, %arg1, %c0_i32 : i32
    %1 = arith.extui %0 : i1 to i32
    %c0_i32_0 = arith.constant 0 : i32
    %2 = arith.cmpi ne, %1, %c0_i32_0 : i32
    scf.if %2 {
      %c0_61 = arith.constant 0 : index
      %c0_62 = arith.constant 0 : index
      %c0_63 = arith.constant 0 : index
      %133 = vector.load %arg2[%c0_61, %c0_62, %c0_63] : memref<1x16x128xf32, #tpu.memory_space<vmem>>, vector<1x16x128xf32>
      %134 = vector.shape_cast %133 : vector<1x16x128xf32> to vector<16x128xf32>
      %c0_64 = arith.constant 0 : index
      %c0_65 = arith.constant 0 : index
      %135 = vector.load %arg16[%c0_64, %c0_65] : memref<16x128xf32, #tpu.memory_space<vmem>>, vector<16x128xf32>
      tpu.vector_store %arg16[%c0_64, %c0_65], %134 {strides = array<i32>} : memref<16x128xf32, #tpu.memory_space<vmem>>, vector<16x128xf32>,
    } else {
    }
    %c0 = arith.constant 0 : index
    %c0_1 = arith.constant 0 : index
    %3 = vector.load %arg16[%c0, %c0_1] : memref<16x128xf32, #tpu.memory_space<vmem>>, vector<16x128xf32>
    %4 = tpu.iota {dimensions = array<i32: 0>} : vector<16x16xi32>
    %5 = tpu.iota {dimensions = array<i32: 1>} : vector<16x16xi32>
    %6 = arith.cmpi sge, %4, %5 : vector<16x16xi32>
    %7 = vector.shape_cast %6 : vector<16x16xi1> to vector<1x16x16xi1>
    %cst = arith.constant dense<0.000000e+00> : vector<16xf32>
    %8 = vector.multi_reduction <add>, %3, %cst [1] : vector<16x128xf32> to vector<16xf32>
    %9 = vector.shape_cast %8 : vector<16xf32> to vector<16x1xf32>
    %cst_2 = arith.constant 1.280000e+02 : f32
    %10 = vector.broadcast %cst_2 : f32 to vector<16x1xf32>
    %11 = arith.divf %9, %10 : vector<16x1xf32>
    %12 = vector.broadcast %11 : vector<16x1xf32> to vector<16x128xf32>
    %13 = arith.subf %3, %12 : vector<16x128xf32>
    %14 = arith.mulf %13, %13 : vector<16x128xf32>
    %cst_3 = arith.constant dense<0.000000e+00> : vector<16xf32>
    %15 = vector.multi_reduction <add>, %14, %cst_3 [1] : vector<16x128xf32> to vector<16xf32>
    %16 = vector.shape_cast %15 : vector<16xf32> to vector<16x1xf32>
    %cst_4 = arith.constant 1.280000e+02 : f32
    %17 = vector.broadcast %cst_4 : f32 to vector<16x1xf32>
    %18 = arith.divf %16, %17 : vector<16x1xf32>
    %19 = vector.broadcast %11 : vector<16x1xf32> to vector<16x128xf32>
    %20 = arith.subf %3, %19 : vector<16x128xf32>
    %cst_5 = arith.constant 9.99999974E-6 : f32
    %21 = vector.broadcast %cst_5 : f32 to vector<16x1xf32>
    %22 = arith.addf %18, %21 : vector<16x1xf32>
    %23 = math.rsqrt %22 : vector<16x1xf32>
    %24 = vector.broadcast %23 : vector<16x1xf32> to vector<16x128xf32>
    %25 = arith.mulf %20, %24 : vector<16x128xf32>
    %c0_6 = arith.constant 0 : index
    %c0_7 = arith.constant 0 : index
    %c0_8 = arith.constant 0 : index
    %26 = vector.load %arg3[%c0_6, %c0_7, %c0_8] : memref<1x1x128xf32, #tpu.memory_space<vmem>>, vector<1x1x128xf32>
    %27 = vector.shape_cast %26 : vector<1x1x128xf32> to vector<1x128xf32>
    %28 = vector.broadcast %27 : vector<1x128xf32> to vector<16x128xf32>
    %29 = arith.mulf %25, %28 : vector<16x128xf32>
    %c0_9 = arith.constant 0 : index
    %c0_10 = arith.constant 0 : index
    %c0_11 = arith.constant 0 : index
    %30 = vector.load %arg4[%c0_9, %c0_10, %c0_11] : memref<1x1x128xf32, #tpu.memory_space<vmem>>, vector<1x1x128xf32>
    %31 = vector.shape_cast %30 : vector<1x1x128xf32> to vector<1x128xf32>
    %32 = vector.broadcast %31 : vector<1x128xf32> to vector<16x128xf32>
    %33 = arith.addf %29, %32 : vector<16x128xf32>
    %34 = arith.truncf %33 : vector<16x128xf32> to vector<16x128xbf16>
    %c0_12 = arith.constant 0 : index
    %c0_13 = arith.constant 0 : index
    %c0_14 = arith.constant 0 : index
    %35 = vector.load %arg5[%c0_12, %c0_13, %c0_14] : memref<1x128x384xbf16, #tpu.memory_space<vmem>>, vector<1x128x384xbf16>
    %36 = vector.shape_cast %35 : vector<1x128x384xbf16> to vector<128x384xbf16>
    %cst_15 = arith.constant dense<0.000000e+00> : vector<16x384xf32>
    %37 = tpu.matmul %34, %36, %cst_15 {dimension_numbers = #tpu.dot_dimension_numbers<[1], [0], [0], [1], [0, 0, 1, 1], [], []>} : vector<16x128xbf16>, vector<128x384xbf16>, vector<16x384xf32> -> vector<16x384xf32>
    %c0_16 = arith.constant 0 : index
    %c0_17 = arith.constant 0 : index
    %c0_18 = arith.constant 0 : index
    %38 = vector.load %arg6[%c0_16, %c0_17, %c0_18] : memref<1x1x384xf32, #tpu.memory_space<vmem>>, vector<1x1x384xf32>
    %39 = vector.shape_cast %38 : vector<1x1x384xf32> to vector<1x384xf32>
    %40 = vector.broadcast %39 : vector<1x384xf32> to vector<16x384xf32>
    %41 = arith.addf %37, %40 : vector<16x384xf32>
    %42 = vector.extract_strided_slice %41 {offsets = [0, 0], sizes = [16, 128], strides = [1, 1]} : vector<16x384xf32> to vector<16x128xf32>
    %cst_19 = arith.constant 0.176776692 : f32
    %43 = vector.broadcast %cst_19 : f32 to vector<16x128xf32>
    %44 = arith.mulf %42, %43 : vector<16x128xf32>
    %45 = vector.shape_cast %44 : vector<16x128xf32> to vector<16x4x32xf32>
    %46 = vector.extract_strided_slice %41 {offsets = [0, 128], sizes = [16, 128], strides = [1, 1]} : vector<16x384xf32> to vector<16x128xf32>
    %47 = vector.shape_cast %46 : vector<16x128xf32> to vector<16x4x32xf32>
    %48 = vector.extract_strided_slice %41 {offsets = [0, 256], sizes = [16, 128], strides = [1, 1]} : vector<16x384xf32> to vector<16x128xf32>
    %49 = vector.shape_cast %48 : vector<16x128xf32> to vector<16x4x32xf32>
    %50 = tpu.transpose %45, [1, 0, 2] : vector<16x4x32xf32> -> vector<4x16x32xf32>
    %51 = arith.truncf %50 : vector<4x16x32xf32> to vector<4x16x32xbf16>
    %52 = tpu.transpose %47, [1, 0, 2] : vector<16x4x32xf32> -> vector<4x16x32xf32>
    %53 = arith.truncf %52 : vector<4x16x32xf32> to vector<4x16x32xbf16>
    %54 = tpu.transpose %49, [1, 0, 2] : vector<16x4x32xf32> -> vector<4x16x32xf32>
    %55 = arith.truncf %54 : vector<4x16x32xf32> to vector<4x16x32xbf16>
    "tpu.trace_start"() <{level = 10 : i32, message = "htd,hsd->hts"}> : () -> ()
    %cst_20 = arith.constant dense<0.000000e+00> : vector<4x16x16xf32>
    %56 = tpu.matmul %51, %53, %cst_20 {dimension_numbers = #tpu.dot_dimension_numbers<[2], [2], [1], [1], [0, 0, 0, 1, 1, 1], [0], [0]>} : vector<4x16x32xbf16>, vector<4x16x32xbf16>, vector<4x16x16xf32> -> vector<4x16x16xf32>
    %cst_21 = arith.constant -1.000000e+30 : f32
    "tpu.trace_stop"() : () -> ()
    %57 = vector.shape_cast %7 : vector<1x16x16xi1> to vector<1x16x16xi1>
    %58 = vector.broadcast %57 : vector<1x16x16xi1> to vector<4x16x16xi1>
    %59 = vector.broadcast %cst_21 : f32 to vector<4x16x16xf32>
    %60 = arith.select %58, %56, %59 : vector<4x16x16xi1>, vector<4x16x16xf32>
    %cst_22 = arith.constant dense<0xFF800000> : vector<4x16xf32>
    %61 = vector.multi_reduction <maximumf>, %60, %cst_22 [2] : vector<4x16x16xf32> to vector<4x16xf32>
    %62 = vector.shape_cast %61 : vector<4x16xf32> to vector<4x16x1xf32>
    %63 = vector.broadcast %62 : vector<4x16x1xf32> to vector<4x16x16xf32>
    %64 = arith.subf %60, %63 : vector<4x16x16xf32>
    %65 = math.exp %64 : vector<4x16x16xf32>
    %cst_23 = arith.constant dense<0.000000e+00> : vector<4x16xf32>
    %66 = vector.multi_reduction <add>, %65, %cst_23 [2] : vector<4x16x16xf32> to vector<4x16xf32>
    %67 = vector.shape_cast %66 : vector<4x16xf32> to vector<4x16x1xf32>
    %68 = tpu.reciprocal %67 {approx = true} : vector<4x16x1xf32> -> vector<4x16x1xf32>
    %69 = vector.broadcast %68 : vector<4x16x1xf32> to vector<4x16x16xf32>
    %70 = arith.mulf %65, %69 : vector<4x16x16xf32>
    %71 = arith.truncf %70 : vector<4x16x16xf32> to vector<4x16x16xbf16>
    "tpu.trace_start"() <{level = 10 : i32, message = "hts,hsd->htd"}> : () -> ()
    %cst_24 = arith.constant dense<0.000000e+00> : vector<4x16x32xf32>
    %72 = tpu.matmul %71, %55, %cst_24 {dimension_numbers = #tpu.dot_dimension_numbers<[2], [1], [1], [2], [0, 0, 0, 1, 1, 2], [0], [0]>} : vector<4x16x16xbf16>, vector<4x16x32xbf16>, vector<4x16x32xf32> -> vector<4x16x32xf32>
    "tpu.trace_stop"() : () -> ()
    %73 = tpu.transpose %72, [1, 0, 2] : vector<4x16x32xf32> -> vector<16x4x32xf32>
    %74 = vector.shape_cast %73 : vector<16x4x32xf32> to vector<16x128xf32>
    %75 = arith.truncf %74 : vector<16x128xf32> to vector<16x128xbf16>
    %c0_25 = arith.constant 0 : index
    %c0_26 = arith.constant 0 : index
    %c0_27 = arith.constant 0 : index
    %76 = vector.load %arg7[%c0_25, %c0_26, %c0_27] : memref<1x128x128xbf16, #tpu.memory_space<vmem>>, vector<1x128x128xbf16>
    %77 = vector.shape_cast %76 : vector<1x128x128xbf16> to vector<128x128xbf16>
    %cst_28 = arith.constant dense<0.000000e+00> : vector<16x128xf32>
    %78 = tpu.matmul %75, %77, %cst_28 {dimension_numbers = #tpu.dot_dimension_numbers<[1], [0], [0], [1], [0, 0, 1, 1], [], []>} : vector<16x128xbf16>, vector<128x128xbf16>, vector<16x128xf32> -> vector<16x128xf32>
    %79 = arith.addf %3, %78 : vector<16x128xf32>
    %c0_29 = arith.constant 0 : index
    %c0_30 = arith.constant 0 : index
    %c0_31 = arith.constant 0 : index
    %80 = vector.load %arg8[%c0_29, %c0_30, %c0_31] : memref<1x1x128xf32, #tpu.memory_space<vmem>>, vector<1x1x128xf32>
    %81 = vector.shape_cast %80 : vector<1x1x128xf32> to vector<1x128xf32>
    %82 = vector.broadcast %81 : vector<1x128xf32> to vector<16x128xf32>
    %83 = arith.addf %79, %82 : vector<16x128xf32>
    %cst_32 = arith.constant dense<0.000000e+00> : vector<16xf32>
    %84 = vector.multi_reduction <add>, %83, %cst_32 [1] : vector<16x128xf32> to vector<16xf32>
    %85 = vector.shape_cast %84 : vector<16xf32> to vector<16x1xf32>
    %cst_33 = arith.constant 1.280000e+02 : f32
    %86 = vector.broadcast %cst_33 : f32 to vector<16x1xf32>
    %87 = arith.divf %85, %86 : vector<16x1xf32>
    %88 = vector.broadcast %87 : vector<16x1xf32> to vector<16x128xf32>
    %89 = arith.subf %83, %88 : vector<16x128xf32>
    %90 = arith.mulf %89, %89 : vector<16x128xf32>
    %cst_34 = arith.constant dense<0.000000e+00> : vector<16xf32>
    %91 = vector.multi_reduction <add>, %90, %cst_34 [1] : vector<16x128xf32> to vector<16xf32>
    %92 = vector.shape_cast %91 : vector<16xf32> to vector<16x1xf32>
    %cst_35 = arith.constant 1.280000e+02 : f32
    %93 = vector.broadcast %cst_35 : f32 to vector<16x1xf32>
    %94 = arith.divf %92, %93 : vector<16x1xf32>
    %95 = vector.broadcast %87 : vector<16x1xf32> to vector<16x128xf32>
    %96 = arith.subf %83, %95 : vector<16x128xf32>
    %cst_36 = arith.constant 9.99999974E-6 : f32
    %97 = vector.broadcast %cst_36 : f32 to vector<16x1xf32>
    %98 = arith.addf %94, %97 : vector<16x1xf32>
    %99 = math.rsqrt %98 : vector<16x1xf32>
    %100 = vector.broadcast %99 : vector<16x1xf32> to vector<16x128xf32>
    %101 = arith.mulf %96, %100 : vector<16x128xf32>
    %c0_37 = arith.constant 0 : index
    %c0_38 = arith.constant 0 : index
    %c0_39 = arith.constant 0 : index
    %102 = vector.load %arg9[%c0_37, %c0_38, %c0_39] : memref<1x1x128xf32, #tpu.memory_space<vmem>>, vector<1x1x128xf32>
    %103 = vector.shape_cast %102 : vector<1x1x128xf32> to vector<1x128xf32>
    %104 = vector.broadcast %103 : vector<1x128xf32> to vector<16x128xf32>
    %105 = arith.mulf %101, %104 : vector<16x128xf32>
    %c0_40 = arith.constant 0 : index
    %c0_41 = arith.constant 0 : index
    %c0_42 = arith.constant 0 : index
    %106 = vector.load %arg10[%c0_40, %c0_41, %c0_42] : memref<1x1x128xf32, #tpu.memory_space<vmem>>, vector<1x1x128xf32>
    %107 = vector.shape_cast %106 : vector<1x1x128xf32> to vector<1x128xf32>
    %108 = vector.broadcast %107 : vector<1x128xf32> to vector<16x128xf32>
    %109 = arith.addf %105, %108 : vector<16x128xf32>
    %110 = arith.truncf %109 : vector<16x128xf32> to vector<16x128xbf16>
    %c0_43 = arith.constant 0 : index
    %c0_44 = arith.constant 0 : index
    %c0_45 = arith.constant 0 : index
    %111 = vector.load %arg11[%c0_43, %c0_44, %c0_45] : memref<1x128x512xbf16, #tpu.memory_space<vmem>>, vector<1x128x512xbf16>
    %112 = vector.shape_cast %111 : vector<1x128x512xbf16> to vector<128x512xbf16>
    %cst_46 = arith.constant dense<0.000000e+00> : vector<16x512xf32>
    %113 = tpu.matmul %110, %112, %cst_46 {dimension_numbers = #tpu.dot_dimension_numbers<[1], [0], [0], [1], [0, 0, 1, 1], [], []>} : vector<16x128xbf16>, vector<128x512xbf16>, vector<16x512xf32> -> vector<16x512xf32>
    %c0_47 = arith.constant 0 : index
    %c0_48 = arith.constant 0 : index
    %c0_49 = arith.constant 0 : index
    %114 = vector.load %arg12[%c0_47, %c0_48, %c0_49] : memref<1x1x512xf32, #tpu.memory_space<vmem>>, vector<1x1x512xf32>
    %115 = vector.shape_cast %114 : vector<1x1x512xf32> to vector<1x512xf32>
    %116 = vector.broadcast %115 : vector<1x512xf32> to vector<16x512xf32>
    %117 = arith.addf %113, %116 : vector<16x512xf32>
    %cst_50 = arith.constant 0.000000e+00 : f32
    %118 = vector.broadcast %cst_50 : f32 to vector<16x512xf32>
    %119 = arith.maximumf %117, %118 : vector<16x512xf32>
    %120 = arith.truncf %119 : vector<16x512xf32> to vector<16x512xbf16>
    %c0_51 = arith.constant 0 : index
    %c0_52 = arith.constant 0 : index
    %c0_53 = arith.constant 0 : index
    %121 = vector.load %arg13[%c0_51, %c0_52, %c0_53] : memref<1x512x128xbf16, #tpu.memory_space<vmem>>, vector<1x512x128xbf16>
    %122 = vector.shape_cast %121 : vector<1x512x128xbf16> to vector<512x128xbf16>
    %cst_54 = arith.constant dense<0.000000e+00> : vector<16x128xf32>
    %123 = tpu.matmul %120, %122, %cst_54 {dimension_numbers = #tpu.dot_dimension_numbers<[1], [0], [0], [1], [0, 0, 1, 1], [], []>} : vector<16x512xbf16>, vector<512x128xbf16>, vector<16x128xf32> -> vector<16x128xf32>
    %124 = arith.addf %83, %123 : vector<16x128xf32>
    %c0_55 = arith.constant 0 : index
    %c0_56 = arith.constant 0 : index
    %c0_57 = arith.constant 0 : index
    %125 = vector.load %arg14[%c0_55, %c0_56, %c0_57] : memref<1x1x128xf32, #tpu.memory_space<vmem>>, vector<1x1x128xf32>
    %126 = vector.shape_cast %125 : vector<1x1x128xf32> to vector<1x128xf32>
    %127 = vector.broadcast %126 : vector<1x128xf32> to vector<16x128xf32>
    %128 = arith.addf %124, %127 : vector<16x128xf32>
    %c0_58 = arith.constant 0 : index
    %c0_59 = arith.constant 0 : index
    %129 = vector.load %arg16[%c0_58, %c0_59] : memref<16x128xf32, #tpu.memory_space<vmem>>, vector<16x128xf32>
    tpu.vector_store %arg16[%c0_58, %c0_59], %128 {strides = array<i32>} : memref<16x128xf32, #tpu.memory_space<vmem>>, vector<16x128xf32>,
    %c1_i32 = arith.constant 1 : i32
    %130 = arith.cmpi eq, %arg1, %c1_i32 : i32
    %131 = arith.extui %130 : i1 to i32
    %c0_i32_60 = arith.constant 0 : i32
    %132 = arith.cmpi ne, %131, %c0_i32_60 : i32
    scf.if %132 {
      %c0_61 = arith.constant 0 : index
      %c0_62 = arith.constant 0 : index
      %c0_63 = arith.constant 0 : index
      %133 = vector.load %arg15[%c0_61, %c0_62, %c0_63] : memref<1x16x128xf32, #tpu.memory_space<vmem>>, vector<1x16x128xf32>
      %134 = vector.shape_cast %133 : vector<1x16x128xf32> to vector<16x128xf32>
      %135 = vector.shape_cast %128 : vector<16x128xf32> to vector<1x16x128xf32>
      tpu.vector_store %arg15[%c0_61, %c0_62, %c0_63], %135 {strides = array<i32>} : memref<1x16x128xf32, #tpu.memory_space<vmem>>, vector<1x16x128xf32>,
    } else {
    }
    return
  }
  func.func @transform_0(%arg0: i32, %arg1: i32) -> (i32, i32, i32) {
    %c0_i32 = arith.constant 0 : i32
    %c0_i32_0 = arith.constant 0 : i32
    %c0_i32_1 = arith.constant 0 : i32
    return %arg0, %c0_i32, %c0_i32_0 : i32, i32, i32
  }
  func.func @transform_1(%arg0: i32, %arg1: i32) -> (i32, i32, i32) {
    %c0_i32 = arith.constant 0 : i32
    %c0_i32_0 = arith.constant 0 : i32
    %c0_i32_1 = arith.constant 0 : i32
    return %arg1, %c0_i32, %c0_i32_0 : i32, i32, i32
  }
  func.func @transform_2(%arg0: i32, %arg1: i32) -> (i32, i32, i32) {
    %c0_i32 = arith.constant 0 : i32
    %c0_i32_0 = arith.constant 0 : i32
    %c0_i32_1 = arith.constant 0 : i32
    return %arg1, %c0_i32, %c0_i32_0 : i32, i32, i32
  }
  func.func @transform_3(%arg0: i32, %arg1: i32) -> (i32, i32, i32) {
    %c0_i32 = arith.constant 0 : i32
    %c0_i32_0 = arith.constant 0 : i32
    %c0_i32_1 = arith.constant 0 : i32
    return %arg1, %c0_i32, %c0_i32_0 : i32, i32, i32
  }
  func.func @transform_4(%arg0: i32, %arg1: i32) -> (i32, i32, i32) {
    %c0_i32 = arith.constant 0 : i32
    %c0_i32_0 = arith.constant 0 : i32
    %c0_i32_1 = arith.constant 0 : i32
    return %arg1, %c0_i32, %c0_i32_0 : i32, i32, i32
  }
  func.func @transform_5(%arg0: i32, %arg1: i32) -> (i32, i32, i32) {
    %c0_i32 = arith.constant 0 : i32
    %c0_i32_0 = arith.constant 0 : i32
    %c0_i32_1 = arith.constant 0 : i32
    return %arg1, %c0_i32, %c0_i32_0 : i32, i32, i32
  }
  func.func @transform_6(%arg0: i32, %arg1: i32) -> (i32, i32, i32) {
    %c0_i32 = arith.constant 0 : i32
    %c0_i32_0 = arith.constant 0 : i32
    %c0_i32_1 = arith.constant 0 : i32
    return %arg1, %c0_i32, %c0_i32_0 : i32, i32, i32
  }
  func.func @transform_7(%arg0: i32, %arg1: i32) -> (i32, i32, i32) {
    %c0_i32 = arith.constant 0 : i32
    %c0_i32_0 = arith.constant 0 : i32
    %c0_i32_1 = arith.constant 0 : i32
    return %arg1, %c0_i32, %c0_i32_0 : i32, i32, i32
  }
  func.func @transform_8(%arg0: i32, %arg1: i32) -> (i32, i32, i32) {
    %c0_i32 = arith.constant 0 : i32
    %c0_i32_0 = arith.constant 0 : i32
    %c0_i32_1 = arith.constant 0 : i32
    return %arg1, %c0_i32, %c0_i32_0 : i32, i32, i32
  }
  func.func @transform_9(%arg0: i32, %arg1: i32) -> (i32, i32, i32) {
    %c0_i32 = arith.constant 0 : i32
    %c0_i32_0 = arith.constant 0 : i32
    %c0_i32_1 = arith.constant 0 : i32
    return %arg1, %c0_i32, %c0_i32_0 : i32, i32, i32
  }
  func.func @transform_10(%arg0: i32, %arg1: i32) -> (i32, i32, i32) {
    %c0_i32 = arith.constant 0 : i32
    %c0_i32_0 = arith.constant 0 : i32
    %c0_i32_1 = arith.constant 0 : i32
    return %arg1, %c0_i32, %c0_i32_0 : i32, i32, i32
  }
  func.func @transform_11(%arg0: i32, %arg1: i32) -> (i32, i32, i32) {
    %c0_i32 = arith.constant 0 : i32
    %c0_i32_0 = arith.constant 0 : i32
    %c0_i32_1 = arith.constant 0 : i32
    return %arg1, %c0_i32, %c0_i32_0 : i32, i32, i32
  }
  func.func @transform_12(%arg0: i32, %arg1: i32) -> (i32, i32, i32) {
    %c0_i32 = arith.constant 0 : i32
    %c0_i32_0 = arith.constant 0 : i32
    %c0_i32_1 = arith.constant 0 : i32
    return %arg1, %c0_i32, %c0_i32_0 : i32, i32, i32
  }
  func.func @transform_13(%arg0: i32, %arg1: i32) -> (i32, i32, i32) {
    %c0_i32 = arith.constant 0 : i32
    %c0_i32_0 = arith.constant 0 : i32
    %c0_i32_1 = arith.constant 0 : i32
    return %arg0, %c0_i32, %c0_i32_0 : i32, i32, i32
  }
}

</mosaic_0001>

<llo_original>
// kernel: tpu_custom_call.1
$region0: #{tpu_custom_call.1}
  #allocation0 [shape = 'u32[]', space=smem, size = 0x4, offset = 0x4, fixed_abs, tag = 'smem constant byte address 0x4 - core index']
  #allocation1 [shape = 'u32[144,128]{1,0:T(1,128)}', space=vmem, size = 0x12000, scoped, tag = 'internal scratch']
  #allocation2 [shape = 'f32[16,128]{1,0:T(8,128)}', space=vmem, size = 0x2000, scoped, tag = 'scratch operand']
  %s0 = inlined_call_operand.hbm [shape: f32[2,16,128], index: 0, kind: input, shape index: {}]
  %s1 = inlined_call_operand.hbm [shape: f32[2,1,128], index: 1, kind: input, shape index: {}]
  %s2 = inlined_call_operand.hbm [shape: f32[2,1,128], index: 2, kind: input, shape index: {}]
  %s3 = inlined_call_operand.hbm [shape: bf16[2,128,384], index: 3, kind: input, shape index: {}]
  %s4 = inlined_call_operand.vmem [shape: f32[2,1,384], index: 4, kind: input, shape index: {}]
  %s5 = inlined_call_operand.hbm [shape: bf16[2,128,128], index: 5, kind: input, shape index: {}]
  %s6 = inlined_call_operand.vmem [shape: f32[2,1,128], index: 6, kind: input, shape index: {}]
  %s7 = inlined_call_operand.vmem [shape: f32[2,1,128], index: 7, kind: input, shape index: {}]
  %s8 = inlined_call_operand.vmem [shape: f32[2,1,128], index: 8, kind: input, shape index: {}]
  %s9 = inlined_call_operand.hbm [shape: bf16[2,128,512], index: 9, kind: input, shape index: {}]
  %s10 = inlined_call_operand.vmem [shape: f32[2,1,512], index: 10, kind: input, shape index: {}]
  %s11 = inlined_call_operand.hbm [shape: bf16[2,512,128], index: 11, kind: input, shape index: {}]
  %s12 = inlined_call_operand.vmem [shape: f32[2,1,128], index: 12, kind: input, shape index: {}]
  %s13 = inlined_call_operand.hbm [shape: f32[2,16,128], index: 13, kind: output, shape index: {}]
  %s14 = sld [smem:[#allocation0]]
  $region121: #{tpu_custom_call.1} parent=0
    _
  %s16 = ssub.s32 1, %s14
  %s17 = scalar_select 0, %s16, %s14
  $region1: #{tpu_custom_call.1} parent=0
    #allocation3 [shape = 'u8[16384]{0}', space=vmem, size = 0x4000, scoped, tag = 'input window, operand 0']
    #allocation4 [shape = 's32[2]{0}', space=sflag, size = 0x8, scoped, tag = 'scoped memory for tpu_custom_call.1']
    #allocation5 [shape = 's32[2]{0}', space=sflag, size = 0x8, scoped, tag = 'scoped memory for tpu_custom_call.1']
    #allocation6 [shape = 'u8[1024]{0}', space=vmem, size = 0x400, scoped, tag = 'input window, operand 1']
    #allocation7 [shape = 's32[2]{0}', space=sflag, size = 0x8, scoped, tag = 'scoped memory for tpu_custom_call.1']
    #allocation8 [shape = 'u8[1024]{0}', space=vmem, size = 0x400, scoped, tag = 'input window, operand 2']
    #allocation9 [shape = 'u8[196608]{0}', space=vmem, size = 0x30000, scoped, tag = 'input window, operand 3']
    #allocation10 [shape = 's32[2]{0}', space=sflag, size = 0x8, scoped, tag = 'scoped memory for tpu_custom_call.1']
    #allocation11 [shape = 'u8[65536]{0}', space=vmem, size = 0x10000, scoped, tag = 'input window, operand 5']
    #allocation12 [shape = 'u8[262144]{0}', space=vmem, size = 0x40000, scoped, tag = 'input window, operand 9']
    #allocation13 [shape = 's32[2]{0}', space=sflag, size = 0x8, scoped, tag = 'scoped memory for tpu_custom_call.1']
    #allocation14 [shape = 'u8[262144]{0}', space=vmem, size = 0x40000, scoped, tag = 'input window, operand 11']
    #allocation15 [shape = 'u8[16384]{0}', space=vmem, size = 0x4000, scoped, tag = 'output window, operand 0']
    %18 = vsyncpa [#allocation4], 0
    %s19 = scalar_lea.sflag [#allocation4], 1
    %20 = vsyncpa %s19, 0
    %21 = vsyncpa [#allocation7], 0
    %s22 = scalar_lea.sflag [#allocation7], 1
    %23 = vsyncpa %s22, 0
    %24 = vsyncpa [#allocation10], 0
    %s25 = scalar_lea.sflag [#allocation10], 1
    %26 = vsyncpa %s25, 0
    %27 = vsyncpa [#allocation13], 0
    %s28 = scalar_lea.sflag [#allocation13], 1
    %29 = vsyncpa %s28, 0
    %30 = vsyncpa [#allocation5], 0
    %s31 = scalar_lea.sflag [#allocation5], 1
    %32 = vsyncpa %s31, 0
    loop: start=0, step=1, limit=6
    $region2: #{tpu_custom_call.1} parent=1 // loop_pre_header
      _
    $region3: #{tpu_custom_call.1} parent=1 // loop_header
      %s34 = sphi 0, %s38
      %p35 = scmp.ge.s32.totalorder %s34, 6
      %s41 = sphi 0, %s53
      %s42 = sphi 0, %s49
      %s43 = sphi 0, %s41
      %s44 = sphi 0, %s42
      %s45 = sphi 0, %s43
      %s46 = sphi 0, %s44
      %s56 = sphi 0, %s58
      %s59 = sphi 0, %s56
      %s60 = sphi 0, %s59
      %s76 = sphi 0, %s60
      %s82 = sphi 0, %s84
      %s85 = sphi 0, %s82
      %s86 = sphi 0, %s85
      %s102 = sphi 0, %s86
      %s108 = sphi 0, %s110
      %s111 = sphi 0, %s108
      %s112 = sphi 0, %s111
      %s128 = sphi 0, %s112
      %s134 = sphi 0, %s136
      %s137 = sphi 0, %s134
      %s138 = sphi 0, %s137
      %s154 = sphi 0, %s138
      %s160 = sphi 0, %s162
      %s163 = sphi 0, %s160
      %s164 = sphi 0, %s163
      %s180 = sphi 0, %s164
      %s186 = sphi 0, %s188
      %s189 = sphi 0, %s186
      %s190 = sphi 0, %s189
      %s206 = sphi 0, %s190
      %s212 = sphi 0, %s214
      %s215 = sphi 0, %s212
      %s216 = sphi 0, %s215
      %s232 = sphi 0, %s216
      %s238 = sphi 0, %s240
      %s241 = sphi 0, %s238
      %s242 = sphi 0, %s241
      %s258 = sphi 0, %s242
      %s264 = sphi 0, %s266
      %s267 = sphi 0, %s264
      %s268 = sphi 0, %s267
      %s284 = sphi 0, %s268
      %s290 = sphi 0, %s292
      %s293 = sphi 0, %s290
      %s294 = sphi 0, %s293
      %s310 = sphi 0, %s294
      %s316 = sphi 0, %s318
      %s319 = sphi 0, %s316
      %s320 = sphi 0, %s319
      %s336 = sphi 0, %s320
      %s342 = sphi 0, %s344
      %s345 = sphi 0, %s342
      %s346 = sphi 0, %s345
      %s362 = sphi 0, %s346
      %s368 = sphi 0, %s370
      %s371 = sphi 0, %s368
      %s372 = sphi 0, %s371
      %s388 = sphi 0, %s372
      %s394 = sphi 0, %s396
      %s397 = sphi 0, %s394
      %s398 = sphi 0, %s397
      %s414 = sphi 0, %s398
    $region4: #{tpu_custom_call.1} parent=1 // loop_header_branch
      %37 = sbr.rel (%p35) target = $region8
    $region5: #{tpu_custom_call.1} parent=1 // loop_body
      %s39 = ssub.s32 %s34, 1
      %s40 = ssub.s32 %s34, 2
      %s47 = sadd.s32 1, %s42
      %p48 = scmp.ge.s32.totalorder %s47, 2
      %s49 = scalar_select %p48, 0, %s47
      %s50 = sadd.s32 1, %s41
      %s51 = scalar_select %p48, %s50, %s41
      %p52 = scmp.ge.s32.totalorder %s51, 2
      %s53 = scalar_select %p52, 0, %s51
      %s54 = ssub.s32 %s41, %s53
      %p55 = scmp.eq.s32.totalorder %s54, 0
      %s57 = sadd.s32 %s56, 1
      %s58 = scalar_select %p55, %s56, %s57
      %p61 = pneg %p55
      %p62 = scmp.eq.s32.totalorder %s34, 3
      %p63 = por %p61, %p62
      %p64 = scmp.ne.s32.totalorder %s56, %s59
      %p65 = scmp.eq.s32.totalorder %s34, 0
      %p66 = por %p64, %p65
      %p67 = scmp.ne.s32.totalorder %s56, %s59
      %p68 = scmp.eq.s32.totalorder %s39, 3
      %p69 = por %p67, %p68
      %p70 = scmp.ne.s32.totalorder %s59, %s60
      %p71 = scmp.eq.s32.totalorder %s39, 0
      %p72 = por %p70, %p71
      %p73 = scmp.ne.s32.totalorder %s59, %s60
      %p74 = scmp.eq.s32.totalorder %s40, 3
      %p75 = por %p73, %p74
      %p77 = scmp.ne.s32.totalorder %s60, %s76
      %p78 = scmp.eq.s32.totalorder %s40, 0
      %p79 = por %p77, %p78
      %s80 = ssub.s32 %s42, %s49
      %p81 = scmp.eq.s32.totalorder %s80, 0
      %s83 = sadd.s32 %s82, 1
      %s84 = scalar_select %p81, %s82, %s83
      %p87 = pneg %p81
      %p88 = scmp.eq.s32.totalorder %s34, 3
      %p89 = por %p87, %p88
      %p90 = scmp.ne.s32.totalorder %s82, %s85
      %p91 = scmp.eq.s32.totalorder %s34, 0
      %p92 = por %p90, %p91
      %p93 = scmp.ne.s32.totalorder %s82, %s85
      %p94 = scmp.eq.s32.totalorder %s39, 3
      %p95 = por %p93, %p94
      %p96 = scmp.ne.s32.totalorder %s85, %s86
      %p97 = scmp.eq.s32.totalorder %s39, 0
      %p98 = por %p96, %p97
      %p99 = scmp.ne.s32.totalorder %s85, %s86
      %p100 = scmp.eq.s32.totalorder %s40, 3
      %p101 = por %p99, %p100
      %p103 = scmp.ne.s32.totalorder %s86, %s102
      %p104 = scmp.eq.s32.totalorder %s40, 0
      %p105 = por %p103, %p104
      %s106 = ssub.s32 %s42, %s49
      %p107 = scmp.eq.s32.totalorder %s106, 0
      %s109 = sadd.s32 %s108, 1
      %s110 = scalar_select %p107, %s108, %s109
      %p113 = pneg %p107
      %p114 = scmp.eq.s32.totalorder %s34, 3
      %p115 = por %p113, %p114
      %p116 = scmp.ne.s32.totalorder %s108, %s111
      %p117 = scmp.eq.s32.totalorder %s34, 0
      %p118 = por %p116, %p117
      %p119 = scmp.ne.s32.totalorder %s108, %s111
      %p120 = scmp.eq.s32.totalorder %s39, 3
      %p121 = por %p119, %p120
      %p122 = scmp.ne.s32.totalorder %s111, %s112
      %p123 = scmp.eq.s32.totalorder %s39, 0
      %p124 = por %p122, %p123
      %p125 = scmp.ne.s32.totalorder %s111, %s112
      %p126 = scmp.eq.s32.totalorder %s40, 3
      %p127 = por %p125, %p126
      %p129 = scmp.ne.s32.totalorder %s112, %s128
      %p130 = scmp.eq.s32.totalorder %s40, 0
      %p131 = por %p129, %p130
      %s132 = ssub.s32 %s42, %s49
      %p133 = scmp.eq.s32.totalorder %s132, 0
      %s135 = sadd.s32 %s134, 1
      %s136 = scalar_select %p133, %s134, %s135
      %p139 = pneg %p133
      %p140 = scmp.eq.s32.totalorder %s34, 3
      %p141 = por %p139, %p140
      %p142 = scmp.ne.s32.totalorder %s134, %s137
      %p143 = scmp.eq.s32.totalorder %s34, 0
      %p144 = por %p142, %p143
      %p145 = scmp.ne.s32.totalorder %s134, %s137
      %p146 = scmp.eq.s32.totalorder %s39, 3
      %p147 = por %p145, %p146
      %p148 = scmp.ne.s32.totalorder %s137, %s138
      %p149 = scmp.eq.s32.totalorder %s39, 0
      %p150 = por %p148, %p149
      %p151 = scmp.ne.s32.totalorder %s137, %s138
      %p152 = scmp.eq.s32.totalorder %s40, 3
      %p153 = por %p151, %p152
      %p155 = scmp.ne.s32.totalorder %s138, %s154
      %p156 = scmp.eq.s32.totalorder %s40, 0
      %p157 = por %p155, %p156
      %s158 = ssub.s32 %s42, %s49
      %p159 = scmp.eq.s32.totalorder %s158, 0
      %s161 = sadd.s32 %s160, 1
      %s162 = scalar_select %p159, %s160, %s161
      %p165 = pneg %p159
      %p166 = scmp.eq.s32.totalorder %s34, 3
      %p167 = por %p165, %p166
      %p168 = scmp.ne.s32.totalorder %s160, %s163
      %p169 = scmp.eq.s32.totalorder %s34, 0
      %p170 = por %p168, %p169
      %p171 = scmp.ne.s32.totalorder %s160, %s163
      %p172 = scmp.eq.s32.totalorder %s39, 3
      %p173 = por %p171, %p172
      %p174 = scmp.ne.s32.totalorder %s163, %s164
      %p175 = scmp.eq.s32.totalorder %s39, 0
      %p176 = por %p174, %p175
      %p177 = scmp.ne.s32.totalorder %s163, %s164
      %p178 = scmp.eq.s32.totalorder %s40, 3
      %p179 = por %p177, %p178
      %p181 = scmp.ne.s32.totalorder %s164, %s180
      %p182 = scmp.eq.s32.totalorder %s40, 0
      %p183 = por %p181, %p182
      %s184 = ssub.s32 %s42, %s49
      %p185 = scmp.eq.s32.totalorder %s184, 0
      %s187 = sadd.s32 %s186, 1
      %s188 = scalar_select %p185, %s186, %s187
      %p191 = pneg %p185
      %p192 = scmp.eq.s32.totalorder %s34, 3
      %p193 = por %p191, %p192
      %p194 = scmp.ne.s32.totalorder %s186, %s189
      %p195 = scmp.eq.s32.totalorder %s34, 0
      %p196 = por %p194, %p195
      %p197 = scmp.ne.s32.totalorder %s186, %s189
      %p198 = scmp.eq.s32.totalorder %s39, 3
      %p199 = por %p197, %p198
      %p200 = scmp.ne.s32.totalorder %s189, %s190
      %p201 = scmp.eq.s32.totalorder %s39, 0
      %p202 = por %p200, %p201
      %p203 = scmp.ne.s32.totalorder %s189, %s190
      %p204 = scmp.eq.s32.totalorder %s40, 3
      %p205 = por %p203, %p204
      %p207 = scmp.ne.s32.totalorder %s190, %s206
      %p208 = scmp.eq.s32.totalorder %s40, 0
      %p209 = por %p207, %p208
      %s210 = ssub.s32 %s42, %s49
      %p211 = scmp.eq.s32.totalorder %s210, 0
      %s213 = sadd.s32 %s212, 1
      %s214 = scalar_select %p211, %s212, %s213
      %p217 = pneg %p211
      %p218 = scmp.eq.s32.totalorder %s34, 3
      %p219 = por %p217, %p218
      %p220 = scmp.ne.s32.totalorder %s212, %s215
      %p221 = scmp.eq.s32.totalorder %s34, 0
      %p222 = por %p220, %p221
      %p223 = scmp.ne.s32.totalorder %s212, %s215
      %p224 = scmp.eq.s32.totalorder %s39, 3
      %p225 = por %p223, %p224
      %p226 = scmp.ne.s32.totalorder %s215, %s216
      %p227 = scmp.eq.s32.totalorder %s39, 0
      %p228 = por %p226, %p227
      %p229 = scmp.ne.s32.totalorder %s215, %s216
      %p230 = scmp.eq.s32.totalorder %s40, 3
      %p231 = por %p229, %p230
      %p233 = scmp.ne.s32.totalorder %s216, %s232
      %p234 = scmp.eq.s32.totalorder %s40, 0
      %p235 = por %p233, %p234
      %s236 = ssub.s32 %s42, %s49
      %p237 = scmp.eq.s32.totalorder %s236, 0
      %s239 = sadd.s32 %s238, 1
      %s240 = scalar_select %p237, %s238, %s239
      %p243 = pneg %p237
      %p244 = scmp.eq.s32.totalorder %s34, 3
      %p245 = por %p243, %p244
      %p246 = scmp.ne.s32.totalorder %s238, %s241
      %p247 = scmp.eq.s32.totalorder %s34, 0
      %p248 = por %p246, %p247
      %p249 = scmp.ne.s32.totalorder %s238, %s241
      %p250 = scmp.eq.s32.totalorder %s39, 3
      %p251 = por %p249, %p250
      %p252 = scmp.ne.s32.totalorder %s241, %s242
      %p253 = scmp.eq.s32.totalorder %s39, 0
      %p254 = por %p252, %p253
      %p255 = scmp.ne.s32.totalorder %s241, %s242
      %p256 = scmp.eq.s32.totalorder %s40, 3
      %p257 = por %p255, %p256
      %p259 = scmp.ne.s32.totalorder %s242, %s258
      %p260 = scmp.eq.s32.totalorder %s40, 0
      %p261 = por %p259, %p260
      %s262 = ssub.s32 %s42, %s49
      %p263 = scmp.eq.s32.totalorder %s262, 0
      %s265 = sadd.s32 %s264, 1
      %s266 = scalar_select %p263, %s264, %s265
      %p269 = pneg %p263
      %p270 = scmp.eq.s32.totalorder %s34, 3
      %p271 = por %p269, %p270
      %p272 = scmp.ne.s32.totalorder %s264, %s267
      %p273 = scmp.eq.s32.totalorder %s34, 0
      %p274 = por %p272, %p273
      %p275 = scmp.ne.s32.totalorder %s264, %s267
      %p276 = scmp.eq.s32.totalorder %s39, 3
      %p277 = por %p275, %p276
      %p278 = scmp.ne.s32.totalorder %s267, %s268
      %p279 = scmp.eq.s32.totalorder %s39, 0
      %p280 = por %p278, %p279
      %p281 = scmp.ne.s32.totalorder %s267, %s268
      %p282 = scmp.eq.s32.totalorder %s40, 3
      %p283 = por %p281, %p282
      %p285 = scmp.ne.s32.totalorder %s268, %s284
      %p286 = scmp.eq.s32.totalorder %s40, 0
      %p287 = por %p285, %p286
      %s288 = ssub.s32 %s42, %s49
      %p289 = scmp.eq.s32.totalorder %s288, 0
      %s291 = sadd.s32 %s290, 1
      %s292 = scalar_select %p289, %s290, %s291
      %p295 = pneg %p289
      %p296 = scmp.eq.s32.totalorder %s34, 3
      %p297 = por %p295, %p296
      %p298 = scmp.ne.s32.totalorder %s290, %s293
      %p299 = scmp.eq.s32.totalorder %s34, 0
      %p300 = por %p298, %p299
      %p301 = scmp.ne.s32.totalorder %s290, %s293
      %p302 = scmp.eq.s32.totalorder %s39, 3
      %p303 = por %p301, %p302
      %p304 = scmp.ne.s32.totalorder %s293, %s294
      %p305 = scmp.eq.s32.totalorder %s39, 0
      %p306 = por %p304, %p305
      %p307 = scmp.ne.s32.totalorder %s293, %s294
      %p308 = scmp.eq.s32.totalorder %s40, 3
      %p309 = por %p307, %p308
      %p311 = scmp.ne.s32.totalorder %s294, %s310
      %p312 = scmp.eq.s32.totalorder %s40, 0
      %p313 = por %p311, %p312
      %s314 = ssub.s32 %s42, %s49
      %p315 = scmp.eq.s32.totalorder %s314, 0
      %s317 = sadd.s32 %s316, 1
      %s318 = scalar_select %p315, %s316, %s317
      %p321 = pneg %p315
      %p322 = scmp.eq.s32.totalorder %s34, 3
      %p323 = por %p321, %p322
      %p324 = scmp.ne.s32.totalorder %s316, %s319
      %p325 = scmp.eq.s32.totalorder %s34, 0
      %p326 = por %p324, %p325
      %p327 = scmp.ne.s32.totalorder %s316, %s319
      %p328 = scmp.eq.s32.totalorder %s39, 3
      %p329 = por %p327, %p328
      %p330 = scmp.ne.s32.totalorder %s319, %s320
      %p331 = scmp.eq.s32.totalorder %s39, 0
      %p332 = por %p330, %p331
      %p333 = scmp.ne.s32.totalorder %s319, %s320
      %p334 = scmp.eq.s32.totalorder %s40, 3
      %p335 = por %p333, %p334
      %p337 = scmp.ne.s32.totalorder %s320, %s336
      %p338 = scmp.eq.s32.totalorder %s40, 0
      %p339 = por %p337, %p338
      %s340 = ssub.s32 %s42, %s49
      %p341 = scmp.eq.s32.totalorder %s340, 0
      %s343 = sadd.s32 %s342, 1
      %s344 = scalar_select %p341, %s342, %s343
      %p347 = pneg %p341
      %p348 = scmp.eq.s32.totalorder %s34, 3
      %p349 = por %p347, %p348
      %p350 = scmp.ne.s32.totalorder %s342, %s345
      %p351 = scmp.eq.s32.totalorder %s34, 0
      %p352 = por %p350, %p351
      %p353 = scmp.ne.s32.totalorder %s342, %s345
      %p354 = scmp.eq.s32.totalorder %s39, 3
      %p355 = por %p353, %p354
      %p356 = scmp.ne.s32.totalorder %s345, %s346
      %p357 = scmp.eq.s32.totalorder %s39, 0
      %p358 = por %p356, %p357
      %p359 = scmp.ne.s32.totalorder %s345, %s346
      %p360 = scmp.eq.s32.totalorder %s40, 3
      %p361 = por %p359, %p360
      %p363 = scmp.ne.s32.totalorder %s346, %s362
      %p364 = scmp.eq.s32.totalorder %s40, 0
      %p365 = por %p363, %p364
      %s366 = ssub.s32 %s42, %s49
      %p367 = scmp.eq.s32.totalorder %s366, 0
      %s369 = sadd.s32 %s368, 1
      %s370 = scalar_select %p367, %s368, %s369
      %p373 = pneg %p367
      %p374 = scmp.eq.s32.totalorder %s34, 3
      %p375 = por %p373, %p374
      %p376 = scmp.ne.s32.totalorder %s368, %s371
      %p377 = scmp.eq.s32.totalorder %s34, 0
      %p378 = por %p376, %p377
      %p379 = scmp.ne.s32.totalorder %s368, %s371
      %p380 = scmp.eq.s32.totalorder %s39, 3
      %p381 = por %p379, %p380
      %p382 = scmp.ne.s32.totalorder %s371, %s372
      %p383 = scmp.eq.s32.totalorder %s39, 0
      %p384 = por %p382, %p383
      %p385 = scmp.ne.s32.totalorder %s371, %s372
      %p386 = scmp.eq.s32.totalorder %s40, 3
      %p387 = por %p385, %p386
      %p389 = scmp.ne.s32.totalorder %s372, %s388
      %p390 = scmp.eq.s32.totalorder %s40, 0
      %p391 = por %p389, %p390
      %s392 = ssub.s32 %s41, %s53
      %p393 = scmp.eq.s32.totalorder %s392, 0
      %s395 = sadd.s32 %s394, 1
      %s396 = scalar_select %p393, %s394, %s395
      %p399 = pneg %p393
      %p400 = scmp.eq.s32.totalorder %s34, 3
      %p401 = por %p399, %p400
      %p402 = scmp.ne.s32.totalorder %s394, %s397
      %p403 = scmp.eq.s32.totalorder %s34, 0
      %p404 = por %p402, %p403
      %p405 = scmp.ne.s32.totalorder %s394, %s397
      %p406 = scmp.eq.s32.totalorder %s39, 3
      %p407 = por %p405, %p406
      %p408 = scmp.ne.s32.totalorder %s397, %s398
      %p409 = scmp.eq.s32.totalorder %s39, 0
      %p410 = por %p408, %p409
      %p411 = scmp.ne.s32.totalorder %s397, %s398
      %p412 = scmp.eq.s32.totalorder %s40, 3
      %p413 = por %p411, %p412
      %p415 = scmp.ne.s32.totalorder %s398, %s414
      %p416 = scmp.eq.s32.totalorder %s40, 0
      %p417 = por %p415, %p416
      %p418 = scmp.le.s32.totalorder 1, %s34
      %p419 = scmp.lt.s32.totalorder %s34, 5
      %p420 = pnand %p418, %p419
      %p421 = pneg %p420
      // Predicated region
      $region9: #{tpu_custom_call.1} parent=5 // pred_check
        _
      $region10: #{tpu_custom_call.1} parent=5 // pred_check_branch
        %423 = sbr.rel (%p420) target = $region12
      $region11: #{tpu_custom_call.1} parent=5 // pred_region
        %s424 = ssub.s32 %s34, 1
      $region12: #{tpu_custom_call.1} parent=5 // pred_fallthru
        _
      %p425 = scmp.lt.s32.totalorder %s34, 4
      // Predicated region
      $region13: #{tpu_custom_call.1} parent=5 // pred_check
        %p426 = pneg %p425
      $region14: #{tpu_custom_call.1} parent=5 // pred_check_branch
        %428 = sbr.rel (%p426) target = $region16
      $region15: #{tpu_custom_call.1} parent=5 // pred_region
        // Predicated region
        $region17: #{tpu_custom_call.1} parent=15 // pred_check
          %p429 = pneg %p66
        $region18: #{tpu_custom_call.1} parent=15 // pred_check_branch
          %431 = sbr.rel (%p429) target = $region20
        $region19: #{tpu_custom_call.1} parent=15 // pred_region
          %s432 = sand.u32 %s56, 1
          %s433 = scalar_lea.sflag [#allocation4], %s432
          %s434 = sand.u32 %s56, 1
          %s435 = smul.addr %s434, 16
          %s436 = scalar_lea.vmem [#allocation3], %s435
          %s438 = ssub.s32 256, 256
          %439 = vsyncadd %s433, %s438
          %s440 = smul.addr %s41, 2
          %s441 = smul.addr %s440, 128
          %s442 = scalar_lea.hbm %s0, %s441
          %s443 = sshll.u32 %s436, 4
          %s444 = int_to_ptr.vmem [resolvable:$true] %s443
          %449 = dma.hbm_to_vmem [thread:$0]  %s442, 256, %s444, %s433, 128, 128, 8
        $region20: #{tpu_custom_call.1} parent=15 // pred_fallthru
          _
        // Predicated region
        $region21: #{tpu_custom_call.1} parent=15 // pred_check
          %p450 = pneg %p92
        $region22: #{tpu_custom_call.1} parent=15 // pred_check_branch
          %452 = sbr.rel (%p450) target = $region24
        $region23: #{tpu_custom_call.1} parent=15 // pred_region
          %s453 = sand.u32 %s34, 1
          %s454 = scalar_lea.sflag [#allocation7], %s453
          %s455 = sand.u32 %s82, 1
          %s456 = scalar_lea.vmem [#allocation6], %s455
          %s458 = ssub.s32 16, 16
          %459 = vsyncadd %s454, %s458
          %s460 = smul.addr %s42, 16
          %s461 = scalar_lea.hbm %s1, %s460
          %s463 = sshll.u32 %s456, 4
          %s464 = int_to_ptr.vmem [resolvable:$true] %s463
          %466 = dma.hbm_to_vmem [thread:$0]  %s461, 16, %s464, %s454
        $region24: #{tpu_custom_call.1} parent=15 // pred_fallthru
          _
        // Predicated region
        $region25: #{tpu_custom_call.1} parent=15 // pred_check
          %p467 = pneg %p118
        $region26: #{tpu_custom_call.1} parent=15 // pred_check_branch
          %469 = sbr.rel (%p467) target = $region28
        $region27: #{tpu_custom_call.1} parent=15 // pred_region
          %s470 = sand.u32 %s34, 1
          %s471 = scalar_lea.sflag [#allocation7], %s470
          %s472 = sand.u32 %s108, 1
          %s473 = scalar_lea.vmem [#allocation8], %s472
          %s475 = ssub.s32 16, 16
          %476 = vsyncadd %s471, %s475
          %s477 = smul.addr %s42, 16
          %s478 = scalar_lea.hbm %s2, %s477
          %s480 = sshll.u32 %s473, 4
          %s481 = int_to_ptr.vmem [resolvable:$true] %s480
          %483 = dma.hbm_to_vmem [thread:$0]  %s478, 16, %s481, %s471
        $region28: #{tpu_custom_call.1} parent=15 // pred_fallthru
          _
        // Predicated region
        $region29: #{tpu_custom_call.1} parent=15 // pred_check
          %p484 = pneg %p144
        $region30: #{tpu_custom_call.1} parent=15 // pred_check_branch
          %486 = sbr.rel (%p484) target = $region32
        $region31: #{tpu_custom_call.1} parent=15 // pred_region
          %s487 = sand.u32 %s34, 1
          %s488 = scalar_lea.sflag [#allocation10], %s487
          %s489 = sand.u32 %s134, 1
          %s490 = smul.addr %s489, 192
          %s491 = scalar_lea.vmem [#allocation9], %s490
          %s493 = ssub.s32 3072, 3072
          %494 = vsyncadd %s488, %s493
          %s495 = smul.addr %s42, 48
          %s496 = smul.addr %s495, 64
          %s497 = scalar_lea.hbm %s3, %s496
          %s498 = sshll.u32 %s491, 4
          %s499 = int_to_ptr.vmem [resolvable:$true] %s498
          %504 = dma.hbm_to_vmem [thread:$0]  %s497, 3072, %s499, %s488, 192, 192, 12
        $region32: #{tpu_custom_call.1} parent=15 // pred_fallthru
          _
        // Predicated region
        $region33: #{tpu_custom_call.1} parent=15 // pred_check
          %p505 = pneg %p170
        $region34: #{tpu_custom_call.1} parent=15 // pred_check_branch
          %507 = sbr.rel (%p505) target = $region36
        $region35: #{tpu_custom_call.1} parent=15 // pred_region
          %p508 = scmp.lt.s32.totalorder %s42, 1
          %s509 = scalar_select %p508, %s42, 1
          %s510 = smul.addr %s509, 3
          %s511 = scalar_lea.vmem %s4, %s510
        $region36: #{tpu_custom_call.1} parent=15 // pred_fallthru
          _
        // Predicated region
        $region37: #{tpu_custom_call.1} parent=15 // pred_check
          %p512 = pneg %p196
        $region38: #{tpu_custom_call.1} parent=15 // pred_check_branch
          %514 = sbr.rel (%p512) target = $region40
        $region39: #{tpu_custom_call.1} parent=15 // pred_region
          %s515 = sand.u32 %s34, 1
          %s516 = scalar_lea.sflag [#allocation10], %s515
          %s517 = sand.u32 %s186, 1
          %s518 = smul.addr %s517, 64
          %s519 = scalar_lea.vmem [#allocation11], %s518
          %s521 = ssub.s32 1024, 1024
          %522 = vsyncadd %s516, %s521
          %s523 = smul.addr %s42, 16
          %s524 = smul.addr %s523, 64
          %s525 = scalar_lea.hbm %s5, %s524
          %s526 = sshll.u32 %s519, 4
          %s527 = int_to_ptr.vmem [resolvable:$true] %s526
          %532 = dma.hbm_to_vmem [thread:$0]  %s525, 1024, %s527, %s516, 64, 64, 4
        $region40: #{tpu_custom_call.1} parent=15 // pred_fallthru
          _
        // Predicated region
        $region41: #{tpu_custom_call.1} parent=15 // pred_check
          %p533 = pneg %p222
        $region42: #{tpu_custom_call.1} parent=15 // pred_check_branch
          %535 = sbr.rel (%p533) target = $region44
        $region43: #{tpu_custom_call.1} parent=15 // pred_region
          %p536 = scmp.lt.s32.totalorder %s42, 1
          %s537 = scalar_select %p536, %s42, 1
          %s538 = scalar_lea.vmem %s6, %s537
        $region44: #{tpu_custom_call.1} parent=15 // pred_fallthru
          _
        // Predicated region
        $region45: #{tpu_custom_call.1} parent=15 // pred_check
          %p539 = pneg %p248
        $region46: #{tpu_custom_call.1} parent=15 // pred_check_branch
          %541 = sbr.rel (%p539) target = $region48
        $region47: #{tpu_custom_call.1} parent=15 // pred_region
          %p542 = scmp.lt.s32.totalorder %s42, 1
          %s543 = scalar_select %p542, %s42, 1
          %s544 = scalar_lea.vmem %s7, %s543
        $region48: #{tpu_custom_call.1} parent=15 // pred_fallthru
          _
        // Predicated region
        $region49: #{tpu_custom_call.1} parent=15 // pred_check
          %p545 = pneg %p274
        $region50: #{tpu_custom_call.1} parent=15 // pred_check_branch
          %547 = sbr.rel (%p545) target = $region52
        $region51: #{tpu_custom_call.1} parent=15 // pred_region
          %p548 = scmp.lt.s32.totalorder %s42, 1
          %s549 = scalar_select %p548, %s42, 1
          %s550 = scalar_lea.vmem %s8, %s549
        $region52: #{tpu_custom_call.1} parent=15 // pred_fallthru
          _
        // Predicated region
        $region53: #{tpu_custom_call.1} parent=15 // pred_check
          %p551 = pneg %p300
        $region54: #{tpu_custom_call.1} parent=15 // pred_check_branch
          %553 = sbr.rel (%p551) target = $region56
        $region55: #{tpu_custom_call.1} parent=15 // pred_region
          %s554 = sand.u32 %s34, 1
          %s555 = scalar_lea.sflag [#allocation13], %s554
          %s556 = sand.u32 %s290, 1
          %s557 = smul.addr %s556, 256
          %s558 = scalar_lea.vmem [#allocation12], %s557
          %s560 = ssub.s32 4096, 4096
          %561 = vsyncadd %s555, %s560
          %s562 = smul.addr %s42, 64
          %s563 = smul.addr %s562, 64
          %s564 = scalar_lea.hbm %s9, %s563
          %s565 = sshll.u32 %s558, 4
          %s566 = int_to_ptr.vmem [resolvable:$true] %s565
          %571 = dma.hbm_to_vmem [thread:$0]  %s564, 4096, %s566, %s555, 256, 256, 16
        $region56: #{tpu_custom_call.1} parent=15 // pred_fallthru
          _
        // Predicated region
        $region57: #{tpu_custom_call.1} parent=15 // pred_check
          %p572 = pneg %p326
        $region58: #{tpu_custom_call.1} parent=15 // pred_check_branch
          %574 = sbr.rel (%p572) target = $region60
        $region59: #{tpu_custom_call.1} parent=15 // pred_region
          %p575 = scmp.lt.s32.totalorder %s42, 1
          %s576 = scalar_select %p575, %s42, 1
          %s577 = smul.addr %s576, 4
          %s578 = scalar_lea.vmem %s10, %s577
        $region60: #{tpu_custom_call.1} parent=15 // pred_fallthru
          _
        // Predicated region
        $region61: #{tpu_custom_call.1} parent=15 // pred_check
          %p579 = pneg %p352
        $region62: #{tpu_custom_call.1} parent=15 // pred_check_branch
          %581 = sbr.rel (%p579) target = $region64
        $region63: #{tpu_custom_call.1} parent=15 // pred_region
          %s582 = sand.u32 %s34, 1
          %s583 = scalar_lea.sflag [#allocation13], %s582
          %s584 = sand.u32 %s342, 1
          %s585 = smul.addr %s584, 256
          %s586 = scalar_lea.vmem [#allocation14], %s585
          %s588 = ssub.s32 4096, 4096
          %589 = vsyncadd %s583, %s588
          %s590 = smul.addr %s42, 64
          %s591 = smul.addr %s590, 64
          %s592 = scalar_lea.hbm %s11, %s591
          %s593 = sshll.u32 %s586, 4
          %s594 = int_to_ptr.vmem [resolvable:$true] %s593
          %599 = dma.hbm_to_vmem [thread:$0]  %s592, 4096, %s594, %s583, 64, 64, 4
        $region64: #{tpu_custom_call.1} parent=15 // pred_fallthru
          _
        // Predicated region
        $region65: #{tpu_custom_call.1} parent=15 // pred_check
          %p600 = pneg %p378
        $region66: #{tpu_custom_call.1} parent=15 // pred_check_branch
          %602 = sbr.rel (%p600) target = $region68
        $region67: #{tpu_custom_call.1} parent=15 // pred_region
          %p603 = scmp.lt.s32.totalorder %s42, 1
          %s604 = scalar_select %p603, %s42, 1
          %s605 = scalar_lea.vmem %s12, %s604
        $region68: #{tpu_custom_call.1} parent=15 // pred_fallthru
          _
      $region16: #{tpu_custom_call.1} parent=5 // pred_fallthru
        _
      %p606 = scmp.le.s32.totalorder 1, %s34
      %p607 = scmp.lt.s32.totalorder %s34, 5
      %p608 = pnand %p606, %p607
      %p609 = pneg %p608
      // Predicated region
      $region69: #{tpu_custom_call.1} parent=5 // pred_check
        _
      $region70: #{tpu_custom_call.1} parent=5 // pred_check_branch
        %611 = sbr.rel (%p608) target = $region72
      $region71: #{tpu_custom_call.1} parent=5 // pred_region
        %s612 = ssub.s32 %s34, 1
        %s613 = sand.u32 %s59, 1
        %s614 = scalar_lea.sflag [#allocation4], %s613
        %s615 = sand.u32 %s59, 1
        %s616 = smul.addr %s615, 16
        %s617 = scalar_lea.vmem [#allocation3], %s616
        // Predicated region
        $region73: #{tpu_custom_call.1} parent=71 // pred_check
          %p618 = pneg %p72
        $region74: #{tpu_custom_call.1} parent=71 // pred_check_branch
          %620 = sbr.rel (%p618) target = $region76
        $region75: #{tpu_custom_call.1} parent=71 // pred_region
          %621 = dma.done %s614, 256
        $region76: #{tpu_custom_call.1} parent=71 // pred_fallthru
          _
        %s622 = sand.u32 %s39, 1
        %s623 = scalar_lea.sflag [#allocation7], %s622
        %s624 = sand.u32 %s85, 1
        %s625 = scalar_lea.vmem [#allocation6], %s624
        // Predicated region
        $region77: #{tpu_custom_call.1} parent=71 // pred_check
          %p626 = pneg %p98
        $region78: #{tpu_custom_call.1} parent=71 // pred_check_branch
          %628 = sbr.rel (%p626) target = $region80
        $region79: #{tpu_custom_call.1} parent=71 // pred_region
          %629 = dma.done %s623, 16
        $region80: #{tpu_custom_call.1} parent=71 // pred_fallthru
          _
        %s630 = sand.u32 %s39, 1
        %s631 = scalar_lea.sflag [#allocation7], %s630
        %s632 = sand.u32 %s111, 1
        %s633 = scalar_lea.vmem [#allocation8], %s632
        // Predicated region
        $region81: #{tpu_custom_call.1} parent=71 // pred_check
          %p634 = pneg %p124
        $region82: #{tpu_custom_call.1} parent=71 // pred_check_branch
          %636 = sbr.rel (%p634) target = $region84
        $region83: #{tpu_custom_call.1} parent=71 // pred_region
          %637 = dma.done %s631, 16
        $region84: #{tpu_custom_call.1} parent=71 // pred_fallthru
          _
        %s638 = sand.u32 %s39, 1
        %s639 = scalar_lea.sflag [#allocation10], %s638
        %s640 = sand.u32 %s137, 1
        %s641 = smul.addr %s640, 192
        %s642 = scalar_lea.vmem [#allocation9], %s641
        // Predicated region
        $region85: #{tpu_custom_call.1} parent=71 // pred_check
          %p643 = pneg %p150
        $region86: #{tpu_custom_call.1} parent=71 // pred_check_branch
          %645 = sbr.rel (%p643) target = $region88
        $region87: #{tpu_custom_call.1} parent=71 // pred_region
          %646 = dma.done %s639, 3072
        $region88: #{tpu_custom_call.1} parent=71 // pred_fallthru
          _
        %s647 = sand.u32 %s39, 1
        %s648 = scalar_lea.sflag [#allocation10], %s647
        %s649 = sand.u32 %s189, 1
        %s650 = smul.addr %s649, 64
        %s651 = scalar_lea.vmem [#allocation11], %s650
        // Predicated region
        $region89: #{tpu_custom_call.1} parent=71 // pred_check
          %p652 = pneg %p202
        $region90: #{tpu_custom_call.1} parent=71 // pred_check_branch
          %654 = sbr.rel (%p652) target = $region92
        $region91: #{tpu_custom_call.1} parent=71 // pred_region
          %655 = dma.done %s648, 1024
        $region92: #{tpu_custom_call.1} parent=71 // pred_fallthru
          _
        %s656 = sand.u32 %s39, 1
        %s657 = scalar_lea.sflag [#allocation13], %s656
        %s658 = sand.u32 %s293, 1
        %s659 = smul.addr %s658, 256
        %s660 = scalar_lea.vmem [#allocation12], %s659
        // Predicated region
        $region93: #{tpu_custom_call.1} parent=71 // pred_check
          %p661 = pneg %p306
        $region94: #{tpu_custom_call.1} parent=71 // pred_check_branch
          %663 = sbr.rel (%p661) target = $region96
        $region95: #{tpu_custom_call.1} parent=71 // pred_region
          %664 = dma.done %s657, 4096
        $region96: #{tpu_custom_call.1} parent=71 // pred_fallthru
          _
        %s665 = sand.u32 %s39, 1
        %s666 = scalar_lea.sflag [#allocation13], %s665
        %s667 = sand.u32 %s345, 1
        %s668 = smul.addr %s667, 256
        %s669 = scalar_lea.vmem [#allocation14], %s668
        // Predicated region
        $region97: #{tpu_custom_call.1} parent=71 // pred_check
          %p670 = pneg %p358
        $region98: #{tpu_custom_call.1} parent=71 // pred_check_branch
          %672 = sbr.rel (%p670) target = $region100
        $region99: #{tpu_custom_call.1} parent=71 // pred_region
          %673 = dma.done %s666, 4096
        $region100: #{tpu_custom_call.1} parent=71 // pred_fallthru
          _
        %s674 = sand.u32 %s59, 1
        %s675 = scalar_lea.sflag [#allocation4], %s674
        %s676 = sand.u32 %s59, 1
        %s677 = smul.addr %s676, 16
        %s678 = scalar_lea.vmem [#allocation3], %s677
        %p679 = pneg %p72
        %p680 = pneg %p69
        %s681 = sand.u32 %s39, 1
        %s682 = scalar_lea.sflag [#allocation7], %s681
        %s683 = sand.u32 %s85, 1
        %s684 = scalar_lea.vmem [#allocation6], %s683
        %p685 = pneg %p98
        %p686 = pneg %p95
        %s687 = sand.u32 %s39, 1
        %s688 = scalar_lea.sflag [#allocation7], %s687
        %s689 = sand.u32 %s111, 1
        %s690 = scalar_lea.vmem [#allocation8], %s689
        %p691 = pneg %p124
        %p692 = pneg %p121
        %s693 = sand.u32 %s39, 1
        %s694 = scalar_lea.sflag [#allocation10], %s693
        %s695 = sand.u32 %s137, 1
        %s696 = smul.addr %s695, 192
        %s697 = scalar_lea.vmem [#allocation9], %s696
        %p698 = pneg %p150
        %p699 = pneg %p147
        %p700 = scmp.lt.s32.totalorder %s44, 1
        %s701 = scalar_select %p700, %s44, 1
        %s702 = smul.addr %s701, 3
        %s703 = scalar_lea.vmem %s4, %s702
        %p704 = pneg %p176
        %p705 = pneg %p173
        %s706 = sand.u32 %s39, 1
        %s707 = scalar_lea.sflag [#allocation10], %s706
        %s708 = sand.u32 %s189, 1
        %s709 = smul.addr %s708, 64
        %s710 = scalar_lea.vmem [#allocation11], %s709
        %p711 = pneg %p202
        %p712 = pneg %p199
        %p713 = scmp.lt.s32.totalorder %s44, 1
        %s714 = scalar_select %p713, %s44, 1
        %s715 = scalar_lea.vmem %s6, %s714
        %p716 = pneg %p228
        %p717 = pneg %p225
        %p718 = scmp.lt.s32.totalorder %s44, 1
        %s719 = scalar_select %p718, %s44, 1
        %s720 = scalar_lea.vmem %s7, %s719
        %p721 = pneg %p254
        %p722 = pneg %p251
        %p723 = scmp.lt.s32.totalorder %s44, 1
        %s724 = scalar_select %p723, %s44, 1
        %s725 = scalar_lea.vmem %s8, %s724
        %p726 = pneg %p280
        %p727 = pneg %p277
        %s728 = sand.u32 %s39, 1
        %s729 = scalar_lea.sflag [#allocation13], %s728
        %s730 = sand.u32 %s293, 1
        %s731 = smul.addr %s730, 256
        %s732 = scalar_lea.vmem [#allocation12], %s731
        %p733 = pneg %p306
        %p734 = pneg %p303
        %p735 = scmp.lt.s32.totalorder %s44, 1
        %s736 = scalar_select %p735, %s44, 1
        %s737 = smul.addr %s736, 4
        %s738 = scalar_lea.vmem %s10, %s737
        %p739 = pneg %p332
        %p740 = pneg %p329
        %s741 = sand.u32 %s39, 1
        %s742 = scalar_lea.sflag [#allocation13], %s741
        %s743 = sand.u32 %s345, 1
        %s744 = smul.addr %s743, 256
        %s745 = scalar_lea.vmem [#allocation14], %s744
        %p746 = pneg %p358
        %p747 = pneg %p355
        %p748 = scmp.lt.s32.totalorder %s44, 1
        %s749 = scalar_select %p748, %s44, 1
        %s750 = scalar_lea.vmem %s12, %s749
        %p751 = pneg %p384
        %p752 = pneg %p381
        %p753 = pneg %p410
        %p754 = pneg %p407
        %s755 = sand.u32 %s397, 1
        %s756 = scalar_lea.sflag [#allocation5], %s755
        %s757 = sand.u32 %s397, 1
        %s758 = smul.addr %s757, 16
        %s759 = scalar_lea.vmem [#allocation15], %s758
        %p760 = scmp.lt.s32.totalorder %s44, 1
        %s761 = scalar_select %p760, %s44, 1
        %s762 = smul.addr %s761, 3
        %s763 = scalar_lea.vmem %s4, %s762
        %p764 = scmp.lt.s32.totalorder %s44, 1
        %s765 = scalar_select %p764, %s44, 1
        %s766 = scalar_lea.vmem %s6, %s765
        %p767 = scmp.lt.s32.totalorder %s44, 1
        %s768 = scalar_select %p767, %s44, 1
        %s769 = scalar_lea.vmem %s7, %s768
        %p770 = scmp.lt.s32.totalorder %s44, 1
        %s771 = scalar_select %p770, %s44, 1
        %s772 = scalar_lea.vmem %s8, %s771
        %p773 = scmp.lt.s32.totalorder %s44, 1
        %s774 = scalar_select %p773, %s44, 1
        %s775 = smul.addr %s774, 4
        %s776 = scalar_lea.vmem %s10, %s775
        %p777 = scmp.lt.s32.totalorder %s44, 1
        %s778 = scalar_select %p777, %s44, 1
        %s779 = scalar_lea.vmem %s12, %s778
        %p781 = scmp.eq.s32.totalorder %s44, 0
        // Predicated region
        $region101: #{tpu_custom_call.1} parent=71 // pred_check
          %p782 = pneg %p781
        $region102: #{tpu_custom_call.1} parent=71 // pred_check_branch
          %784 = sbr.rel (%p782) target = $region104
        $region103: #{tpu_custom_call.1} parent=71 // pred_region
          %v785 = vld [vmem:[%s617] sm:$0xff]
          %v786 = vld [vmem:[%s617 + $0x8] sm:$0xff]
          %787 = vst [vmem:[#allocation2] sm:$0xff] %v785
          %788 = vst [vmem:[#allocation2 + $0x8] sm:$0xff] %v786
        $region104: #{tpu_custom_call.1} parent=71 // pred_fallthru
          _
        %v789 = vld [vmem:[#allocation2] sm:$0xff]
        %v790 = vld [vmem:[#allocation2 + $0x8] sm:$0xff]
        %v791 = vlaneseq
        %v792 = vshrl.u32 %v791, 7
        %v793 = vadd.s32 %v792, 8
        %v794 = vlaneseq
        %v795 = vand.u32 %v794, 127
        %vm796 = vcmp.ge.s32.totalorder %v792, %v795
        %vm797 = vcmp.ge.s32.totalorder %v793, %v795
        %798 = vadd.xlane.f32.xlu0 %v789
        %v799 = vpop.xlane.xlu0 %798
        %800 = vadd.xlane.f32.xlu0 %v790
        %v801 = vpop.xlane.xlu0 %800
        %v802 = vrcp.pop 128.0
        %v803 = vmul.f32 %v799, %v802
        %v804 = vmul.f32 %v801, %v802
        %v805 = vsub.f32 %v789, %v803
        %v806 = vsub.f32 %v790, %v804
        %v807 = vmul.f32 %v805, %v805
        %v808 = vmul.f32 %v806, %v806
        %809 = vadd.xlane.f32.xlu0 %v807
        %v810 = vpop.xlane.xlu0 %809
        %811 = vadd.xlane.f32.xlu0 %v808
        %v812 = vpop.xlane.xlu0 %811
        %v813 = vmul.f32 %v810, %v802
        %v814 = vmul.f32 %v812, %v802
        %v815 = vadd.f32 %v813, 1e-05
        %v816 = vadd.f32 %v814, 1e-05
        %v817 = vrsqrt.pop %v815
        %v818 = vrsqrt.pop %v816
        %v819 = vmul.f32 %v805, %v817
        %v820 = vmul.f32 %v806, %v818
        %v821 = vld [vmem:[%s625] sm:$0x1]
        %v823 = vlaneseq
        %v824 = vshrl.u32 %v823, 7
        %v825 = vsub.s32 0, %v824
        %v826 = vrot.slane %v821, %v825
        %v828 = vmul.f32 %v819, %v826
        %v829 = vmul.f32 %v820, %v826
        %v830 = vld [vmem:[%s633] sm:$0x1]
        %v832 = vlaneseq
        %v833 = vshrl.u32 %v832, 7
        %v834 = vsub.s32 0, %v833
        %v835 = vrot.slane %v830, %v834
        %v837 = vadd.f32 %v828, %v835
        %v838 = vadd.f32 %v829, %v835
        %v839 = vpack.c.bf16 %v838, %v837
        %v840 = vld [vmem:[%s642] sm:$0xff]
        %v841 = vld [vmem:[%s642 + $0x8] sm:$0xf]
        %v842 = vld [vmem:[%s642 + $0xc] sm:$0xff]
        %v843 = vld [vmem:[%s642 + $0x14] sm:$0xf]
        %v844 = vld [vmem:[%s642 + $0x18] sm:$0xff]
        %v845 = vld [vmem:[%s642 + $0x20] sm:$0xf]
        %v846 = vld [vmem:[%s642 + $0x24] sm:$0xff]
        %v847 = vld [vmem:[%s642 + $0x2c] sm:$0xf]
        %v848 = vld [vmem:[%s642 + $0x30] sm:$0xff]
        %v849 = vld [vmem:[%s642 + $0x38] sm:$0xf]
        %v850 = vld [vmem:[%s642 + $0x3c] sm:$0xff]
        %v851 = vld [vmem:[%s642 + $0x44] sm:$0xf]
        %v852 = vld [vmem:[%s642 + $0x48] sm:$0xff]
        %v853 = vld [vmem:[%s642 + $0x50] sm:$0xf]
        %v854 = vld [vmem:[%s642 + $0x54] sm:$0xff]
        %v855 = vld [vmem:[%s642 + $0x5c] sm:$0xf]
        %v856 = vld [vmem:[%s642 + $0x60] sm:$0xff]
        %v857 = vld [vmem:[%s642 + $0x68] sm:$0xf]
        %v858 = vld [vmem:[%s642 + $0x6c] sm:$0xff]
        %v859 = vld [vmem:[%s642 + $0x74] sm:$0xf]
        %v860 = vld [vmem:[%s642 + $0x78] sm:$0xff]
        %v861 = vld [vmem:[%s642 + $0x80] sm:$0xf]
        %v862 = vld [vmem:[%s642 + $0x84] sm:$0xff]
        %v863 = vld [vmem:[%s642 + $0x8c] sm:$0xf]
        %v864 = vld [vmem:[%s642 + $0x90] sm:$0xff]
        %v865 = vld [vmem:[%s642 + $0x98] sm:$0xf]
        %v866 = vld [vmem:[%s642 + $0x9c] sm:$0xff]
        %v867 = vld [vmem:[%s642 + $0xa4] sm:$0xf]
        %v868 = vld [vmem:[%s642 + $0xa8] sm:$0xff]
        %v869 = vld [vmem:[%s642 + $0xb0] sm:$0xf]
        %v870 = vld [vmem:[%s642 + $0xb4] sm:$0xff]
        %v871 = vld [vmem:[%s642 + $0xbc] sm:$0xf]
        %v872 = vld [vmem:[%s763] sm:$0x7]
        %v874 = vlaneseq
        %v875 = vshrl.u32 %v874, 7
        %v876 = vsub.s32 0, %v875
        %v877 = vrot.slane %v872, %v876
        %v878 = vlaneseq
        %v879 = vshrl.u32 %v878, 7
        %v880 = vsub.s32 1, %v879
        %v881 = vrot.slane %v872, %v880
        %v882 = vlaneseq
        %v883 = vshrl.u32 %v882, 7
        %v884 = vsub.s32 2, %v883
        %v885 = vrot.slane %v872, %v884
        %v921 = vunpack.c.l.b16 %v840
        %v922 = vunpack.c.h.b16 %v840
        %v923 = vunpack.c.l.b16 %v841
        %v924 = vunpack.c.l.b16 %v842
        %v925 = vunpack.c.h.b16 %v842
        %v926 = vunpack.c.l.b16 %v843
        %v927 = vunpack.c.l.b16 %v844
        %v928 = vunpack.c.h.b16 %v844
        %v929 = vunpack.c.l.b16 %v845
        %v930 = vunpack.c.l.b16 %v846
        %v931 = vunpack.c.h.b16 %v846
        %v932 = vunpack.c.l.b16 %v847
        %v933 = vunpack.c.l.b16 %v848
        %v934 = vunpack.c.h.b16 %v848
        %v935 = vunpack.c.l.b16 %v849
        %v936 = vunpack.c.l.b16 %v850
        %v937 = vunpack.c.h.b16 %v850
        %v938 = vunpack.c.l.b16 %v851
        %v939 = vunpack.c.l.b16 %v852
        %v940 = vunpack.c.h.b16 %v852
        %v941 = vunpack.c.l.b16 %v853
        %v942 = vunpack.c.l.b16 %v854
        %v943 = vunpack.c.h.b16 %v854
        %v944 = vunpack.c.l.b16 %v855
        %v945 = vunpack.c.l.b16 %v856
        %v946 = vunpack.c.h.b16 %v856
        %v947 = vunpack.c.l.b16 %v857
        %v948 = vunpack.c.l.b16 %v858
        %v949 = vunpack.c.h.b16 %v858
        %v950 = vunpack.c.l.b16 %v859
        %v951 = vunpack.c.l.b16 %v860
        %v952 = vunpack.c.h.b16 %v860
        %v953 = vunpack.c.l.b16 %v861
        %v954 = vunpack.c.l.b16 %v862
        %v955 = vunpack.c.h.b16 %v862
        %v956 = vunpack.c.l.b16 %v863
        %v957 = vunpack.c.l.b16 %v864
        %v958 = vunpack.c.h.b16 %v864
        %v959 = vunpack.c.l.b16 %v865
        %v960 = vunpack.c.l.b16 %v866
        %v961 = vunpack.c.h.b16 %v866
        %v962 = vunpack.c.l.b16 %v867
        %v963 = vunpack.c.l.b16 %v868
        %v964 = vunpack.c.h.b16 %v868
        %v965 = vunpack.c.l.b16 %v869
        %v966 = vunpack.c.l.b16 %v870
        %v967 = vunpack.c.h.b16 %v870
        %v968 = vunpack.c.l.b16 %v871
        %v969 = vpack.c.b16 %v924, %v921
        %v970 = vpack.c.b16 %v925, %v922
        %v971 = vpack.c.b16 %v926, %v923
        %v972 = vpack.c.b16 %v930, %v927
        %v973 = vpack.c.b16 %v931, %v928
        %v974 = vpack.c.b16 %v932, %v929
        %v975 = vpack.c.b16 %v936, %v933
        %v976 = vpack.c.b16 %v937, %v934
        %v977 = vpack.c.b16 %v938, %v935
        %v978 = vpack.c.b16 %v942, %v939
        %v979 = vpack.c.b16 %v943, %v940
        %v980 = vpack.c.b16 %v944, %v941
        %v981 = vpack.c.b16 %v948, %v945
        %v982 = vpack.c.b16 %v949, %v946
        %v983 = vpack.c.b16 %v950, %v947
        %v984 = vpack.c.b16 %v954, %v951
        %v985 = vpack.c.b16 %v955, %v952
        %v986 = vpack.c.b16 %v956, %v953
        %v987 = vpack.c.b16 %v960, %v957
        %v988 = vpack.c.b16 %v961, %v958
        %v989 = vpack.c.b16 %v962, %v959
        %v990 = vpack.c.b16 %v966, %v963
        %v991 = vpack.c.b16 %v967, %v964
        %v992 = vpack.c.b16 %v968, %v965
        %1017 = vmatprep.subr.bf16.mxu0 %v970
        %1018 = vmatpush1.bf16.msra.mxu0 %v969
        %1019 = vmatprep.subr.bf16.mxu0 %v973
        %1020 = vmatpush1.bf16.msra.mxu0 %v972
        %1021 = vmatprep.subr.bf16.mxu0 %v976
        %1022 = vmatpush1.bf16.msra.mxu0 %v975
        %1023 = vmatprep.subr.bf16.mxu0 %v979
        %1024 = vmatpush1.bf16.msra.mxu0 %v978
        %1025 = vmatprep.subr.bf16.mxu0 %v982
        %1026 = vmatpush1.bf16.msra.mxu0 %v981
        %1027 = vmatprep.subr.bf16.mxu0 %v985
        %1028 = vmatpush1.bf16.msra.mxu0 %v984
        %1029 = vmatprep.subr.bf16.mxu0 %v988
        %1030 = vmatpush1.bf16.msra.mxu0 %v987
        %1031 = vmatprep.subr.bf16.mxu0 %v991
        %1032 = vmatpush1.bf16.msra.mxu0 %v990
        %1033 = vmatprep.subr.bf16.mxu0 0
        %1034 = vmatpush1.bf16.msra.mxu0 0
        %1035 = vmatprep.subr.bf16.mxu0 0
        %1036 = vmatpush1.bf16.msra.mxu0 0
        %1037 = vmatprep.subr.bf16.mxu0 0
        %1038 = vmatpush1.bf16.msra.mxu0 0
        %1039 = vmatprep.subr.bf16.mxu0 0
        %1040 = vmatpush1.bf16.msra.mxu0 0
        %1041 = vmatprep.subr.bf16.mxu0 0
        %1042 = vmatpush1.bf16.msra.mxu0 0
        %1043 = vmatprep.subr.bf16.mxu0 0
        %1044 = vmatpush1.bf16.msra.mxu0 0
        %1045 = vmatprep.subr.bf16.mxu0 0
        %1046 = vmatpush1.bf16.msra.mxu0 0
        %1047 = vmatprep.subr.bf16.mxu0 0
        %1048 = vmatpush1.bf16.msra.mxu0 0
        %1049 = vmatprep.mubr.bf16.mxu0 0
        %1050 = vmatmul.mubr.bf16.gmra.mrb[0].mxu0 %v839
        %v1051 = vpop.f32.mrb[0].mxu0
        %v1052 = vadd.f32 %v877, %v1051
        %v1053 = vpop.f32.mrb[0].mxu0
        %v1054 = vadd.f32 %v881, %v1053
        %v1055 = vpop.f32.mrb[0].mxu0
        %v1056 = vadd.f32 %v877, %v1055
        %v1057 = vpop.f32.mrb[0].mxu0
        %v1058 = vadd.f32 %v881, %v1057
        %1059 = vdwg.mxu0
        %1060 = vmatprep.subr.bf16.mxu0 0
        %1061 = vmatpush1.bf16.msra.mxu0 %v971
        %1062 = vmatprep.subr.bf16.mxu0 0
        %1063 = vmatpush1.bf16.msra.mxu0 %v974
        %1064 = vmatprep.subr.bf16.mxu0 0
        %1065 = vmatpush1.bf16.msra.mxu0 %v977
        %1066 = vmatprep.subr.bf16.mxu0 0
        %1067 = vmatpush1.bf16.msra.mxu0 %v980
        %1068 = vmatprep.subr.bf16.mxu0 0
        %1069 = vmatpush1.bf16.msra.mxu0 %v983
        %1070 = vmatprep.subr.bf16.mxu0 0
        %1071 = vmatpush1.bf16.msra.mxu0 %v986
        %1072 = vmatprep.subr.bf16.mxu0 0
        %1073 = vmatpush1.bf16.msra.mxu0 %v989
        %1074 = vmatprep.subr.bf16.mxu0 0
        %1075 = vmatpush1.bf16.msra.mxu0 %v992
        %1076 = vmatprep.subr.bf16.mxu0 0
        %1077 = vmatpush1.bf16.msra.mxu0 0
        %1078 = vmatprep.subr.bf16.mxu0 0
        %1079 = vmatpush1.bf16.msra.mxu0 0
        %1080 = vmatprep.subr.bf16.mxu0 0
        %1081 = vmatpush1.bf16.msra.mxu0 0
        %1082 = vmatprep.subr.bf16.mxu0 0
        %1083 = vmatpush1.bf16.msra.mxu0 0
        %1084 = vmatprep.subr.bf16.mxu0 0
        %1085 = vmatpush1.bf16.msra.mxu0 0
        %1086 = vmatprep.subr.bf16.mxu0 0
        %1087 = vmatpush1.bf16.msra.mxu0 0
        %1088 = vmatprep.subr.bf16.mxu0 0
        %1089 = vmatpush1.bf16.msra.mxu0 0
        %1090 = vmatprep.subr.bf16.mxu0 0
        %1091 = vmatpush1.bf16.msra.mxu0 0
        %1092 = vmatprep.mubr.bf16.mxu0 0
        %1093 = vmatmul.mubr.bf16.gmra.mrb[0].mxu0 %v839
        %v1094 = vpop.f32.mrb[0].mxu0
        %v1095 = vadd.f32 %v885, %v1094
        %v1096 = vpop.f32.mrb[0].mxu0
        %v1097 = vpop.f32.mrb[0].mxu0
        %v1098 = vadd.f32 %v885, %v1097
        %v1099 = vpop.f32.mrb[0].mxu0
        %1100 = vdwg.mxu0
        %v1101 = vmul.f32 %v1052, 0.17677669
        %v1102 = vmul.f32 %v1056, 0.17677669
        %1105 = vrot.lane.b32.xlu0 %v1101, 96
        %v1106 = vpop.permute.xlu0 %1105
        %1107 = vrot.lane.b32.xlu0 %v1102, 96
        %v1108 = vpop.permute.xlu0 %1107
        %1111 = vrot.lane.b32.xlu0 %v1101, 64
        %v1112 = vpop.permute.xlu0 %1111
        %1113 = vrot.lane.b32.xlu0 %v1102, 64
        %v1114 = vpop.permute.xlu0 %1113
        %1117 = vrot.lane.b32.xlu0 %v1101, 32
        %v1118 = vpop.permute.xlu0 %1117
        %1119 = vrot.lane.b32.xlu0 %v1102, 32
        %v1120 = vpop.permute.xlu0 %1119
        %v1123 = vcombine.low %v1101, %v1112
        %v1124 = vcombine.high %v1101, %v1112
        %v1126 = vunpack.c.l.s4 1983009808
        %v1127 = vunpack.c.0.s8 %v1126
        %v1128 = vlaneseq
        %v1129 = vshrl.u32 %v1128, 7
        %v1130 = vsub.s32 %v1127, %v1129
        %v1131 = vrot.slane %v1123, %v1130
        %v1133 = vunpack.c.l.s4 1983009808
        %v1134 = vunpack.c.0.s8 %v1133
        %v1135 = vlaneseq
        %v1136 = vshrl.u32 %v1135, 7
        %v1137 = vsub.s32 %v1134, %v1136
        %v1138 = vrot.slane %v1124, %v1137
        %v1139 = vcombine.low %v1106, %v1118
        %v1140 = vcombine.high %v1106, %v1118
        %v1142 = vunpack.c.l.s4 1983009808
        %v1143 = vunpack.c.0.s8 %v1142
        %v1144 = vlaneseq
        %v1145 = vshrl.u32 %v1144, 7
        %v1146 = vsub.s32 %v1143, %v1145
        %v1147 = vrot.slane %v1139, %v1146
        %v1149 = vunpack.c.l.s4 1983009808
        %v1150 = vunpack.c.0.s8 %v1149
        %v1151 = vlaneseq
        %v1152 = vshrl.u32 %v1151, 7
        %v1153 = vsub.s32 %v1150, %v1152
        %v1154 = vrot.slane %v1140, %v1153
        %v1155 = vcombine.low %v1131, %v1147
        %v1156 = vcombine.high %v1131, %v1147
        %v1158 = vunpack.c.l.s4 1934713408
        %v1159 = vunpack.c.0.s8 %v1158
        %v1160 = vlaneseq
        %v1161 = vshrl.u32 %v1160, 7
        %v1162 = vsub.s32 %v1159, %v1161
        %v1163 = vrot.slane %v1155, %v1162
        %v1165 = vunpack.c.l.s4 1934713408
        %v1166 = vunpack.c.0.s8 %v1165
        %v1167 = vlaneseq
        %v1168 = vshrl.u32 %v1167, 7
        %v1169 = vsub.s32 %v1166, %v1168
        %v1170 = vrot.slane %v1156, %v1169
        %v1171 = vcombine.low %v1138, %v1154
        %v1172 = vcombine.high %v1138, %v1154
        %v1174 = vunpack.c.l.s4 1934713408
        %v1175 = vunpack.c.0.s8 %v1174
        %v1176 = vlaneseq
        %v1177 = vshrl.u32 %v1176, 7
        %v1178 = vsub.s32 %v1175, %v1177
        %v1179 = vrot.slane %v1171, %v1178
        %v1181 = vunpack.c.l.s4 1934713408
        %v1182 = vunpack.c.0.s8 %v1181
        %v1183 = vlaneseq
        %v1184 = vshrl.u32 %v1183, 7
        %v1185 = vsub.s32 %v1182, %v1184
        %v1186 = vrot.slane %v1172, %v1185
        %v1187 = vcombine.high %v1163, 0.0
        %v1188 = vcombine.high %v1170, 0.0
        %v1189 = vcombine.high %v1179, 0.0
        %v1190 = vcombine.high %v1186, 0.0
        %v1191 = vcombine.low %v1102, %v1114
        %v1192 = vcombine.high %v1102, %v1114
        %v1194 = vunpack.c.l.s4 1983009808
        %v1195 = vunpack.c.0.s8 %v1194
        %v1196 = vlaneseq
        %v1197 = vshrl.u32 %v1196, 7
        %v1198 = vsub.s32 %v1195, %v1197
        %v1199 = vrot.slane %v1191, %v1198
        %v1201 = vunpack.c.l.s4 1983009808
        %v1202 = vunpack.c.0.s8 %v1201
        %v1203 = vlaneseq
        %v1204 = vshrl.u32 %v1203, 7
        %v1205 = vsub.s32 %v1202, %v1204
        %v1206 = vrot.slane %v1192, %v1205
        %v1207 = vcombine.low %v1108, %v1120
        %v1208 = vcombine.high %v1108, %v1120
        %v1210 = vunpack.c.l.s4 1983009808
        %v1211 = vunpack.c.0.s8 %v1210
        %v1212 = vlaneseq
        %v1213 = vshrl.u32 %v1212, 7
        %v1214 = vsub.s32 %v1211, %v1213
        %v1215 = vrot.slane %v1207, %v1214
        %v1217 = vunpack.c.l.s4 1983009808
        %v1218 = vunpack.c.0.s8 %v1217
        %v1219 = vlaneseq
        %v1220 = vshrl.u32 %v1219, 7
        %v1221 = vsub.s32 %v1218, %v1220
        %v1222 = vrot.slane %v1208, %v1221
        %v1223 = vcombine.low %v1199, %v1215
        %v1224 = vcombine.high %v1199, %v1215
        %v1226 = vunpack.c.l.s4 1934713408
        %v1227 = vunpack.c.0.s8 %v1226
        %v1228 = vlaneseq
        %v1229 = vshrl.u32 %v1228, 7
        %v1230 = vsub.s32 %v1227, %v1229
        %v1231 = vrot.slane %v1223, %v1230
        %v1233 = vunpack.c.l.s4 1934713408
        %v1234 = vunpack.c.0.s8 %v1233
        %v1235 = vlaneseq
        %v1236 = vshrl.u32 %v1235, 7
        %v1237 = vsub.s32 %v1234, %v1236
        %v1238 = vrot.slane %v1224, %v1237
        %v1239 = vcombine.low %v1206, %v1222
        %v1240 = vcombine.high %v1206, %v1222
        %v1242 = vunpack.c.l.s4 1934713408
        %v1243 = vunpack.c.0.s8 %v1242
        %v1244 = vlaneseq
        %v1245 = vshrl.u32 %v1244, 7
        %v1246 = vsub.s32 %v1243, %v1245
        %v1247 = vrot.slane %v1239, %v1246
        %v1249 = vunpack.c.l.s4 1934713408
        %v1250 = vunpack.c.0.s8 %v1249
        %v1251 = vlaneseq
        %v1252 = vshrl.u32 %v1251, 7
        %v1253 = vsub.s32 %v1250, %v1252
        %v1254 = vrot.slane %v1240, %v1253
        %v1255 = vcombine.high %v1231, 0.0
        %v1256 = vcombine.high %v1238, 0.0
        %v1257 = vcombine.high %v1247, 0.0
        %v1258 = vcombine.high %v1254, 0.0
        %1261 = vrot.lane.b32.xlu0 %v1054, 96
        %v1262 = vpop.permute.xlu0 %1261
        %1263 = vrot.lane.b32.xlu0 %v1058, 96
        %v1264 = vpop.permute.xlu0 %1263
        %1267 = vrot.lane.b32.xlu0 %v1054, 64
        %v1268 = vpop.permute.xlu0 %1267
        %1269 = vrot.lane.b32.xlu0 %v1058, 64
        %v1270 = vpop.permute.xlu0 %1269
        %1273 = vrot.lane.b32.xlu0 %v1054, 32
        %v1274 = vpop.permute.xlu0 %1273
        %1275 = vrot.lane.b32.xlu0 %v1058, 32
        %v1276 = vpop.permute.xlu0 %1275
        %v1279 = vcombine.low %v1054, %v1268
        %v1280 = vcombine.high %v1054, %v1268
        %v1282 = vunpack.c.l.s4 1983009808
        %v1283 = vunpack.c.0.s8 %v1282
        %v1284 = vlaneseq
        %v1285 = vshrl.u32 %v1284, 7
        %v1286 = vsub.s32 %v1283, %v1285
        %v1287 = vrot.slane %v1279, %v1286
        %v1289 = vunpack.c.l.s4 1983009808
        %v1290 = vunpack.c.0.s8 %v1289
        %v1291 = vlaneseq
        %v1292 = vshrl.u32 %v1291, 7
        %v1293 = vsub.s32 %v1290, %v1292
        %v1294 = vrot.slane %v1280, %v1293
        %v1295 = vcombine.low %v1262, %v1274
        %v1296 = vcombine.high %v1262, %v1274
        %v1298 = vunpack.c.l.s4 1983009808
        %v1299 = vunpack.c.0.s8 %v1298
        %v1300 = vlaneseq
        %v1301 = vshrl.u32 %v1300, 7
        %v1302 = vsub.s32 %v1299, %v1301
        %v1303 = vrot.slane %v1295, %v1302
        %v1305 = vunpack.c.l.s4 1983009808
        %v1306 = vunpack.c.0.s8 %v1305
        %v1307 = vlaneseq
        %v1308 = vshrl.u32 %v1307, 7
        %v1309 = vsub.s32 %v1306, %v1308
        %v1310 = vrot.slane %v1296, %v1309
        %v1311 = vcombine.low %v1287, %v1303
        %v1312 = vcombine.high %v1287, %v1303
        %v1314 = vunpack.c.l.s4 1934713408
        %v1315 = vunpack.c.0.s8 %v1314
        %v1316 = vlaneseq
        %v1317 = vshrl.u32 %v1316, 7
        %v1318 = vsub.s32 %v1315, %v1317
        %v1319 = vrot.slane %v1311, %v1318
        %v1321 = vunpack.c.l.s4 1934713408
        %v1322 = vunpack.c.0.s8 %v1321
        %v1323 = vlaneseq
        %v1324 = vshrl.u32 %v1323, 7
        %v1325 = vsub.s32 %v1322, %v1324
        %v1326 = vrot.slane %v1312, %v1325
        %v1327 = vcombine.low %v1294, %v1310
        %v1328 = vcombine.high %v1294, %v1310
        %v1330 = vunpack.c.l.s4 1934713408
        %v1331 = vunpack.c.0.s8 %v1330
        %v1332 = vlaneseq
        %v1333 = vshrl.u32 %v1332, 7
        %v1334 = vsub.s32 %v1331, %v1333
        %v1335 = vrot.slane %v1327, %v1334
        %v1337 = vunpack.c.l.s4 1934713408
        %v1338 = vunpack.c.0.s8 %v1337
        %v1339 = vlaneseq
        %v1340 = vshrl.u32 %v1339, 7
        %v1341 = vsub.s32 %v1338, %v1340
        %v1342 = vrot.slane %v1328, %v1341
        %v1343 = vcombine.high %v1319, 0.0
        %v1344 = vcombine.high %v1326, 0.0
        %v1345 = vcombine.high %v1335, 0.0
        %v1346 = vcombine.high %v1342, 0.0
        %v1347 = vcombine.low %v1058, %v1270
        %v1348 = vcombine.high %v1058, %v1270
        %v1350 = vunpack.c.l.s4 1983009808
        %v1351 = vunpack.c.0.s8 %v1350
        %v1352 = vlaneseq
        %v1353 = vshrl.u32 %v1352, 7
        %v1354 = vsub.s32 %v1351, %v1353
        %v1355 = vrot.slane %v1347, %v1354
        %v1357 = vunpack.c.l.s4 1983009808
        %v1358 = vunpack.c.0.s8 %v1357
        %v1359 = vlaneseq
        %v1360 = vshrl.u32 %v1359, 7
        %v1361 = vsub.s32 %v1358, %v1360
        %v1362 = vrot.slane %v1348, %v1361
        %v1363 = vcombine.low %v1264, %v1276
        %v1364 = vcombine.high %v1264, %v1276
        %v1366 = vunpack.c.l.s4 1983009808
        %v1367 = vunpack.c.0.s8 %v1366
        %v1368 = vlaneseq
        %v1369 = vshrl.u32 %v1368, 7
        %v1370 = vsub.s32 %v1367, %v1369
        %v1371 = vrot.slane %v1363, %v1370
        %v1373 = vunpack.c.l.s4 1983009808
        %v1374 = vunpack.c.0.s8 %v1373
        %v1375 = vlaneseq
        %v1376 = vshrl.u32 %v1375, 7
        %v1377 = vsub.s32 %v1374, %v1376
        %v1378 = vrot.slane %v1364, %v1377
        %v1379 = vcombine.low %v1355, %v1371
        %v1380 = vcombine.high %v1355, %v1371
        %v1382 = vunpack.c.l.s4 1934713408
        %v1383 = vunpack.c.0.s8 %v1382
        %v1384 = vlaneseq
        %v1385 = vshrl.u32 %v1384, 7
        %v1386 = vsub.s32 %v1383, %v1385
        %v1387 = vrot.slane %v1379, %v1386
        %v1389 = vunpack.c.l.s4 1934713408
        %v1390 = vunpack.c.0.s8 %v1389
        %v1391 = vlaneseq
        %v1392 = vshrl.u32 %v1391, 7
        %v1393 = vsub.s32 %v1390, %v1392
        %v1394 = vrot.slane %v1380, %v1393
        %v1395 = vcombine.low %v1362, %v1378
        %v1396 = vcombine.high %v1362, %v1378
        %v1398 = vunpack.c.l.s4 1934713408
        %v1399 = vunpack.c.0.s8 %v1398
        %v1400 = vlaneseq
        %v1401 = vshrl.u32 %v1400, 7
        %v1402 = vsub.s32 %v1399, %v1401
        %v1403 = vrot.slane %v1395, %v1402
        %v1405 = vunpack.c.l.s4 1934713408
        %v1406 = vunpack.c.0.s8 %v1405
        %v1407 = vlaneseq
        %v1408 = vshrl.u32 %v1407, 7
        %v1409 = vsub.s32 %v1406, %v1408
        %v1410 = vrot.slane %v1396, %v1409
        %v1411 = vcombine.high %v1387, 0.0
        %v1412 = vcombine.high %v1394, 0.0
        %v1413 = vcombine.high %v1403, 0.0
        %v1414 = vcombine.high %v1410, 0.0
        %1417 = vrot.lane.b32.xlu0 %v1095, 96
        %v1418 = vpop.permute.xlu0 %1417
        %1419 = vrot.lane.b32.xlu0 %v1098, 96
        %v1420 = vpop.permute.xlu0 %1419
        %1423 = vrot.lane.b32.xlu0 %v1095, 64
        %v1424 = vpop.permute.xlu0 %1423
        %1425 = vrot.lane.b32.xlu0 %v1098, 64
        %v1426 = vpop.permute.xlu0 %1425
        %1429 = vrot.lane.b32.xlu0 %v1095, 32
        %v1430 = vpop.permute.xlu0 %1429
        %1431 = vrot.lane.b32.xlu0 %v1098, 32
        %v1432 = vpop.permute.xlu0 %1431
        %v1435 = vcombine.low %v1095, %v1424
        %v1436 = vcombine.high %v1095, %v1424
        %v1438 = vunpack.c.l.s4 1983009808
        %v1439 = vunpack.c.0.s8 %v1438
        %v1440 = vlaneseq
        %v1441 = vshrl.u32 %v1440, 7
        %v1442 = vsub.s32 %v1439, %v1441
        %v1443 = vrot.slane %v1435, %v1442
        %v1445 = vunpack.c.l.s4 1983009808
        %v1446 = vunpack.c.0.s8 %v1445
        %v1447 = vlaneseq
        %v1448 = vshrl.u32 %v1447, 7
        %v1449 = vsub.s32 %v1446, %v1448
        %v1450 = vrot.slane %v1436, %v1449
        %v1451 = vcombine.low %v1418, %v1430
        %v1452 = vcombine.high %v1418, %v1430
        %v1454 = vunpack.c.l.s4 1983009808
        %v1455 = vunpack.c.0.s8 %v1454
        %v1456 = vlaneseq
        %v1457 = vshrl.u32 %v1456, 7
        %v1458 = vsub.s32 %v1455, %v1457
        %v1459 = vrot.slane %v1451, %v1458
        %v1461 = vunpack.c.l.s4 1983009808
        %v1462 = vunpack.c.0.s8 %v1461
        %v1463 = vlaneseq
        %v1464 = vshrl.u32 %v1463, 7
        %v1465 = vsub.s32 %v1462, %v1464
        %v1466 = vrot.slane %v1452, %v1465
        %v1467 = vcombine.low %v1443, %v1459
        %v1468 = vcombine.high %v1443, %v1459
        %v1470 = vunpack.c.l.s4 1934713408
        %v1471 = vunpack.c.0.s8 %v1470
        %v1472 = vlaneseq
        %v1473 = vshrl.u32 %v1472, 7
        %v1474 = vsub.s32 %v1471, %v1473
        %v1475 = vrot.slane %v1467, %v1474
        %v1477 = vunpack.c.l.s4 1934713408
        %v1478 = vunpack.c.0.s8 %v1477
        %v1479 = vlaneseq
        %v1480 = vshrl.u32 %v1479, 7
        %v1481 = vsub.s32 %v1478, %v1480
        %v1482 = vrot.slane %v1468, %v1481
        %v1483 = vcombine.low %v1450, %v1466
        %v1484 = vcombine.high %v1450, %v1466
        %v1486 = vunpack.c.l.s4 1934713408
        %v1487 = vunpack.c.0.s8 %v1486
        %v1488 = vlaneseq
        %v1489 = vshrl.u32 %v1488, 7
        %v1490 = vsub.s32 %v1487, %v1489
        %v1491 = vrot.slane %v1483, %v1490
        %v1493 = vunpack.c.l.s4 1934713408
        %v1494 = vunpack.c.0.s8 %v1493
        %v1495 = vlaneseq
        %v1496 = vshrl.u32 %v1495, 7
        %v1497 = vsub.s32 %v1494, %v1496
        %v1498 = vrot.slane %v1484, %v1497
        %v1499 = vcombine.high %v1475, 0.0
        %v1500 = vcombine.high %v1482, 0.0
        %v1501 = vcombine.high %v1491, 0.0
        %v1502 = vcombine.high %v1498, 0.0
        %v1503 = vcombine.low %v1098, %v1426
        %v1504 = vcombine.high %v1098, %v1426
        %v1506 = vunpack.c.l.s4 1983009808
        %v1507 = vunpack.c.0.s8 %v1506
        %v1508 = vlaneseq
        %v1509 = vshrl.u32 %v1508, 7
        %v1510 = vsub.s32 %v1507, %v1509
        %v1511 = vrot.slane %v1503, %v1510
        %v1513 = vunpack.c.l.s4 1983009808
        %v1514 = vunpack.c.0.s8 %v1513
        %v1515 = vlaneseq
        %v1516 = vshrl.u32 %v1515, 7
        %v1517 = vsub.s32 %v1514, %v1516
        %v1518 = vrot.slane %v1504, %v1517
        %v1519 = vcombine.low %v1420, %v1432
        %v1520 = vcombine.high %v1420, %v1432
        %v1522 = vunpack.c.l.s4 1983009808
        %v1523 = vunpack.c.0.s8 %v1522
        %v1524 = vlaneseq
        %v1525 = vshrl.u32 %v1524, 7
        %v1526 = vsub.s32 %v1523, %v1525
        %v1527 = vrot.slane %v1519, %v1526
        %v1529 = vunpack.c.l.s4 1983009808
        %v1530 = vunpack.c.0.s8 %v1529
        %v1531 = vlaneseq
        %v1532 = vshrl.u32 %v1531, 7
        %v1533 = vsub.s32 %v1530, %v1532
        %v1534 = vrot.slane %v1520, %v1533
        %v1535 = vcombine.low %v1511, %v1527
        %v1536 = vcombine.high %v1511, %v1527
        %v1538 = vunpack.c.l.s4 1934713408
        %v1539 = vunpack.c.0.s8 %v1538
        %v1540 = vlaneseq
        %v1541 = vshrl.u32 %v1540, 7
        %v1542 = vsub.s32 %v1539, %v1541
        %v1543 = vrot.slane %v1535, %v1542
        %v1545 = vunpack.c.l.s4 1934713408
        %v1546 = vunpack.c.0.s8 %v1545
        %v1547 = vlaneseq
        %v1548 = vshrl.u32 %v1547, 7
        %v1549 = vsub.s32 %v1546, %v1548
        %v1550 = vrot.slane %v1536, %v1549
        %v1551 = vcombine.low %v1518, %v1534
        %v1552 = vcombine.high %v1518, %v1534
        %v1554 = vunpack.c.l.s4 1934713408
        %v1555 = vunpack.c.0.s8 %v1554
        %v1556 = vlaneseq
        %v1557 = vshrl.u32 %v1556, 7
        %v1558 = vsub.s32 %v1555, %v1557
        %v1559 = vrot.slane %v1551, %v1558
        %v1561 = vunpack.c.l.s4 1934713408
        %v1562 = vunpack.c.0.s8 %v1561
        %v1563 = vlaneseq
        %v1564 = vshrl.u32 %v1563, 7
        %v1565 = vsub.s32 %v1562, %v1564
        %v1566 = vrot.slane %v1552, %v1565
        %v1567 = vcombine.high %v1543, 0.0
        %v1568 = vcombine.high %v1550, 0.0
        %v1569 = vcombine.high %v1559, 0.0
        %v1570 = vcombine.high %v1566, 0.0
        %v1571 = vcombine.low %v1163, %v1170
        %v1573 = vunpack.c.l.s4 1983009808
        %v1574 = vunpack.c.0.s8 %v1573
        %v1575 = vlaneseq
        %v1576 = vshrl.u32 %v1575, 7
        %v1577 = vsub.s32 %v1574, %v1576
        %v1578 = vrot.slane %v1571, %v1577
        %v1579 = vcombine.low %v1187, %v1188
        %v1581 = vunpack.c.l.s4 1983009808
        %v1582 = vunpack.c.0.s8 %v1581
        %v1583 = vlaneseq
        %v1584 = vshrl.u32 %v1583, 7
        %v1585 = vsub.s32 %v1582, %v1584
        %v1586 = vrot.slane %v1579, %v1585
        %v1587 = vcombine.low %v1179, %v1186
        %v1589 = vunpack.c.l.s4 1983009808
        %v1590 = vunpack.c.0.s8 %v1589
        %v1591 = vlaneseq
        %v1592 = vshrl.u32 %v1591, 7
        %v1593 = vsub.s32 %v1590, %v1592
        %v1594 = vrot.slane %v1587, %v1593
        %v1595 = vcombine.low %v1189, %v1190
        %v1597 = vunpack.c.l.s4 1983009808
        %v1598 = vunpack.c.0.s8 %v1597
        %v1599 = vlaneseq
        %v1600 = vshrl.u32 %v1599, 7
        %v1601 = vsub.s32 %v1598, %v1600
        %v1602 = vrot.slane %v1595, %v1601
        %v1603 = vcombine.low %v1578, %v1586
        %v1604 = vcombine.high %v1578, %v1586
        %v1606 = vunpack.c.l.s4 1934713408
        %v1607 = vunpack.c.0.s8 %v1606
        %v1608 = vlaneseq
        %v1609 = vshrl.u32 %v1608, 7
        %v1610 = vsub.s32 %v1607, %v1609
        %v1611 = vrot.slane %v1603, %v1610
        %v1613 = vunpack.c.l.s4 1934713408
        %v1614 = vunpack.c.0.s8 %v1613
        %v1615 = vlaneseq
        %v1616 = vshrl.u32 %v1615, 7
        %v1617 = vsub.s32 %v1614, %v1616
        %v1618 = vrot.slane %v1604, %v1617
        %v1619 = vcombine.low %v1594, %v1602
        %v1620 = vcombine.high %v1594, %v1602
        %v1622 = vunpack.c.l.s4 1934713408
        %v1623 = vunpack.c.0.s8 %v1622
        %v1624 = vlaneseq
        %v1625 = vshrl.u32 %v1624, 7
        %v1626 = vsub.s32 %v1623, %v1625
        %v1627 = vrot.slane %v1619, %v1626
        %v1629 = vunpack.c.l.s4 1934713408
        %v1630 = vunpack.c.0.s8 %v1629
        %v1631 = vlaneseq
        %v1632 = vshrl.u32 %v1631, 7
        %v1633 = vsub.s32 %v1630, %v1632
        %v1634 = vrot.slane %v1620, %v1633
        %v1635 = vcombine.low %v1611, %v1627
        %v1636 = vcombine.high %v1611, %v1627
        %v1637 = vcombine.low %v1618, %v1634
        %v1638 = vcombine.high %v1618, %v1634
        %v1639 = vcombine.low %v1231, %v1238
        %v1641 = vunpack.c.l.s4 1983009808
        %v1642 = vunpack.c.0.s8 %v1641
        %v1643 = vlaneseq
        %v1644 = vshrl.u32 %v1643, 7
        %v1645 = vsub.s32 %v1642, %v1644
        %v1646 = vrot.slane %v1639, %v1645
        %v1647 = vcombine.low %v1255, %v1256
        %v1649 = vunpack.c.l.s4 1983009808
        %v1650 = vunpack.c.0.s8 %v1649
        %v1651 = vlaneseq
        %v1652 = vshrl.u32 %v1651, 7
        %v1653 = vsub.s32 %v1650, %v1652
        %v1654 = vrot.slane %v1647, %v1653
        %v1655 = vcombine.low %v1247, %v1254
        %v1657 = vunpack.c.l.s4 1983009808
        %v1658 = vunpack.c.0.s8 %v1657
        %v1659 = vlaneseq
        %v1660 = vshrl.u32 %v1659, 7
        %v1661 = vsub.s32 %v1658, %v1660
        %v1662 = vrot.slane %v1655, %v1661
        %v1663 = vcombine.low %v1257, %v1258
        %v1665 = vunpack.c.l.s4 1983009808
        %v1666 = vunpack.c.0.s8 %v1665
        %v1667 = vlaneseq
        %v1668 = vshrl.u32 %v1667, 7
        %v1669 = vsub.s32 %v1666, %v1668
        %v1670 = vrot.slane %v1663, %v1669
        %v1671 = vcombine.low %v1646, %v1654
        %v1672 = vcombine.high %v1646, %v1654
        %v1674 = vunpack.c.l.s4 1934713408
        %v1675 = vunpack.c.0.s8 %v1674
        %v1676 = vlaneseq
        %v1677 = vshrl.u32 %v1676, 7
        %v1678 = vsub.s32 %v1675, %v1677
        %v1679 = vrot.slane %v1671, %v1678
        %v1681 = vunpack.c.l.s4 1934713408
        %v1682 = vunpack.c.0.s8 %v1681
        %v1683 = vlaneseq
        %v1684 = vshrl.u32 %v1683, 7
        %v1685 = vsub.s32 %v1682, %v1684
        %v1686 = vrot.slane %v1672, %v1685
        %v1687 = vcombine.low %v1662, %v1670
        %v1688 = vcombine.high %v1662, %v1670
        %v1690 = vunpack.c.l.s4 1934713408
        %v1691 = vunpack.c.0.s8 %v1690
        %v1692 = vlaneseq
        %v1693 = vshrl.u32 %v1692, 7
        %v1694 = vsub.s32 %v1691, %v1693
        %v1695 = vrot.slane %v1687, %v1694
        %v1697 = vunpack.c.l.s4 1934713408
        %v1698 = vunpack.c.0.s8 %v1697
        %v1699 = vlaneseq
        %v1700 = vshrl.u32 %v1699, 7
        %v1701 = vsub.s32 %v1698, %v1700
        %v1702 = vrot.slane %v1688, %v1701
        %v1703 = vcombine.low %v1679, %v1695
        %v1704 = vcombine.high %v1679, %v1695
        %v1705 = vcombine.low %v1686, %v1702
        %v1706 = vcombine.high %v1686, %v1702
        %v1707 = vpack.c.bf16 %v1703, %v1635
        %v1708 = vpack.c.bf16 %v1704, %v1636
        %v1709 = vpack.c.bf16 %v1705, %v1637
        %v1710 = vpack.c.bf16 %v1706, %v1638
        %v1711 = vcombine.low %v1319, %v1326
        %v1713 = vunpack.c.l.s4 1983009808
        %v1714 = vunpack.c.0.s8 %v1713
        %v1715 = vlaneseq
        %v1716 = vshrl.u32 %v1715, 7
        %v1717 = vsub.s32 %v1714, %v1716
        %v1718 = vrot.slane %v1711, %v1717
        %v1719 = vcombine.low %v1343, %v1344
        %v1721 = vunpack.c.l.s4 1983009808
        %v1722 = vunpack.c.0.s8 %v1721
        %v1723 = vlaneseq
        %v1724 = vshrl.u32 %v1723, 7
        %v1725 = vsub.s32 %v1722, %v1724
        %v1726 = vrot.slane %v1719, %v1725
        %v1727 = vcombine.low %v1335, %v1342
        %v1729 = vunpack.c.l.s4 1983009808
        %v1730 = vunpack.c.0.s8 %v1729
        %v1731 = vlaneseq
        %v1732 = vshrl.u32 %v1731, 7
        %v1733 = vsub.s32 %v1730, %v1732
        %v1734 = vrot.slane %v1727, %v1733
        %v1735 = vcombine.low %v1345, %v1346
        %v1737 = vunpack.c.l.s4 1983009808
        %v1738 = vunpack.c.0.s8 %v1737
        %v1739 = vlaneseq
        %v1740 = vshrl.u32 %v1739, 7
        %v1741 = vsub.s32 %v1738, %v1740
        %v1742 = vrot.slane %v1735, %v1741
        %v1743 = vcombine.low %v1718, %v1726
        %v1744 = vcombine.high %v1718, %v1726
        %v1746 = vunpack.c.l.s4 1934713408
        %v1747 = vunpack.c.0.s8 %v1746
        %v1748 = vlaneseq
        %v1749 = vshrl.u32 %v1748, 7
        %v1750 = vsub.s32 %v1747, %v1749
        %v1751 = vrot.slane %v1743, %v1750
        %v1753 = vunpack.c.l.s4 1934713408
        %v1754 = vunpack.c.0.s8 %v1753
        %v1755 = vlaneseq
        %v1756 = vshrl.u32 %v1755, 7
        %v1757 = vsub.s32 %v1754, %v1756
        %v1758 = vrot.slane %v1744, %v1757
        %v1759 = vcombine.low %v1734, %v1742
        %v1760 = vcombine.high %v1734, %v1742
        %v1762 = vunpack.c.l.s4 1934713408
        %v1763 = vunpack.c.0.s8 %v1762
        %v1764 = vlaneseq
        %v1765 = vshrl.u32 %v1764, 7
        %v1766 = vsub.s32 %v1763, %v1765
        %v1767 = vrot.slane %v1759, %v1766
        %v1769 = vunpack.c.l.s4 1934713408
        %v1770 = vunpack.c.0.s8 %v1769
        %v1771 = vlaneseq
        %v1772 = vshrl.u32 %v1771, 7
        %v1773 = vsub.s32 %v1770, %v1772
        %v1774 = vrot.slane %v1760, %v1773
        %v1775 = vcombine.low %v1751, %v1767
        %v1776 = vcombine.high %v1751, %v1767
        %v1777 = vcombine.low %v1758, %v1774
        %v1778 = vcombine.high %v1758, %v1774
        %v1779 = vcombine.low %v1387, %v1394
        %v1781 = vunpack.c.l.s4 1983009808
        %v1782 = vunpack.c.0.s8 %v1781
        %v1783 = vlaneseq
        %v1784 = vshrl.u32 %v1783, 7
        %v1785 = vsub.s32 %v1782, %v1784
        %v1786 = vrot.slane %v1779, %v1785
        %v1787 = vcombine.low %v1411, %v1412
        %v1789 = vunpack.c.l.s4 1983009808
        %v1790 = vunpack.c.0.s8 %v1789
        %v1791 = vlaneseq
        %v1792 = vshrl.u32 %v1791, 7
        %v1793 = vsub.s32 %v1790, %v1792
        %v1794 = vrot.slane %v1787, %v1793
        %v1795 = vcombine.low %v1403, %v1410
        %v1797 = vunpack.c.l.s4 1983009808
        %v1798 = vunpack.c.0.s8 %v1797
        %v1799 = vlaneseq
        %v1800 = vshrl.u32 %v1799, 7
        %v1801 = vsub.s32 %v1798, %v1800
        %v1802 = vrot.slane %v1795, %v1801
        %v1803 = vcombine.low %v1413, %v1414
        %v1805 = vunpack.c.l.s4 1983009808
        %v1806 = vunpack.c.0.s8 %v1805
        %v1807 = vlaneseq
        %v1808 = vshrl.u32 %v1807, 7
        %v1809 = vsub.s32 %v1806, %v1808
        %v1810 = vrot.slane %v1803, %v1809
        %v1811 = vcombine.low %v1786, %v1794
        %v1812 = vcombine.high %v1786, %v1794
        %v1814 = vunpack.c.l.s4 1934713408
        %v1815 = vunpack.c.0.s8 %v1814
        %v1816 = vlaneseq
        %v1817 = vshrl.u32 %v1816, 7
        %v1818 = vsub.s32 %v1815, %v1817
        %v1819 = vrot.slane %v1811, %v1818
        %v1821 = vunpack.c.l.s4 1934713408
        %v1822 = vunpack.c.0.s8 %v1821
        %v1823 = vlaneseq
        %v1824 = vshrl.u32 %v1823, 7
        %v1825 = vsub.s32 %v1822, %v1824
        %v1826 = vrot.slane %v1812, %v1825
        %v1827 = vcombine.low %v1802, %v1810
        %v1828 = vcombine.high %v1802, %v1810
        %v1830 = vunpack.c.l.s4 1934713408
        %v1831 = vunpack.c.0.s8 %v1830
        %v1832 = vlaneseq
        %v1833 = vshrl.u32 %v1832, 7
        %v1834 = vsub.s32 %v1831, %v1833
        %v1835 = vrot.slane %v1827, %v1834
        %v1837 = vunpack.c.l.s4 1934713408
        %v1838 = vunpack.c.0.s8 %v1837
        %v1839 = vlaneseq
        %v1840 = vshrl.u32 %v1839, 7
        %v1841 = vsub.s32 %v1838, %v1840
        %v1842 = vrot.slane %v1828, %v1841
        %v1843 = vcombine.low %v1819, %v1835
        %v1844 = vcombine.high %v1819, %v1835
        %v1845 = vcombine.low %v1826, %v1842
        %v1846 = vcombine.high %v1826, %v1842
        %v1847 = vpack.c.bf16 %v1843, %v1775
        %v1848 = vpack.c.bf16 %v1844, %v1776
        %v1849 = vpack.c.bf16 %v1845, %v1777
        %v1850 = vpack.c.bf16 %v1846, %v1778
        %v1851 = vcombine.low %v1475, %v1482
        %v1853 = vunpack.c.l.s4 1983009808
        %v1854 = vunpack.c.0.s8 %v1853
        %v1855 = vlaneseq
        %v1856 = vshrl.u32 %v1855, 7
        %v1857 = vsub.s32 %v1854, %v1856
        %v1858 = vrot.slane %v1851, %v1857
        %v1859 = vcombine.low %v1499, %v1500
        %v1861 = vunpack.c.l.s4 1983009808
        %v1862 = vunpack.c.0.s8 %v1861
        %v1863 = vlaneseq
        %v1864 = vshrl.u32 %v1863, 7
        %v1865 = vsub.s32 %v1862, %v1864
        %v1866 = vrot.slane %v1859, %v1865
        %v1867 = vcombine.low %v1491, %v1498
        %v1869 = vunpack.c.l.s4 1983009808
        %v1870 = vunpack.c.0.s8 %v1869
        %v1871 = vlaneseq
        %v1872 = vshrl.u32 %v1871, 7
        %v1873 = vsub.s32 %v1870, %v1872
        %v1874 = vrot.slane %v1867, %v1873
        %v1875 = vcombine.low %v1501, %v1502
        %v1877 = vunpack.c.l.s4 1983009808
        %v1878 = vunpack.c.0.s8 %v1877
        %v1879 = vlaneseq
        %v1880 = vshrl.u32 %v1879, 7
        %v1881 = vsub.s32 %v1878, %v1880
        %v1882 = vrot.slane %v1875, %v1881
        %v1883 = vcombine.low %v1858, %v1866
        %v1884 = vcombine.high %v1858, %v1866
        %v1886 = vunpack.c.l.s4 1934713408
        %v1887 = vunpack.c.0.s8 %v1886
        %v1888 = vlaneseq
        %v1889 = vshrl.u32 %v1888, 7
        %v1890 = vsub.s32 %v1887, %v1889
        %v1891 = vrot.slane %v1883, %v1890
        %v1893 = vunpack.c.l.s4 1934713408
        %v1894 = vunpack.c.0.s8 %v1893
        %v1895 = vlaneseq
        %v1896 = vshrl.u32 %v1895, 7
        %v1897 = vsub.s32 %v1894, %v1896
        %v1898 = vrot.slane %v1884, %v1897
        %v1899 = vcombine.low %v1874, %v1882
        %v1900 = vcombine.high %v1874, %v1882
        %v1902 = vunpack.c.l.s4 1934713408
        %v1903 = vunpack.c.0.s8 %v1902
        %v1904 = vlaneseq
        %v1905 = vshrl.u32 %v1904, 7
        %v1906 = vsub.s32 %v1903, %v1905
        %v1907 = vrot.slane %v1899, %v1906
        %v1909 = vunpack.c.l.s4 1934713408
        %v1910 = vunpack.c.0.s8 %v1909
        %v1911 = vlaneseq
        %v1912 = vshrl.u32 %v1911, 7
        %v1913 = vsub.s32 %v1910, %v1912
        %v1914 = vrot.slane %v1900, %v1913
        %v1915 = vcombine.low %v1891, %v1907
        %v1916 = vcombine.high %v1891, %v1907
        %v1917 = vcombine.low %v1898, %v1914
        %v1918 = vcombine.high %v1898, %v1914
        %v1919 = vcombine.low %v1543, %v1550
        %v1921 = vunpack.c.l.s4 1983009808
        %v1922 = vunpack.c.0.s8 %v1921
        %v1923 = vlaneseq
        %v1924 = vshrl.u32 %v1923, 7
        %v1925 = vsub.s32 %v1922, %v1924
        %v1926 = vrot.slane %v1919, %v1925
        %v1927 = vcombine.low %v1567, %v1568
        %v1929 = vunpack.c.l.s4 1983009808
        %v1930 = vunpack.c.0.s8 %v1929
        %v1931 = vlaneseq
        %v1932 = vshrl.u32 %v1931, 7
        %v1933 = vsub.s32 %v1930, %v1932
        %v1934 = vrot.slane %v1927, %v1933
        %v1935 = vcombine.low %v1559, %v1566
        %v1937 = vunpack.c.l.s4 1983009808
        %v1938 = vunpack.c.0.s8 %v1937
        %v1939 = vlaneseq
        %v1940 = vshrl.u32 %v1939, 7
        %v1941 = vsub.s32 %v1938, %v1940
        %v1942 = vrot.slane %v1935, %v1941
        %v1943 = vcombine.low %v1569, %v1570
        %v1945 = vunpack.c.l.s4 1983009808
        %v1946 = vunpack.c.0.s8 %v1945
        %v1947 = vlaneseq
        %v1948 = vshrl.u32 %v1947, 7
        %v1949 = vsub.s32 %v1946, %v1948
        %v1950 = vrot.slane %v1943, %v1949
        %v1951 = vcombine.low %v1926, %v1934
        %v1952 = vcombine.high %v1926, %v1934
        %v1954 = vunpack.c.l.s4 1934713408
        %v1955 = vunpack.c.0.s8 %v1954
        %v1956 = vlaneseq
        %v1957 = vshrl.u32 %v1956, 7
        %v1958 = vsub.s32 %v1955, %v1957
        %v1959 = vrot.slane %v1951, %v1958
        %v1961 = vunpack.c.l.s4 1934713408
        %v1962 = vunpack.c.0.s8 %v1961
        %v1963 = vlaneseq
        %v1964 = vshrl.u32 %v1963, 7
        %v1965 = vsub.s32 %v1962, %v1964
        %v1966 = vrot.slane %v1952, %v1965
        %v1967 = vcombine.low %v1942, %v1950
        %v1968 = vcombine.high %v1942, %v1950
        %v1970 = vunpack.c.l.s4 1934713408
        %v1971 = vunpack.c.0.s8 %v1970
        %v1972 = vlaneseq
        %v1973 = vshrl.u32 %v1972, 7
        %v1974 = vsub.s32 %v1971, %v1973
        %v1975 = vrot.slane %v1967, %v1974
        %v1977 = vunpack.c.l.s4 1934713408
        %v1978 = vunpack.c.0.s8 %v1977
        %v1979 = vlaneseq
        %v1980 = vshrl.u32 %v1979, 7
        %v1981 = vsub.s32 %v1978, %v1980
        %v1982 = vrot.slane %v1968, %v1981
        %v1983 = vcombine.low %v1959, %v1975
        %v1984 = vcombine.high %v1959, %v1975
        %v1985 = vcombine.low %v1966, %v1982
        %v1986 = vcombine.high %v1966, %v1982
        %v1987 = vpack.c.bf16 %v1983, %v1915
        %v1988 = vpack.c.bf16 %v1984, %v1916
        %v1989 = vpack.c.bf16 %v1985, %v1917
        %v1990 = vpack.c.bf16 %v1986, %v1918
        %vm1991 = vcmask 261120
        %v1993 = vsel %vm1991, %v1707, 0
        %v1996 = vsel %vm1991, %v1847, 0
        %1998 = vmatprep.subr.bf16.mxu0 0
        %1999 = vmatpush1.bf16.xpose.msra.mxu0 %v1996
        %2000 = vmatprep.subr.bf16.mxu0 0
        %2001 = vmatpush1.bf16.xpose.msra.mxu0 0
        %2002 = vmatprep.subr.bf16.mxu0 0
        %2003 = vmatpush1.bf16.xpose.msra.mxu0 0
        %2004 = vmatprep.subr.bf16.mxu0 0
        %2005 = vmatpush1.bf16.xpose.msra.mxu0 0
        %2006 = vmatprep.subr.bf16.mxu0 0
        %2007 = vmatpush1.bf16.xpose.msra.mxu0 0
        %2008 = vmatprep.subr.bf16.mxu0 0
        %2009 = vmatpush1.bf16.xpose.msra.mxu0 0
        %2010 = vmatprep.subr.bf16.mxu0 0
        %2011 = vmatpush1.bf16.xpose.msra.mxu0 0
        %2012 = vmatprep.subr.bf16.mxu0 0
        %2013 = vmatpush1.bf16.xpose.msra.mxu0 0
        %2014 = vmatprep.subr.bf16.mxu0 0
        %2015 = vmatpush1.bf16.xpose.msra.mxu0 0
        %2016 = vmatprep.subr.bf16.mxu0 0
        %2017 = vmatpush1.bf16.xpose.msra.mxu0 0
        %2018 = vmatprep.subr.bf16.mxu0 0
        %2019 = vmatpush1.bf16.xpose.msra.mxu0 0
        %2020 = vmatprep.subr.bf16.mxu0 0
        %2021 = vmatpush1.bf16.xpose.msra.mxu0 0
        %2022 = vmatprep.subr.bf16.mxu0 0
        %2023 = vmatpush1.bf16.xpose.msra.mxu0 0
        %2024 = vmatprep.subr.bf16.mxu0 0
        %2025 = vmatpush1.bf16.xpose.msra.mxu0 0
        %2026 = vmatprep.subr.bf16.mxu0 0
        %2027 = vmatpush1.bf16.xpose.msra.mxu0 0
        %2028 = vmatprep.subr.bf16.mxu0 0
        %2029 = vmatpush1.bf16.xpose.msra.mxu0 0
        %2030 = vmatprep.mubr.bf16.mxu0 0
        %2031 = vmatmul.mubr.bf16.gmra.mrb[0].mxu0 %v1993
        %v2032 = vpop.f32.mrb[0].mxu0
        %v2033 = vadd.f32 0.0, %v2032
        %v2034 = vpop.f32.mrb[0].mxu0
        %v2035 = vpop.f32.mrb[0].mxu0
        %v2036 = vadd.f32 0.0, %v2035
        %v2037 = vpop.f32.mrb[0].mxu0
        %2038 = vdwg.mxu0
        %v2040 = vsel %vm1991, %v1708, 0
        %v2043 = vsel %vm1991, %v1848, 0
        %2045 = vmatprep.subr.bf16.mxu0 0
        %2046 = vmatpush1.bf16.xpose.msra.mxu0 %v2043
        %2047 = vmatprep.subr.bf16.mxu0 0
        %2048 = vmatpush1.bf16.xpose.msra.mxu0 0
        %2049 = vmatprep.subr.bf16.mxu0 0
        %2050 = vmatpush1.bf16.xpose.msra.mxu0 0
        %2051 = vmatprep.subr.bf16.mxu0 0
        %2052 = vmatpush1.bf16.xpose.msra.mxu0 0
        %2053 = vmatprep.subr.bf16.mxu0 0
        %2054 = vmatpush1.bf16.xpose.msra.mxu0 0
        %2055 = vmatprep.subr.bf16.mxu0 0
        %2056 = vmatpush1.bf16.xpose.msra.mxu0 0
        %2057 = vmatprep.subr.bf16.mxu0 0
        %2058 = vmatpush1.bf16.xpose.msra.mxu0 0
        %2059 = vmatprep.subr.bf16.mxu0 0
        %2060 = vmatpush1.bf16.xpose.msra.mxu0 0
        %2061 = vmatprep.subr.bf16.mxu0 0
        %2062 = vmatpush1.bf16.xpose.msra.mxu0 0
        %2063 = vmatprep.subr.bf16.mxu0 0
        %2064 = vmatpush1.bf16.xpose.msra.mxu0 0
        %2065 = vmatprep.subr.bf16.mxu0 0
        %2066 = vmatpush1.bf16.xpose.msra.mxu0 0
        %2067 = vmatprep.subr.bf16.mxu0 0
        %2068 = vmatpush1.bf16.xpose.msra.mxu0 0
        %2069 = vmatprep.subr.bf16.mxu0 0
        %2070 = vmatpush1.bf16.xpose.msra.mxu0 0
        %2071 = vmatprep.subr.bf16.mxu0 0
        %2072 = vmatpush1.bf16.xpose.msra.mxu0 0
        %2073 = vmatprep.subr.bf16.mxu0 0
        %2074 = vmatpush1.bf16.xpose.msra.mxu0 0
        %2075 = vmatprep.subr.bf16.mxu0 0
        %2076 = vmatpush1.bf16.xpose.msra.mxu0 0
        %2077 = vmatprep.mubr.bf16.mxu0 0
        %2078 = vmatmul.mubr.bf16.gmra.mrb[0].mxu0 %v2040
        %v2079 = vpop.f32.mrb[0].mxu0
        %v2080 = vadd.f32 0.0, %v2079
        %v2081 = vpop.f32.mrb[0].mxu0
        %v2082 = vpop.f32.mrb[0].mxu0
        %v2083 = vadd.f32 0.0, %v2082
        %v2084 = vpop.f32.mrb[0].mxu0
        %2085 = vdwg.mxu0
        %v2087 = vsel %vm1991, %v1709, 0
        %v2090 = vsel %vm1991, %v1849, 0
        %2092 = vmatprep.subr.bf16.mxu0 0
        %2093 = vmatpush1.bf16.xpose.msra.mxu0 %v2090
        %2094 = vmatprep.subr.bf16.mxu0 0
        %2095 = vmatpush1.bf16.xpose.msra.mxu0 0
        %2096 = vmatprep.subr.bf16.mxu0 0
        %2097 = vmatpush1.bf16.xpose.msra.mxu0 0
        %2098 = vmatprep.subr.bf16.mxu0 0
        %2099 = vmatpush1.bf16.xpose.msra.mxu0 0
        %2100 = vmatprep.subr.bf16.mxu0 0
        %2101 = vmatpush1.bf16.xpose.msra.mxu0 0
        %2102 = vmatprep.subr.bf16.mxu0 0
        %2103 = vmatpush1.bf16.xpose.msra.mxu0 0
        %2104 = vmatprep.subr.bf16.mxu0 0
        %2105 = vmatpush1.bf16.xpose.msra.mxu0 0
        %2106 = vmatprep.subr.bf16.mxu0 0
        %2107 = vmatpush1.bf16.xpose.msra.mxu0 0
        %2108 = vmatprep.subr.bf16.mxu0 0
        %2109 = vmatpush1.bf16.xpose.msra.mxu0 0
        %2110 = vmatprep.subr.bf16.mxu0 0
        %2111 = vmatpush1.bf16.xpose.msra.mxu0 0
        %2112 = vmatprep.subr.bf16.mxu0 0
        %2113 = vmatpush1.bf16.xpose.msra.mxu0 0
        %2114 = vmatprep.subr.bf16.mxu0 0
        %2115 = vmatpush1.bf16.xpose.msra.mxu0 0
        %2116 = vmatprep.subr.bf16.mxu0 0
        %2117 = vmatpush1.bf16.xpose.msra.mxu0 0
        %2118 = vmatprep.subr.bf16.mxu0 0
        %2119 = vmatpush1.bf16.xpose.msra.mxu0 0
        %2120 = vmatprep.subr.bf16.mxu0 0
        %2121 = vmatpush1.bf16.xpose.msra.mxu0 0
        %2122 = vmatprep.subr.bf16.mxu0 0
        %2123 = vmatpush1.bf16.xpose.msra.mxu0 0
        %2124 = vmatprep.mubr.bf16.mxu0 0
        %2125 = vmatmul.mubr.bf16.gmra.mrb[0].mxu0 %v2087
        %v2126 = vpop.f32.mrb[0].mxu0
        %v2127 = vadd.f32 0.0, %v2126
        %v2128 = vpop.f32.mrb[0].mxu0
        %v2129 = vpop.f32.mrb[0].mxu0
        %v2130 = vadd.f32 0.0, %v2129
        %v2131 = vpop.f32.mrb[0].mxu0
        %2132 = vdwg.mxu0
        %v2134 = vsel %vm1991, %v1710, 0
        %v2137 = vsel %vm1991, %v1850, 0
        %2139 = vmatprep.subr.bf16.mxu0 0
        %2140 = vmatpush1.bf16.xpose.msra.mxu0 %v2137
        %2141 = vmatprep.subr.bf16.mxu0 0
        %2142 = vmatpush1.bf16.xpose.msra.mxu0 0
        %2143 = vmatprep.subr.bf16.mxu0 0
        %2144 = vmatpush1.bf16.xpose.msra.mxu0 0
        %2145 = vmatprep.subr.bf16.mxu0 0
        %2146 = vmatpush1.bf16.xpose.msra.mxu0 0
        %2147 = vmatprep.subr.bf16.mxu0 0
        %2148 = vmatpush1.bf16.xpose.msra.mxu0 0
        %2149 = vmatprep.subr.bf16.mxu0 0
        %2150 = vmatpush1.bf16.xpose.msra.mxu0 0
        %2151 = vmatprep.subr.bf16.mxu0 0
        %2152 = vmatpush1.bf16.xpose.msra.mxu0 0
        %2153 = vmatprep.subr.bf16.mxu0 0
        %2154 = vmatpush1.bf16.xpose.msra.mxu0 0
        %2155 = vmatprep.subr.bf16.mxu0 0
        %2156 = vmatpush1.bf16.xpose.msra.mxu0 0
        %2157 = vmatprep.subr.bf16.mxu0 0
        %2158 = vmatpush1.bf16.xpose.msra.mxu0 0
        %2159 = vmatprep.subr.bf16.mxu0 0
        %2160 = vmatpush1.bf16.xpose.msra.mxu0 0
        %2161 = vmatprep.subr.bf16.mxu0 0
        %2162 = vmatpush1.bf16.xpose.msra.mxu0 0
        %2163 = vmatprep.subr.bf16.mxu0 0
        %2164 = vmatpush1.bf16.xpose.msra.mxu0 0
        %2165 = vmatprep.subr.bf16.mxu0 0
        %2166 = vmatpush1.bf16.xpose.msra.mxu0 0
        %2167 = vmatprep.subr.bf16.mxu0 0
        %2168 = vmatpush1.bf16.xpose.msra.mxu0 0
        %2169 = vmatprep.subr.bf16.mxu0 0
        %2170 = vmatpush1.bf16.xpose.msra.mxu0 0
        %2171 = vmatprep.mubr.bf16.mxu0 0
        %2172 = vmatmul.mubr.bf16.gmra.mrb[0].mxu0 %v2134
        %v2173 = vpop.f32.mrb[0].mxu0
        %v2174 = vadd.f32 0.0, %v2173
        %v2175 = vpop.f32.mrb[0].mxu0
        %v2176 = vpop.f32.mrb[0].mxu0
        %v2177 = vadd.f32 0.0, %v2176
        %v2178 = vpop.f32.mrb[0].mxu0
        %2179 = vdwg.mxu0
        %v2180 = vsel %vm796, 1, 0
        %v2181 = vsel %vm797, 1, 0
        %vm2182 = vcmp.eq.s32.totalorder %v2180, 1
        %vm2183 = vcmp.eq.s32.totalorder %v2181, 1
        %v2184 = vsel %vm2182, %v2033, -1e+30
        %v2185 = vsel %vm2183, %v2036, -1e+30
        %v2186 = vsel %vm2182, %v2080, -1e+30
        %v2187 = vsel %vm2183, %v2083, -1e+30
        %v2188 = vsel %vm2182, %v2127, -1e+30
        %v2189 = vsel %vm2183, %v2130, -1e+30
        %v2190 = vsel %vm2182, %v2174, -1e+30
        %v2191 = vsel %vm2183, %v2177, -1e+30
        %vm2192 = vcmask 130048
        %v2193 = vsel %vm2192, %v2184, -inf
        %2194 = vmax.xlane.f32.xlu0 %v2193
        %v2195 = vpop.xlane.xlu0 %2194
        %v2196 = vsel %vm2192, %v2185, -inf
        %2197 = vmax.xlane.f32.xlu0 %v2196
        %v2198 = vpop.xlane.xlu0 %2197
        %v2199 = vsel %vm2192, %v2186, -inf
        %2200 = vmax.xlane.f32.xlu0 %v2199
        %v2201 = vpop.xlane.xlu0 %2200
        %v2202 = vsel %vm2192, %v2187, -inf
        %2203 = vmax.xlane.f32.xlu0 %v2202
        %v2204 = vpop.xlane.xlu0 %2203
        %v2205 = vsel %vm2192, %v2188, -inf
        %2206 = vmax.xlane.f32.xlu0 %v2205
        %v2207 = vpop.xlane.xlu0 %2206
        %v2208 = vsel %vm2192, %v2189, -inf
        %2209 = vmax.xlane.f32.xlu0 %v2208
        %v2210 = vpop.xlane.xlu0 %2209
        %v2211 = vsel %vm2192, %v2190, -inf
        %2212 = vmax.xlane.f32.xlu0 %v2211
        %v2213 = vpop.xlane.xlu0 %2212
        %v2214 = vsel %vm2192, %v2191, -inf
        %2215 = vmax.xlane.f32.xlu0 %v2214
        %v2216 = vpop.xlane.xlu0 %2215
        %v2217 = vsub.f32 %v2184, %v2195
        %v2218 = vsub.f32 %v2185, %v2198
        %v2219 = vsub.f32 %v2186, %v2201
        %v2220 = vsub.f32 %v2187, %v2204
        %v2221 = vsub.f32 %v2188, %v2207
        %v2222 = vsub.f32 %v2189, %v2210
        %v2223 = vsub.f32 %v2190, %v2213
        %v2224 = vsub.f32 %v2191, %v2216
        %v2225 = vmul.f32 %v2217, 1.442695
        %v2226 = vpow.pop %v2225
        %v2227 = vmul.f32 %v2218, 1.442695
        %v2228 = vpow.pop %v2227
        %v2229 = vmul.f32 %v2219, 1.442695
        %v2230 = vpow.pop %v2229
        %v2231 = vmul.f32 %v2220, 1.442695
        %v2232 = vpow.pop %v2231
        %v2233 = vmul.f32 %v2221, 1.442695
        %v2234 = vpow.pop %v2233
        %v2235 = vmul.f32 %v2222, 1.442695
        %v2236 = vpow.pop %v2235
        %v2237 = vmul.f32 %v2223, 1.442695
        %v2238 = vpow.pop %v2237
        %v2239 = vmul.f32 %v2224, 1.442695
        %v2240 = vpow.pop %v2239
        %v2241 = vsel %vm2192, %v2226, 0.0
        %2242 = vadd.xlane.f32.xlu0 %v2241
        %v2243 = vpop.xlane.xlu0 %2242
        %v2244 = vsel %vm2192, %v2228, 0.0
        %2245 = vadd.xlane.f32.xlu0 %v2244
        %v2246 = vpop.xlane.xlu0 %2245
        %v2247 = vsel %vm2192, %v2230, 0.0
        %2248 = vadd.xlane.f32.xlu0 %v2247
        %v2249 = vpop.xlane.xlu0 %2248
        %v2250 = vsel %vm2192, %v2232, 0.0
        %2251 = vadd.xlane.f32.xlu0 %v2250
        %v2252 = vpop.xlane.xlu0 %2251
        %v2253 = vsel %vm2192, %v2234, 0.0
        %2254 = vadd.xlane.f32.xlu0 %v2253
        %v2255 = vpop.xlane.xlu0 %2254
        %v2256 = vsel %vm2192, %v2236, 0.0
        %2257 = vadd.xlane.f32.xlu0 %v2256
        %v2258 = vpop.xlane.xlu0 %2257
        %v2259 = vsel %vm2192, %v2238, 0.0
        %2260 = vadd.xlane.f32.xlu0 %v2259
        %v2261 = vpop.xlane.xlu0 %2260
        %v2262 = vsel %vm2192, %v2240, 0.0
        %2263 = vadd.xlane.f32.xlu0 %v2262
        %v2264 = vpop.xlane.xlu0 %2263
        %v2265 = vrcp.pop %v2243
        %v2266 = vrcp.pop %v2246
        %v2267 = vrcp.pop %v2249
        %v2268 = vrcp.pop %v2252
        %v2269 = vrcp.pop %v2255
        %v2270 = vrcp.pop %v2258
        %v2271 = vrcp.pop %v2261
        %v2272 = vrcp.pop %v2264
        %v2273 = vmul.f32 %v2226, %v2265
        %v2274 = vmul.f32 %v2228, %v2266
        %v2275 = vmul.f32 %v2230, %v2267
        %v2276 = vmul.f32 %v2232, %v2268
        %v2277 = vmul.f32 %v2234, %v2269
        %v2278 = vmul.f32 %v2236, %v2270
        %v2279 = vmul.f32 %v2238, %v2271
        %v2280 = vmul.f32 %v2240, %v2272
        %v2281 = vpack.c.bf16 %v2274, %v2273
        %v2282 = vpack.c.bf16 %v2276, %v2275
        %v2283 = vpack.c.bf16 %v2278, %v2277
        %v2284 = vpack.c.bf16 %v2280, %v2279
        %v2286 = vsel %vm2192, %v2281, 0
        %2288 = vmatprep.subr.bf16.mxu0 0
        %2289 = vmatpush1.bf16.msra.mxu0 %v1987
        %2290 = vmatprep.subr.bf16.mxu0 0
        %2291 = vmatpush1.bf16.msra.mxu0 0
        %2292 = vmatprep.subr.bf16.mxu0 0
        %2293 = vmatpush1.bf16.msra.mxu0 0
        %2294 = vmatprep.subr.bf16.mxu0 0
        %2295 = vmatpush1.bf16.msra.mxu0 0
        %2296 = vmatprep.subr.bf16.mxu0 0
        %2297 = vmatpush1.bf16.msra.mxu0 0
        %2298 = vmatprep.subr.bf16.mxu0 0
        %2299 = vmatpush1.bf16.msra.mxu0 0
        %2300 = vmatprep.subr.bf16.mxu0 0
        %2301 = vmatpush1.bf16.msra.mxu0 0
        %2302 = vmatprep.subr.bf16.mxu0 0
        %2303 = vmatpush1.bf16.msra.mxu0 0
        %2304 = vmatprep.subr.bf16.mxu0 0
        %2305 = vmatpush1.bf16.msra.mxu0 0
        %2306 = vmatprep.subr.bf16.mxu0 0
        %2307 = vmatpush1.bf16.msra.mxu0 0
        %2308 = vmatprep.subr.bf16.mxu0 0
        %2309 = vmatpush1.bf16.msra.mxu0 0
        %2310 = vmatprep.subr.bf16.mxu0 0
        %2311 = vmatpush1.bf16.msra.mxu0 0
        %2312 = vmatprep.subr.bf16.mxu0 0
        %2313 = vmatpush1.bf16.msra.mxu0 0
        %2314 = vmatprep.subr.bf16.mxu0 0
        %2315 = vmatpush1.bf16.msra.mxu0 0
        %2316 = vmatprep.subr.bf16.mxu0 0
        %2317 = vmatpush1.bf16.msra.mxu0 0
        %2318 = vmatprep.subr.bf16.mxu0 0
        %2319 = vmatpush1.bf16.msra.mxu0 0
        %2320 = vmatprep.mubr.bf16.mxu0 0
        %2321 = vmatmul.mubr.bf16.gmra.mrb[0].mxu0 %v2286
        %v2322 = vpop.f32.mrb[0].mxu0
        %v2323 = vadd.f32 0.0, %v2322
        %v2324 = vpop.f32.mrb[0].mxu0
        %v2325 = vpop.f32.mrb[0].mxu0
        %v2326 = vadd.f32 0.0, %v2325
        %v2327 = vpop.f32.mrb[0].mxu0
        %2328 = vdwg.mxu0
        %v2330 = vsel %vm2192, %v2282, 0
        %2332 = vmatprep.subr.bf16.mxu0 0
        %2333 = vmatpush1.bf16.msra.mxu0 %v1988
        %2334 = vmatprep.subr.bf16.mxu0 0
        %2335 = vmatpush1.bf16.msra.mxu0 0
        %2336 = vmatprep.subr.bf16.mxu0 0
        %2337 = vmatpush1.bf16.msra.mxu0 0
        %2338 = vmatprep.subr.bf16.mxu0 0
        %2339 = vmatpush1.bf16.msra.mxu0 0
        %2340 = vmatprep.subr.bf16.mxu0 0
        %2341 = vmatpush1.bf16.msra.mxu0 0
        %2342 = vmatprep.subr.bf16.mxu0 0
        %2343 = vmatpush1.bf16.msra.mxu0 0
        %2344 = vmatprep.subr.bf16.mxu0 0
        %2345 = vmatpush1.bf16.msra.mxu0 0
        %2346 = vmatprep.subr.bf16.mxu0 0
        %2347 = vmatpush1.bf16.msra.mxu0 0
        %2348 = vmatprep.subr.bf16.mxu0 0
        %2349 = vmatpush1.bf16.msra.mxu0 0
        %2350 = vmatprep.subr.bf16.mxu0 0
        %2351 = vmatpush1.bf16.msra.mxu0 0
        %2352 = vmatprep.subr.bf16.mxu0 0
        %2353 = vmatpush1.bf16.msra.mxu0 0
        %2354 = vmatprep.subr.bf16.mxu0 0
        %2355 = vmatpush1.bf16.msra.mxu0 0
        %2356 = vmatprep.subr.bf16.mxu0 0
        %2357 = vmatpush1.bf16.msra.mxu0 0
        %2358 = vmatprep.subr.bf16.mxu0 0
        %2359 = vmatpush1.bf16.msra.mxu0 0
        %2360 = vmatprep.subr.bf16.mxu0 0
        %2361 = vmatpush1.bf16.msra.mxu0 0
        %2362 = vmatprep.subr.bf16.mxu0 0
        %2363 = vmatpush1.bf16.msra.mxu0 0
        %2364 = vmatprep.mubr.bf16.mxu0 0
        %2365 = vmatmul.mubr.bf16.gmra.mrb[0].mxu0 %v2330
        %v2366 = vpop.f32.mrb[0].mxu0
        %v2367 = vadd.f32 0.0, %v2366
        %v2368 = vpop.f32.mrb[0].mxu0
        %v2369 = vpop.f32.mrb[0].mxu0
        %v2370 = vadd.f32 0.0, %v2369
        %v2371 = vpop.f32.mrb[0].mxu0
        %2372 = vdwg.mxu0
        %v2374 = vsel %vm2192, %v2283, 0
        %2376 = vmatprep.subr.bf16.mxu0 0
        %2377 = vmatpush1.bf16.msra.mxu0 %v1989
        %2378 = vmatprep.subr.bf16.mxu0 0
        %2379 = vmatpush1.bf16.msra.mxu0 0
        %2380 = vmatprep.subr.bf16.mxu0 0
        %2381 = vmatpush1.bf16.msra.mxu0 0
        %2382 = vmatprep.subr.bf16.mxu0 0
        %2383 = vmatpush1.bf16.msra.mxu0 0
        %2384 = vmatprep.subr.bf16.mxu0 0
        %2385 = vmatpush1.bf16.msra.mxu0 0
        %2386 = vmatprep.subr.bf16.mxu0 0
        %2387 = vmatpush1.bf16.msra.mxu0 0
        %2388 = vmatprep.subr.bf16.mxu0 0
        %2389 = vmatpush1.bf16.msra.mxu0 0
        %2390 = vmatprep.subr.bf16.mxu0 0
        %2391 = vmatpush1.bf16.msra.mxu0 0
        %2392 = vmatprep.subr.bf16.mxu0 0
        %2393 = vmatpush1.bf16.msra.mxu0 0
        %2394 = vmatprep.subr.bf16.mxu0 0
        %2395 = vmatpush1.bf16.msra.mxu0 0
        %2396 = vmatprep.subr.bf16.mxu0 0
        %2397 = vmatpush1.bf16.msra.mxu0 0
        %2398 = vmatprep.subr.bf16.mxu0 0
        %2399 = vmatpush1.bf16.msra.mxu0 0
        %2400 = vmatprep.subr.bf16.mxu0 0
        %2401 = vmatpush1.bf16.msra.mxu0 0
        %2402 = vmatprep.subr.bf16.mxu0 0
        %2403 = vmatpush1.bf16.msra.mxu0 0
        %2404 = vmatprep.subr.bf16.mxu0 0
        %2405 = vmatpush1.bf16.msra.mxu0 0
        %2406 = vmatprep.subr.bf16.mxu0 0
        %2407 = vmatpush1.bf16.msra.mxu0 0
        %2408 = vmatprep.mubr.bf16.mxu0 0
        %2409 = vmatmul.mubr.bf16.gmra.mrb[0].mxu0 %v2374
        %v2410 = vpop.f32.mrb[0].mxu0
        %v2411 = vadd.f32 0.0, %v2410
        %v2412 = vpop.f32.mrb[0].mxu0
        %v2413 = vpop.f32.mrb[0].mxu0
        %v2414 = vadd.f32 0.0, %v2413
        %v2415 = vpop.f32.mrb[0].mxu0
        %2416 = vdwg.mxu0
        %v2418 = vsel %vm2192, %v2284, 0
        %2420 = vmatprep.subr.bf16.mxu0 0
        %2421 = vmatpush1.bf16.msra.mxu0 %v1990
        %2422 = vmatprep.subr.bf16.mxu0 0
        %2423 = vmatpush1.bf16.msra.mxu0 0
        %2424 = vmatprep.subr.bf16.mxu0 0
        %2425 = vmatpush1.bf16.msra.mxu0 0
        %2426 = vmatprep.subr.bf16.mxu0 0
        %2427 = vmatpush1.bf16.msra.mxu0 0
        %2428 = vmatprep.subr.bf16.mxu0 0
        %2429 = vmatpush1.bf16.msra.mxu0 0
        %2430 = vmatprep.subr.bf16.mxu0 0
        %2431 = vmatpush1.bf16.msra.mxu0 0
        %2432 = vmatprep.subr.bf16.mxu0 0
        %2433 = vmatpush1.bf16.msra.mxu0 0
        %2434 = vmatprep.subr.bf16.mxu0 0
        %2435 = vmatpush1.bf16.msra.mxu0 0
        %2436 = vmatprep.subr.bf16.mxu0 0
        %2437 = vmatpush1.bf16.msra.mxu0 0
        %2438 = vmatprep.subr.bf16.mxu0 0
        %2439 = vmatpush1.bf16.msra.mxu0 0
        %2440 = vmatprep.subr.bf16.mxu0 0
        %2441 = vmatpush1.bf16.msra.mxu0 0
        %2442 = vmatprep.subr.bf16.mxu0 0
        %2443 = vmatpush1.bf16.msra.mxu0 0
        %2444 = vmatprep.subr.bf16.mxu0 0
        %2445 = vmatpush1.bf16.msra.mxu0 0
        %2446 = vmatprep.subr.bf16.mxu0 0
        %2447 = vmatpush1.bf16.msra.mxu0 0
        %2448 = vmatprep.subr.bf16.mxu0 0
        %2449 = vmatpush1.bf16.msra.mxu0 0
        %2450 = vmatprep.subr.bf16.mxu0 0
        %2451 = vmatpush1.bf16.msra.mxu0 0
        %2452 = vmatprep.mubr.bf16.mxu0 0
        %2453 = vmatmul.mubr.bf16.gmra.mrb[0].mxu0 %v2418
        %v2454 = vpop.f32.mrb[0].mxu0
        %v2455 = vadd.f32 0.0, %v2454
        %v2456 = vpop.f32.mrb[0].mxu0
        %v2457 = vpop.f32.mrb[0].mxu0
        %v2458 = vadd.f32 0.0, %v2457
        %v2459 = vpop.f32.mrb[0].mxu0
        %2460 = vdwg.mxu0
        %v2461 = vcombine.low %v2323, %v2411
        %v2462 = vcombine.high %v2323, %v2411
        %v2464 = vunpack.c.l.s4 1983009808
        %v2465 = vunpack.c.0.s8 %v2464
        %v2466 = vlaneseq
        %v2467 = vshrl.u32 %v2466, 7
        %v2468 = vsub.s32 %v2465, %v2467
        %v2469 = vrot.slane %v2461, %v2468
        %v2471 = vunpack.c.l.s4 1983009808
        %v2472 = vunpack.c.0.s8 %v2471
        %v2473 = vlaneseq
        %v2474 = vshrl.u32 %v2473, 7
        %v2475 = vsub.s32 %v2472, %v2474
        %v2476 = vrot.slane %v2462, %v2475
        %v2477 = vcombine.low %v2367, %v2455
        %v2478 = vcombine.high %v2367, %v2455
        %v2480 = vunpack.c.l.s4 1983009808
        %v2481 = vunpack.c.0.s8 %v2480
        %v2482 = vlaneseq
        %v2483 = vshrl.u32 %v2482, 7
        %v2484 = vsub.s32 %v2481, %v2483
        %v2485 = vrot.slane %v2477, %v2484
        %v2487 = vunpack.c.l.s4 1983009808
        %v2488 = vunpack.c.0.s8 %v2487
        %v2489 = vlaneseq
        %v2490 = vshrl.u32 %v2489, 7
        %v2491 = vsub.s32 %v2488, %v2490
        %v2492 = vrot.slane %v2478, %v2491
        %v2493 = vcombine.low %v2469, %v2485
        %v2494 = vcombine.high %v2469, %v2485
        %v2496 = vunpack.c.l.s4 1934713408
        %v2497 = vunpack.c.0.s8 %v2496
        %v2498 = vlaneseq
        %v2499 = vshrl.u32 %v2498, 7
        %v2500 = vsub.s32 %v2497, %v2499
        %v2501 = vrot.slane %v2493, %v2500
        %v2503 = vunpack.c.l.s4 1934713408
        %v2504 = vunpack.c.0.s8 %v2503
        %v2505 = vlaneseq
        %v2506 = vshrl.u32 %v2505, 7
        %v2507 = vsub.s32 %v2504, %v2506
        %v2508 = vrot.slane %v2494, %v2507
        %v2509 = vcombine.low %v2476, %v2492
        %v2510 = vcombine.high %v2476, %v2492
        %v2512 = vunpack.c.l.s4 1934713408
        %v2513 = vunpack.c.0.s8 %v2512
        %v2514 = vlaneseq
        %v2515 = vshrl.u32 %v2514, 7
        %v2516 = vsub.s32 %v2513, %v2515
        %v2517 = vrot.slane %v2509, %v2516
        %v2519 = vunpack.c.l.s4 1934713408
        %v2520 = vunpack.c.0.s8 %v2519
        %v2521 = vlaneseq
        %v2522 = vshrl.u32 %v2521, 7
        %v2523 = vsub.s32 %v2520, %v2522
        %v2524 = vrot.slane %v2510, %v2523
        %v2525 = vcombine.high %v2501, 0.0
        %v2526 = vcombine.high %v2508, 0.0
        %v2527 = vcombine.high %v2517, 0.0
        %v2528 = vcombine.high %v2524, 0.0
        %v2529 = vcombine.low %v2326, %v2414
        %v2530 = vcombine.high %v2326, %v2414
        %v2532 = vunpack.c.l.s4 1983009808
        %v2533 = vunpack.c.0.s8 %v2532
        %v2534 = vlaneseq
        %v2535 = vshrl.u32 %v2534, 7
        %v2536 = vsub.s32 %v2533, %v2535
        %v2537 = vrot.slane %v2529, %v2536
        %v2539 = vunpack.c.l.s4 1983009808
        %v2540 = vunpack.c.0.s8 %v2539
        %v2541 = vlaneseq
        %v2542 = vshrl.u32 %v2541, 7
        %v2543 = vsub.s32 %v2540, %v2542
        %v2544 = vrot.slane %v2530, %v2543
        %v2545 = vcombine.low %v2370, %v2458
        %v2546 = vcombine.high %v2370, %v2458
        %v2548 = vunpack.c.l.s4 1983009808
        %v2549 = vunpack.c.0.s8 %v2548
        %v2550 = vlaneseq
        %v2551 = vshrl.u32 %v2550, 7
        %v2552 = vsub.s32 %v2549, %v2551
        %v2553 = vrot.slane %v2545, %v2552
        %v2555 = vunpack.c.l.s4 1983009808
        %v2556 = vunpack.c.0.s8 %v2555
        %v2557 = vlaneseq
        %v2558 = vshrl.u32 %v2557, 7
        %v2559 = vsub.s32 %v2556, %v2558
        %v2560 = vrot.slane %v2546, %v2559
        %v2561 = vcombine.low %v2537, %v2553
        %v2562 = vcombine.high %v2537, %v2553
        %v2564 = vunpack.c.l.s4 1934713408
        %v2565 = vunpack.c.0.s8 %v2564
        %v2566 = vlaneseq
        %v2567 = vshrl.u32 %v2566, 7
        %v2568 = vsub.s32 %v2565, %v2567
        %v2569 = vrot.slane %v2561, %v2568
        %v2571 = vunpack.c.l.s4 1934713408
        %v2572 = vunpack.c.0.s8 %v2571
        %v2573 = vlaneseq
        %v2574 = vshrl.u32 %v2573, 7
        %v2575 = vsub.s32 %v2572, %v2574
        %v2576 = vrot.slane %v2562, %v2575
        %v2577 = vcombine.low %v2544, %v2560
        %v2578 = vcombine.high %v2544, %v2560
        %v2580 = vunpack.c.l.s4 1934713408
        %v2581 = vunpack.c.0.s8 %v2580
        %v2582 = vlaneseq
        %v2583 = vshrl.u32 %v2582, 7
        %v2584 = vsub.s32 %v2581, %v2583
        %v2585 = vrot.slane %v2577, %v2584
        %v2587 = vunpack.c.l.s4 1934713408
        %v2588 = vunpack.c.0.s8 %v2587
        %v2589 = vlaneseq
        %v2590 = vshrl.u32 %v2589, 7
        %v2591 = vsub.s32 %v2588, %v2590
        %v2592 = vrot.slane %v2578, %v2591
        %v2593 = vcombine.high %v2569, 0.0
        %v2594 = vcombine.high %v2576, 0.0
        %v2595 = vcombine.high %v2585, 0.0
        %v2596 = vcombine.high %v2592, 0.0
        %v2597 = vcombine.low %v2501, %v2508
        %v2599 = vunpack.c.l.s4 1983009808
        %v2600 = vunpack.c.0.s8 %v2599
        %v2601 = vlaneseq
        %v2602 = vshrl.u32 %v2601, 7
        %v2603 = vsub.s32 %v2600, %v2602
        %v2604 = vrot.slane %v2597, %v2603
        %v2605 = vcombine.low %v2525, %v2526
        %v2607 = vunpack.c.l.s4 1983009808
        %v2608 = vunpack.c.0.s8 %v2607
        %v2609 = vlaneseq
        %v2610 = vshrl.u32 %v2609, 7
        %v2611 = vsub.s32 %v2608, %v2610
        %v2612 = vrot.slane %v2605, %v2611
        %v2613 = vcombine.low %v2517, %v2524
        %v2615 = vunpack.c.l.s4 1983009808
        %v2616 = vunpack.c.0.s8 %v2615
        %v2617 = vlaneseq
        %v2618 = vshrl.u32 %v2617, 7
        %v2619 = vsub.s32 %v2616, %v2618
        %v2620 = vrot.slane %v2613, %v2619
        %v2621 = vcombine.low %v2527, %v2528
        %v2623 = vunpack.c.l.s4 1983009808
        %v2624 = vunpack.c.0.s8 %v2623
        %v2625 = vlaneseq
        %v2626 = vshrl.u32 %v2625, 7
        %v2627 = vsub.s32 %v2624, %v2626
        %v2628 = vrot.slane %v2621, %v2627
        %v2629 = vcombine.low %v2604, %v2612
        %v2630 = vcombine.high %v2604, %v2612
        %v2632 = vunpack.c.l.s4 1934713408
        %v2633 = vunpack.c.0.s8 %v2632
        %v2634 = vlaneseq
        %v2635 = vshrl.u32 %v2634, 7
        %v2636 = vsub.s32 %v2633, %v2635
        %v2637 = vrot.slane %v2629, %v2636
        %v2639 = vunpack.c.l.s4 1934713408
        %v2640 = vunpack.c.0.s8 %v2639
        %v2641 = vlaneseq
        %v2642 = vshrl.u32 %v2641, 7
        %v2643 = vsub.s32 %v2640, %v2642
        %v2644 = vrot.slane %v2630, %v2643
        %v2645 = vcombine.low %v2620, %v2628
        %v2646 = vcombine.high %v2620, %v2628
        %v2648 = vunpack.c.l.s4 1934713408
        %v2649 = vunpack.c.0.s8 %v2648
        %v2650 = vlaneseq
        %v2651 = vshrl.u32 %v2650, 7
        %v2652 = vsub.s32 %v2649, %v2651
        %v2653 = vrot.slane %v2645, %v2652
        %v2655 = vunpack.c.l.s4 1934713408
        %v2656 = vunpack.c.0.s8 %v2655
        %v2657 = vlaneseq
        %v2658 = vshrl.u32 %v2657, 7
        %v2659 = vsub.s32 %v2656, %v2658
        %v2660 = vrot.slane %v2646, %v2659
        %v2661 = vcombine.low %v2637, %v2653
        %v2662 = vcombine.high %v2637, %v2653
        %v2663 = vcombine.low %v2644, %v2660
        %v2664 = vcombine.high %v2644, %v2660
        %v2665 = vcombine.low %v2569, %v2576
        %v2667 = vunpack.c.l.s4 1983009808
        %v2668 = vunpack.c.0.s8 %v2667
        %v2669 = vlaneseq
        %v2670 = vshrl.u32 %v2669, 7
        %v2671 = vsub.s32 %v2668, %v2670
        %v2672 = vrot.slane %v2665, %v2671
        %v2673 = vcombine.low %v2593, %v2594
        %v2675 = vunpack.c.l.s4 1983009808
        %v2676 = vunpack.c.0.s8 %v2675
        %v2677 = vlaneseq
        %v2678 = vshrl.u32 %v2677, 7
        %v2679 = vsub.s32 %v2676, %v2678
        %v2680 = vrot.slane %v2673, %v2679
        %v2681 = vcombine.low %v2585, %v2592
        %v2683 = vunpack.c.l.s4 1983009808
        %v2684 = vunpack.c.0.s8 %v2683
        %v2685 = vlaneseq
        %v2686 = vshrl.u32 %v2685, 7
        %v2687 = vsub.s32 %v2684, %v2686
        %v2688 = vrot.slane %v2681, %v2687
        %v2689 = vcombine.low %v2595, %v2596
        %v2691 = vunpack.c.l.s4 1983009808
        %v2692 = vunpack.c.0.s8 %v2691
        %v2693 = vlaneseq
        %v2694 = vshrl.u32 %v2693, 7
        %v2695 = vsub.s32 %v2692, %v2694
        %v2696 = vrot.slane %v2689, %v2695
        %v2697 = vcombine.low %v2672, %v2680
        %v2698 = vcombine.high %v2672, %v2680
        %v2700 = vunpack.c.l.s4 1934713408
        %v2701 = vunpack.c.0.s8 %v2700
        %v2702 = vlaneseq
        %v2703 = vshrl.u32 %v2702, 7
        %v2704 = vsub.s32 %v2701, %v2703
        %v2705 = vrot.slane %v2697, %v2704
        %v2707 = vunpack.c.l.s4 1934713408
        %v2708 = vunpack.c.0.s8 %v2707
        %v2709 = vlaneseq
        %v2710 = vshrl.u32 %v2709, 7
        %v2711 = vsub.s32 %v2708, %v2710
        %v2712 = vrot.slane %v2698, %v2711
        %v2713 = vcombine.low %v2688, %v2696
        %v2714 = vcombine.high %v2688, %v2696
        %v2716 = vunpack.c.l.s4 1934713408
        %v2717 = vunpack.c.0.s8 %v2716
        %v2718 = vlaneseq
        %v2719 = vshrl.u32 %v2718, 7
        %v2720 = vsub.s32 %v2717, %v2719
        %v2721 = vrot.slane %v2713, %v2720
        %v2723 = vunpack.c.l.s4 1934713408
        %v2724 = vunpack.c.0.s8 %v2723
        %v2725 = vlaneseq
        %v2726 = vshrl.u32 %v2725, 7
        %v2727 = vsub.s32 %v2724, %v2726
        %v2728 = vrot.slane %v2714, %v2727
        %v2729 = vcombine.low %v2705, %v2721
        %v2730 = vcombine.high %v2705, %v2721
        %v2731 = vcombine.low %v2712, %v2728
        %v2732 = vcombine.high %v2712, %v2728
        %2735 = vrot.lane.b32.xlu0 %v2662, 32
        %v2736 = vpop.permute.xlu0 %2735
        %2737 = vrot.lane.b32.xlu0 %v2730, 32
        %v2738 = vpop.permute.xlu0 %2737
        %2743 = vrot.lane.b32.xlu0 %v2663, 64
        %v2744 = vpop.permute.xlu0 %2743
        %2745 = vrot.lane.b32.xlu0 %v2731, 64
        %v2746 = vpop.permute.xlu0 %2745
        %2751 = vrot.lane.b32.xlu0 %v2664, 96
        %v2752 = vpop.permute.xlu0 %2751
        %2753 = vrot.lane.b32.xlu0 %v2732, 96
        %v2754 = vpop.permute.xlu0 %2753
        %v2757 = vsel %vm1991, %v2661, %v2736
        %v2758 = vsel %vm1991, %v2729, %v2738
        %vm2759 = vcmask 523264
        %v2760 = vsel %vm2759, %v2757, %v2744
        %v2761 = vsel %vm2759, %v2758, %v2746
        %vm2762 = vcmask 785408
        %v2763 = vsel %vm2762, %v2760, %v2752
        %v2764 = vsel %vm2762, %v2761, %v2754
        %v2765 = vpack.c.bf16 %v2764, %v2763
        %v2766 = vld [vmem:[%s651] sm:$0xf]
        %v2767 = vld [vmem:[%s651 + $0x4] sm:$0xf]
        %v2768 = vld [vmem:[%s651 + $0x8] sm:$0xf]
        %v2769 = vld [vmem:[%s651 + $0xc] sm:$0xf]
        %v2770 = vld [vmem:[%s651 + $0x10] sm:$0xf]
        %v2771 = vld [vmem:[%s651 + $0x14] sm:$0xf]
        %v2772 = vld [vmem:[%s651 + $0x18] sm:$0xf]
        %v2773 = vld [vmem:[%s651 + $0x1c] sm:$0xf]
        %v2774 = vld [vmem:[%s651 + $0x20] sm:$0xf]
        %v2775 = vld [vmem:[%s651 + $0x24] sm:$0xf]
        %v2776 = vld [vmem:[%s651 + $0x28] sm:$0xf]
        %v2777 = vld [vmem:[%s651 + $0x2c] sm:$0xf]
        %v2778 = vld [vmem:[%s651 + $0x30] sm:$0xf]
        %v2779 = vld [vmem:[%s651 + $0x34] sm:$0xf]
        %v2780 = vld [vmem:[%s651 + $0x38] sm:$0xf]
        %v2781 = vld [vmem:[%s651 + $0x3c] sm:$0xf]
        %v2798 = vunpack.c.l.b16 %v2766
        %v2799 = vunpack.c.l.b16 %v2767
        %v2800 = vunpack.c.l.b16 %v2768
        %v2801 = vunpack.c.l.b16 %v2769
        %v2802 = vunpack.c.l.b16 %v2770
        %v2803 = vunpack.c.l.b16 %v2771
        %v2804 = vunpack.c.l.b16 %v2772
        %v2805 = vunpack.c.l.b16 %v2773
        %v2806 = vunpack.c.l.b16 %v2774
        %v2807 = vunpack.c.l.b16 %v2775
        %v2808 = vunpack.c.l.b16 %v2776
        %v2809 = vunpack.c.l.b16 %v2777
        %v2810 = vunpack.c.l.b16 %v2778
        %v2811 = vunpack.c.l.b16 %v2779
        %v2812 = vunpack.c.l.b16 %v2780
        %v2813 = vunpack.c.l.b16 %v2781
        %v2814 = vpack.c.b16 %v2799, %v2798
        %v2815 = vpack.c.b16 %v2801, %v2800
        %v2816 = vpack.c.b16 %v2803, %v2802
        %v2817 = vpack.c.b16 %v2805, %v2804
        %v2818 = vpack.c.b16 %v2807, %v2806
        %v2819 = vpack.c.b16 %v2809, %v2808
        %v2820 = vpack.c.b16 %v2811, %v2810
        %v2821 = vpack.c.b16 %v2813, %v2812
        %2830 = vmatprep.subr.bf16.mxu0 0
        %2831 = vmatpush1.bf16.msra.mxu0 %v2814
        %2832 = vmatprep.subr.bf16.mxu0 0
        %2833 = vmatpush1.bf16.msra.mxu0 %v2815
        %2834 = vmatprep.subr.bf16.mxu0 0
        %2835 = vmatpush1.bf16.msra.mxu0 %v2816
        %2836 = vmatprep.subr.bf16.mxu0 0
        %2837 = vmatpush1.bf16.msra.mxu0 %v2817
        %2838 = vmatprep.subr.bf16.mxu0 0
        %2839 = vmatpush1.bf16.msra.mxu0 %v2818
        %2840 = vmatprep.subr.bf16.mxu0 0
        %2841 = vmatpush1.bf16.msra.mxu0 %v2819
        %2842 = vmatprep.subr.bf16.mxu0 0
        %2843 = vmatpush1.bf16.msra.mxu0 %v2820
        %2844 = vmatprep.subr.bf16.mxu0 0
        %2845 = vmatpush1.bf16.msra.mxu0 %v2821
        %2846 = vmatprep.subr.bf16.mxu0 0
        %2847 = vmatpush1.bf16.msra.mxu0 0
        %2848 = vmatprep.subr.bf16.mxu0 0
        %2849 = vmatpush1.bf16.msra.mxu0 0
        %2850 = vmatprep.subr.bf16.mxu0 0
        %2851 = vmatpush1.bf16.msra.mxu0 0
        %2852 = vmatprep.subr.bf16.mxu0 0
        %2853 = vmatpush1.bf16.msra.mxu0 0
        %2854 = vmatprep.subr.bf16.mxu0 0
        %2855 = vmatpush1.bf16.msra.mxu0 0
        %2856 = vmatprep.subr.bf16.mxu0 0
        %2857 = vmatpush1.bf16.msra.mxu0 0
        %2858 = vmatprep.subr.bf16.mxu0 0
        %2859 = vmatpush1.bf16.msra.mxu0 0
        %2860 = vmatprep.subr.bf16.mxu0 0
        %2861 = vmatpush1.bf16.msra.mxu0 0
        %2862 = vmatprep.mubr.bf16.mxu0 0
        %2863 = vmatmul.mubr.bf16.gmra.mrb[0].mxu0 %v2765
        %v2864 = vpop.f32.mrb[0].mxu0
        %v2865 = vadd.f32 0.0, %v2864
        %v2866 = vpop.f32.mrb[0].mxu0
        %v2867 = vpop.f32.mrb[0].mxu0
        %v2868 = vadd.f32 0.0, %v2867
        %v2869 = vpop.f32.mrb[0].mxu0
        %2870 = vdwg.mxu0
        %v2871 = vadd.f32 %v789, %v2865
        %v2872 = vadd.f32 %v790, %v2868
        %v2873 = vld [vmem:[%s766] sm:$0x1]
        %v2875 = vlaneseq
        %v2876 = vshrl.u32 %v2875, 7
        %v2877 = vsub.s32 0, %v2876
        %v2878 = vrot.slane %v2873, %v2877
        %v2880 = vadd.f32 %v2871, %v2878
        %v2881 = vadd.f32 %v2872, %v2878
        %2882 = vadd.xlane.f32.xlu0 %v2880
        %v2883 = vpop.xlane.xlu0 %2882
        %2884 = vadd.xlane.f32.xlu0 %v2881
        %v2885 = vpop.xlane.xlu0 %2884
        %v2886 = vmul.f32 %v2883, %v802
        %v2887 = vmul.f32 %v2885, %v802
        %v2888 = vsub.f32 %v2880, %v2886
        %v2889 = vsub.f32 %v2881, %v2887
        %v2890 = vmul.f32 %v2888, %v2888
        %v2891 = vmul.f32 %v2889, %v2889
        %2892 = vadd.xlane.f32.xlu0 %v2890
        %v2893 = vpop.xlane.xlu0 %2892
        %2894 = vadd.xlane.f32.xlu0 %v2891
        %v2895 = vpop.xlane.xlu0 %2894
        %v2896 = vmul.f32 %v2893, %v802
        %v2897 = vmul.f32 %v2895, %v802
        %v2898 = vadd.f32 %v2896, 1e-05
        %v2899 = vadd.f32 %v2897, 1e-05
        %v2900 = vrsqrt.pop %v2898
        %v2901 = vrsqrt.pop %v2899
        %v2902 = vmul.f32 %v2888, %v2900
        %v2903 = vmul.f32 %v2889, %v2901
        %v2904 = vld [vmem:[%s769] sm:$0x1]
        %v2906 = vlaneseq
        %v2907 = vshrl.u32 %v2906, 7
        %v2908 = vsub.s32 0, %v2907
        %v2909 = vrot.slane %v2904, %v2908
        %v2911 = vmul.f32 %v2902, %v2909
        %v2912 = vmul.f32 %v2903, %v2909
        %v2913 = vld [vmem:[%s772] sm:$0x1]
        %v2915 = vlaneseq
        %v2916 = vshrl.u32 %v2915, 7
        %v2917 = vsub.s32 0, %v2916
        %v2918 = vrot.slane %v2913, %v2917
        %v2920 = vadd.f32 %v2911, %v2918
        %v2921 = vadd.f32 %v2912, %v2918
        %v2922 = vpack.c.bf16 %v2921, %v2920
        %v2923 = vld [vmem:[%s660] sm:$0xff]
        %v2924 = vld [vmem:[%s660 + $0x8] sm:$0xff]
        %v2925 = vld [vmem:[%s660 + $0x10] sm:$0xff]
        %v2926 = vld [vmem:[%s660 + $0x18] sm:$0xff]
        %v2927 = vld [vmem:[%s660 + $0x20] sm:$0xff]
        %v2928 = vld [vmem:[%s660 + $0x28] sm:$0xff]
        %v2929 = vld [vmem:[%s660 + $0x30] sm:$0xff]
        %v2930 = vld [vmem:[%s660 + $0x38] sm:$0xff]
        %v2931 = vld [vmem:[%s660 + $0x40] sm:$0xff]
        %v2932 = vld [vmem:[%s660 + $0x48] sm:$0xff]
        %v2933 = vld [vmem:[%s660 + $0x50] sm:$0xff]
        %v2934 = vld [vmem:[%s660 + $0x58] sm:$0xff]
        %v2935 = vld [vmem:[%s660 + $0x60] sm:$0xff]
        %v2936 = vld [vmem:[%s660 + $0x68] sm:$0xff]
        %v2937 = vld [vmem:[%s660 + $0x70] sm:$0xff]
        %v2938 = vld [vmem:[%s660 + $0x78] sm:$0xff]
        %v2939 = vld [vmem:[%s660 + $0x80] sm:$0xff]
        %v2940 = vld [vmem:[%s660 + $0x88] sm:$0xff]
        %v2941 = vld [vmem:[%s660 + $0x90] sm:$0xff]
        %v2942 = vld [vmem:[%s660 + $0x98] sm:$0xff]
        %v2943 = vld [vmem:[%s660 + $0xa0] sm:$0xff]
        %v2944 = vld [vmem:[%s660 + $0xa8] sm:$0xff]
        %v2945 = vld [vmem:[%s660 + $0xb0] sm:$0xff]
        %v2946 = vld [vmem:[%s660 + $0xb8] sm:$0xff]
        %v2947 = vld [vmem:[%s660 + $0xc0] sm:$0xff]
        %v2948 = vld [vmem:[%s660 + $0xc8] sm:$0xff]
        %v2949 = vld [vmem:[%s660 + $0xd0] sm:$0xff]
        %v2950 = vld [vmem:[%s660 + $0xd8] sm:$0xff]
        %v2951 = vld [vmem:[%s660 + $0xe0] sm:$0xff]
        %v2952 = vld [vmem:[%s660 + $0xe8] sm:$0xff]
        %v2953 = vld [vmem:[%s660 + $0xf0] sm:$0xff]
        %v2954 = vld [vmem:[%s660 + $0xf8] sm:$0xff]
        %v2955 = vld [vmem:[%s776] sm:$0xf]
        %v2957 = vlaneseq
        %v2958 = vshrl.u32 %v2957, 7
        %v2959 = vsub.s32 0, %v2958
        %v2960 = vrot.slane %v2955, %v2959
        %v2961 = vlaneseq
        %v2962 = vshrl.u32 %v2961, 7
        %v2963 = vsub.s32 1, %v2962
        %v2964 = vrot.slane %v2955, %v2963
        %v2965 = vlaneseq
        %v2966 = vshrl.u32 %v2965, 7
        %v2967 = vsub.s32 2, %v2966
        %v2968 = vrot.slane %v2955, %v2967
        %v2969 = vlaneseq
        %v2970 = vshrl.u32 %v2969, 7
        %v2971 = vsub.s32 3, %v2970
        %v2972 = vrot.slane %v2955, %v2971
        %v3009 = vunpack.c.l.b16 %v2923
        %v3010 = vunpack.c.h.b16 %v2923
        %v3011 = vunpack.c.l.b16 %v2924
        %v3012 = vunpack.c.h.b16 %v2924
        %v3013 = vunpack.c.l.b16 %v2925
        %v3014 = vunpack.c.h.b16 %v2925
        %v3015 = vunpack.c.l.b16 %v2926
        %v3016 = vunpack.c.h.b16 %v2926
        %v3017 = vunpack.c.l.b16 %v2927
        %v3018 = vunpack.c.h.b16 %v2927
        %v3019 = vunpack.c.l.b16 %v2928
        %v3020 = vunpack.c.h.b16 %v2928
        %v3021 = vunpack.c.l.b16 %v2929
        %v3022 = vunpack.c.h.b16 %v2929
        %v3023 = vunpack.c.l.b16 %v2930
        %v3024 = vunpack.c.h.b16 %v2930
        %v3025 = vunpack.c.l.b16 %v2931
        %v3026 = vunpack.c.h.b16 %v2931
        %v3027 = vunpack.c.l.b16 %v2932
        %v3028 = vunpack.c.h.b16 %v2932
        %v3029 = vunpack.c.l.b16 %v2933
        %v3030 = vunpack.c.h.b16 %v2933
        %v3031 = vunpack.c.l.b16 %v2934
        %v3032 = vunpack.c.h.b16 %v2934
        %v3033 = vunpack.c.l.b16 %v2935
        %v3034 = vunpack.c.h.b16 %v2935
        %v3035 = vunpack.c.l.b16 %v2936
        %v3036 = vunpack.c.h.b16 %v2936
        %v3037 = vunpack.c.l.b16 %v2937
        %v3038 = vunpack.c.h.b16 %v2937
        %v3039 = vunpack.c.l.b16 %v2938
        %v3040 = vunpack.c.h.b16 %v2938
        %v3041 = vunpack.c.l.b16 %v2939
        %v3042 = vunpack.c.h.b16 %v2939
        %v3043 = vunpack.c.l.b16 %v2940
        %v3044 = vunpack.c.h.b16 %v2940
        %v3045 = vunpack.c.l.b16 %v2941
        %v3046 = vunpack.c.h.b16 %v2941
        %v3047 = vunpack.c.l.b16 %v2942
        %v3048 = vunpack.c.h.b16 %v2942
        %v3049 = vunpack.c.l.b16 %v2943
        %v3050 = vunpack.c.h.b16 %v2943
        %v3051 = vunpack.c.l.b16 %v2944
        %v3052 = vunpack.c.h.b16 %v2944
        %v3053 = vunpack.c.l.b16 %v2945
        %v3054 = vunpack.c.h.b16 %v2945
        %v3055 = vunpack.c.l.b16 %v2946
        %v3056 = vunpack.c.h.b16 %v2946
        %v3057 = vunpack.c.l.b16 %v2947
        %v3058 = vunpack.c.h.b16 %v2947
        %v3059 = vunpack.c.l.b16 %v2948
        %v3060 = vunpack.c.h.b16 %v2948
        %v3061 = vunpack.c.l.b16 %v2949
        %v3062 = vunpack.c.h.b16 %v2949
        %v3063 = vunpack.c.l.b16 %v2950
        %v3064 = vunpack.c.h.b16 %v2950
        %v3065 = vunpack.c.l.b16 %v2951
        %v3066 = vunpack.c.h.b16 %v2951
        %v3067 = vunpack.c.l.b16 %v2952
        %v3068 = vunpack.c.h.b16 %v2952
        %v3069 = vunpack.c.l.b16 %v2953
        %v3070 = vunpack.c.h.b16 %v2953
        %v3071 = vunpack.c.l.b16 %v2954
        %v3072 = vunpack.c.h.b16 %v2954
        %v3073 = vpack.c.b16 %v3013, %v3009
        %v3074 = vpack.c.b16 %v3014, %v3010
        %v3075 = vpack.c.b16 %v3015, %v3011
        %v3076 = vpack.c.b16 %v3016, %v3012
        %v3077 = vpack.c.b16 %v3021, %v3017
        %v3078 = vpack.c.b16 %v3022, %v3018
        %v3079 = vpack.c.b16 %v3023, %v3019
        %v3080 = vpack.c.b16 %v3024, %v3020
        %v3081 = vpack.c.b16 %v3029, %v3025
        %v3082 = vpack.c.b16 %v3030, %v3026
        %v3083 = vpack.c.b16 %v3031, %v3027
        %v3084 = vpack.c.b16 %v3032, %v3028
        %v3085 = vpack.c.b16 %v3037, %v3033
        %v3086 = vpack.c.b16 %v3038, %v3034
        %v3087 = vpack.c.b16 %v3039, %v3035
        %v3088 = vpack.c.b16 %v3040, %v3036
        %v3089 = vpack.c.b16 %v3045, %v3041
        %v3090 = vpack.c.b16 %v3046, %v3042
        %v3091 = vpack.c.b16 %v3047, %v3043
        %v3092 = vpack.c.b16 %v3048, %v3044
        %v3093 = vpack.c.b16 %v3053, %v3049
        %v3094 = vpack.c.b16 %v3054, %v3050
        %v3095 = vpack.c.b16 %v3055, %v3051
        %v3096 = vpack.c.b16 %v3056, %v3052
        %v3097 = vpack.c.b16 %v3061, %v3057
        %v3098 = vpack.c.b16 %v3062, %v3058
        %v3099 = vpack.c.b16 %v3063, %v3059
        %v3100 = vpack.c.b16 %v3064, %v3060
        %v3101 = vpack.c.b16 %v3069, %v3065
        %v3102 = vpack.c.b16 %v3070, %v3066
        %v3103 = vpack.c.b16 %v3071, %v3067
        %v3104 = vpack.c.b16 %v3072, %v3068
        %3137 = vmatprep.subr.bf16.mxu0 %v3074
        %3138 = vmatpush1.bf16.msra.mxu0 %v3073
        %3139 = vmatprep.subr.bf16.mxu0 %v3078
        %3140 = vmatpush1.bf16.msra.mxu0 %v3077
        %3141 = vmatprep.subr.bf16.mxu0 %v3082
        %3142 = vmatpush1.bf16.msra.mxu0 %v3081
        %3143 = vmatprep.subr.bf16.mxu0 %v3086
        %3144 = vmatpush1.bf16.msra.mxu0 %v3085
        %3145 = vmatprep.subr.bf16.mxu0 %v3090
        %3146 = vmatpush1.bf16.msra.mxu0 %v3089
        %3147 = vmatprep.subr.bf16.mxu0 %v3094
        %3148 = vmatpush1.bf16.msra.mxu0 %v3093
        %3149 = vmatprep.subr.bf16.mxu0 %v3098
        %3150 = vmatpush1.bf16.msra.mxu0 %v3097
        %3151 = vmatprep.subr.bf16.mxu0 %v3102
        %3152 = vmatpush1.bf16.msra.mxu0 %v3101
        %3153 = vmatprep.subr.bf16.mxu0 0
        %3154 = vmatpush1.bf16.msra.mxu0 0
        %3155 = vmatprep.subr.bf16.mxu0 0
        %3156 = vmatpush1.bf16.msra.mxu0 0
        %3157 = vmatprep.subr.bf16.mxu0 0
        %3158 = vmatpush1.bf16.msra.mxu0 0
        %3159 = vmatprep.subr.bf16.mxu0 0
        %3160 = vmatpush1.bf16.msra.mxu0 0
        %3161 = vmatprep.subr.bf16.mxu0 0
        %3162 = vmatpush1.bf16.msra.mxu0 0
        %3163 = vmatprep.subr.bf16.mxu0 0
        %3164 = vmatpush1.bf16.msra.mxu0 0
        %3165 = vmatprep.subr.bf16.mxu0 0
        %3166 = vmatpush1.bf16.msra.mxu0 0
        %3167 = vmatprep.subr.bf16.mxu0 0
        %3168 = vmatpush1.bf16.msra.mxu0 0
        %3169 = vmatprep.mubr.bf16.mxu0 0
        %3170 = vmatmul.mubr.bf16.gmra.mrb[0].mxu0 %v2922
        %v3171 = vpop.f32.mrb[0].mxu0
        %v3172 = vadd.f32 %v2960, %v3171
        %v3173 = vpop.f32.mrb[0].mxu0
        %v3174 = vadd.f32 %v2964, %v3173
        %v3175 = vpop.f32.mrb[0].mxu0
        %v3176 = vadd.f32 %v2960, %v3175
        %v3177 = vpop.f32.mrb[0].mxu0
        %v3178 = vadd.f32 %v2964, %v3177
        %3179 = vdwg.mxu0
        %3180 = vmatprep.subr.bf16.mxu0 %v3076
        %3181 = vmatpush1.bf16.msra.mxu0 %v3075
        %3182 = vmatprep.subr.bf16.mxu0 %v3080
        %3183 = vmatpush1.bf16.msra.mxu0 %v3079
        %3184 = vmatprep.subr.bf16.mxu0 %v3084
        %3185 = vmatpush1.bf16.msra.mxu0 %v3083
        %3186 = vmatprep.subr.bf16.mxu0 %v3088
        %3187 = vmatpush1.bf16.msra.mxu0 %v3087
        %3188 = vmatprep.subr.bf16.mxu0 %v3092
        %3189 = vmatpush1.bf16.msra.mxu0 %v3091
        %3190 = vmatprep.subr.bf16.mxu0 %v3096
        %3191 = vmatpush1.bf16.msra.mxu0 %v3095
        %3192 = vmatprep.subr.bf16.mxu0 %v3100
        %3193 = vmatpush1.bf16.msra.mxu0 %v3099
        %3194 = vmatprep.subr.bf16.mxu0 %v3104
        %3195 = vmatpush1.bf16.msra.mxu0 %v3103
        %3196 = vmatprep.subr.bf16.mxu0 0
        %3197 = vmatpush1.bf16.msra.mxu0 0
        %3198 = vmatprep.subr.bf16.mxu0 0
        %3199 = vmatpush1.bf16.msra.mxu0 0
        %3200 = vmatprep.subr.bf16.mxu0 0
        %3201 = vmatpush1.bf16.msra.mxu0 0
        %3202 = vmatprep.subr.bf16.mxu0 0
        %3203 = vmatpush1.bf16.msra.mxu0 0
        %3204 = vmatprep.subr.bf16.mxu0 0
        %3205 = vmatpush1.bf16.msra.mxu0 0
        %3206 = vmatprep.subr.bf16.mxu0 0
        %3207 = vmatpush1.bf16.msra.mxu0 0
        %3208 = vmatprep.subr.bf16.mxu0 0
        %3209 = vmatpush1.bf16.msra.mxu0 0
        %3210 = vmatprep.subr.bf16.mxu0 0
        %3211 = vmatpush1.bf16.msra.mxu0 0
        %3212 = vmatprep.mubr.bf16.mxu0 0
        %3213 = vmatmul.mubr.bf16.gmra.mrb[0].mxu0 %v2922
        %v3214 = vpop.f32.mrb[0].mxu0
        %v3215 = vadd.f32 %v2968, %v3214
        %v3216 = vpop.f32.mrb[0].mxu0
        %v3217 = vadd.f32 %v2972, %v3216
        %v3218 = vpop.f32.mrb[0].mxu0
        %v3219 = vadd.f32 %v2968, %v3218
        %v3220 = vpop.f32.mrb[0].mxu0
        %v3221 = vadd.f32 %v2972, %v3220
        %3222 = vdwg.mxu0
        %v3223 = vmax.f32 %v3172, 0.0
        %v3224 = vmax.f32 %v3174, 0.0
        %v3225 = vmax.f32 %v3215, 0.0
        %v3226 = vmax.f32 %v3217, 0.0
        %v3227 = vmax.f32 %v3176, 0.0
        %v3228 = vmax.f32 %v3178, 0.0
        %v3229 = vmax.f32 %v3219, 0.0
        %v3230 = vmax.f32 %v3221, 0.0
        %v3231 = vpack.c.bf16 %v3227, %v3223
        %v3232 = vpack.c.bf16 %v3228, %v3224
        %v3233 = vpack.c.bf16 %v3229, %v3225
        %v3234 = vpack.c.bf16 %v3230, %v3226
        %v3235 = vld [vmem:[%s669] sm:$0xf]
        %v3236 = vld [vmem:[%s669 + $0x4] sm:$0xf]
        %v3237 = vld [vmem:[%s669 + $0x8] sm:$0xf]
        %v3238 = vld [vmem:[%s669 + $0xc] sm:$0xf]
        %v3239 = vld [vmem:[%s669 + $0x10] sm:$0xf]
        %v3240 = vld [vmem:[%s669 + $0x14] sm:$0xf]
        %v3241 = vld [vmem:[%s669 + $0x18] sm:$0xf]
        %v3242 = vld [vmem:[%s669 + $0x1c] sm:$0xf]
        %v3243 = vld [vmem:[%s669 + $0x20] sm:$0xf]
        %v3244 = vld [vmem:[%s669 + $0x24] sm:$0xf]
        %v3245 = vld [vmem:[%s669 + $0x28] sm:$0xf]
        %v3246 = vld [vmem:[%s669 + $0x2c] sm:$0xf]
        %v3247 = vld [vmem:[%s669 + $0x30] sm:$0xf]
        %v3248 = vld [vmem:[%s669 + $0x34] sm:$0xf]
        %v3249 = vld [vmem:[%s669 + $0x38] sm:$0xf]
        %v3250 = vld [vmem:[%s669 + $0x3c] sm:$0xf]
        %v3251 = vld [vmem:[%s669 + $0x40] sm:$0xf]
        %v3252 = vld [vmem:[%s669 + $0x44] sm:$0xf]
        %v3253 = vld [vmem:[%s669 + $0x48] sm:$0xf]
        %v3254 = vld [vmem:[%s669 + $0x4c] sm:$0xf]
        %v3255 = vld [vmem:[%s669 + $0x50] sm:$0xf]
        %v3256 = vld [vmem:[%s669 + $0x54] sm:$0xf]
        %v3257 = vld [vmem:[%s669 + $0x58] sm:$0xf]
        %v3258 = vld [vmem:[%s669 + $0x5c] sm:$0xf]
        %v3259 = vld [vmem:[%s669 + $0x60] sm:$0xf]
        %v3260 = vld [vmem:[%s669 + $0x64] sm:$0xf]
        %v3261 = vld [vmem:[%s669 + $0x68] sm:$0xf]
        %v3262 = vld [vmem:[%s669 + $0x6c] sm:$0xf]
        %v3263 = vld [vmem:[%s669 + $0x70] sm:$0xf]
        %v3264 = vld [vmem:[%s669 + $0x74] sm:$0xf]
        %v3265 = vld [vmem:[%s669 + $0x78] sm:$0xf]
        %v3266 = vld [vmem:[%s669 + $0x7c] sm:$0xf]
        %v3267 = vld [vmem:[%s669 + $0x80] sm:$0xf]
        %v3268 = vld [vmem:[%s669 + $0x84] sm:$0xf]
        %v3269 = vld [vmem:[%s669 + $0x88] sm:$0xf]
        %v3270 = vld [vmem:[%s669 + $0x8c] sm:$0xf]
        %v3271 = vld [vmem:[%s669 + $0x90] sm:$0xf]
        %v3272 = vld [vmem:[%s669 + $0x94] sm:$0xf]
        %v3273 = vld [vmem:[%s669 + $0x98] sm:$0xf]
        %v3274 = vld [vmem:[%s669 + $0x9c] sm:$0xf]
        %v3275 = vld [vmem:[%s669 + $0xa0] sm:$0xf]
        %v3276 = vld [vmem:[%s669 + $0xa4] sm:$0xf]
        %v3277 = vld [vmem:[%s669 + $0xa8] sm:$0xf]
        %v3278 = vld [vmem:[%s669 + $0xac] sm:$0xf]
        %v3279 = vld [vmem:[%s669 + $0xb0] sm:$0xf]
        %v3280 = vld [vmem:[%s669 + $0xb4] sm:$0xf]
        %v3281 = vld [vmem:[%s669 + $0xb8] sm:$0xf]
        %v3282 = vld [vmem:[%s669 + $0xbc] sm:$0xf]
        %v3283 = vld [vmem:[%s669 + $0xc0] sm:$0xf]
        %v3284 = vld [vmem:[%s669 + $0xc4] sm:$0xf]
        %v3285 = vld [vmem:[%s669 + $0xc8] sm:$0xf]
        %v3286 = vld [vmem:[%s669 + $0xcc] sm:$0xf]
        %v3287 = vld [vmem:[%s669 + $0xd0] sm:$0xf]
        %v3288 = vld [vmem:[%s669 + $0xd4] sm:$0xf]
        %v3289 = vld [vmem:[%s669 + $0xd8] sm:$0xf]
        %v3290 = vld [vmem:[%s669 + $0xdc] sm:$0xf]
        %v3291 = vld [vmem:[%s669 + $0xe0] sm:$0xf]
        %v3292 = vld [vmem:[%s669 + $0xe4] sm:$0xf]
        %v3293 = vld [vmem:[%s669 + $0xe8] sm:$0xf]
        %v3294 = vld [vmem:[%s669 + $0xec] sm:$0xf]
        %v3295 = vld [vmem:[%s669 + $0xf0] sm:$0xf]
        %v3296 = vld [vmem:[%s669 + $0xf4] sm:$0xf]
        %v3297 = vld [vmem:[%s669 + $0xf8] sm:$0xf]
        %v3298 = vld [vmem:[%s669 + $0xfc] sm:$0xf]
        %v3363 = vunpack.c.l.b16 %v3235
        %v3364 = vunpack.c.l.b16 %v3236
        %v3365 = vunpack.c.l.b16 %v3237
        %v3366 = vunpack.c.l.b16 %v3238
        %v3367 = vunpack.c.l.b16 %v3239
        %v3368 = vunpack.c.l.b16 %v3240
        %v3369 = vunpack.c.l.b16 %v3241
        %v3370 = vunpack.c.l.b16 %v3242
        %v3371 = vunpack.c.l.b16 %v3243
        %v3372 = vunpack.c.l.b16 %v3244
        %v3373 = vunpack.c.l.b16 %v3245
        %v3374 = vunpack.c.l.b16 %v3246
        %v3375 = vunpack.c.l.b16 %v3247
        %v3376 = vunpack.c.l.b16 %v3248
        %v3377 = vunpack.c.l.b16 %v3249
        %v3378 = vunpack.c.l.b16 %v3250
        %v3379 = vunpack.c.l.b16 %v3251
        %v3380 = vunpack.c.l.b16 %v3252
        %v3381 = vunpack.c.l.b16 %v3253
        %v3382 = vunpack.c.l.b16 %v3254
        %v3383 = vunpack.c.l.b16 %v3255
        %v3384 = vunpack.c.l.b16 %v3256
        %v3385 = vunpack.c.l.b16 %v3257
        %v3386 = vunpack.c.l.b16 %v3258
        %v3387 = vunpack.c.l.b16 %v3259
        %v3388 = vunpack.c.l.b16 %v3260
        %v3389 = vunpack.c.l.b16 %v3261
        %v3390 = vunpack.c.l.b16 %v3262
        %v3391 = vunpack.c.l.b16 %v3263
        %v3392 = vunpack.c.l.b16 %v3264
        %v3393 = vunpack.c.l.b16 %v3265
        %v3394 = vunpack.c.l.b16 %v3266
        %v3395 = vunpack.c.l.b16 %v3267
        %v3396 = vunpack.c.l.b16 %v3268
        %v3397 = vunpack.c.l.b16 %v3269
        %v3398 = vunpack.c.l.b16 %v3270
        %v3399 = vunpack.c.l.b16 %v3271
        %v3400 = vunpack.c.l.b16 %v3272
        %v3401 = vunpack.c.l.b16 %v3273
        %v3402 = vunpack.c.l.b16 %v3274
        %v3403 = vunpack.c.l.b16 %v3275
        %v3404 = vunpack.c.l.b16 %v3276
        %v3405 = vunpack.c.l.b16 %v3277
        %v3406 = vunpack.c.l.b16 %v3278
        %v3407 = vunpack.c.l.b16 %v3279
        %v3408 = vunpack.c.l.b16 %v3280
        %v3409 = vunpack.c.l.b16 %v3281
        %v3410 = vunpack.c.l.b16 %v3282
        %v3411 = vunpack.c.l.b16 %v3283
        %v3412 = vunpack.c.l.b16 %v3284
        %v3413 = vunpack.c.l.b16 %v3285
        %v3414 = vunpack.c.l.b16 %v3286
        %v3415 = vunpack.c.l.b16 %v3287
        %v3416 = vunpack.c.l.b16 %v3288
        %v3417 = vunpack.c.l.b16 %v3289
        %v3418 = vunpack.c.l.b16 %v3290
        %v3419 = vunpack.c.l.b16 %v3291
        %v3420 = vunpack.c.l.b16 %v3292
        %v3421 = vunpack.c.l.b16 %v3293
        %v3422 = vunpack.c.l.b16 %v3294
        %v3423 = vunpack.c.l.b16 %v3295
        %v3424 = vunpack.c.l.b16 %v3296
        %v3425 = vunpack.c.l.b16 %v3297
        %v3426 = vunpack.c.l.b16 %v3298
        %v3427 = vpack.c.b16 %v3364, %v3363
        %v3428 = vpack.c.b16 %v3366, %v3365
        %v3429 = vpack.c.b16 %v3368, %v3367
        %v3430 = vpack.c.b16 %v3370, %v3369
        %v3431 = vpack.c.b16 %v3372, %v3371
        %v3432 = vpack.c.b16 %v3374, %v3373
        %v3433 = vpack.c.b16 %v3376, %v3375
        %v3434 = vpack.c.b16 %v3378, %v3377
        %v3435 = vpack.c.b16 %v3380, %v3379
        %v3436 = vpack.c.b16 %v3382, %v3381
        %v3437 = vpack.c.b16 %v3384, %v3383
        %v3438 = vpack.c.b16 %v3386, %v3385
        %v3439 = vpack.c.b16 %v3388, %v3387
        %v3440 = vpack.c.b16 %v3390, %v3389
        %v3441 = vpack.c.b16 %v3392, %v3391
        %v3442 = vpack.c.b16 %v3394, %v3393
        %v3443 = vpack.c.b16 %v3396, %v3395
        %v3444 = vpack.c.b16 %v3398, %v3397
        %v3445 = vpack.c.b16 %v3400, %v3399
        %v3446 = vpack.c.b16 %v3402, %v3401
        %v3447 = vpack.c.b16 %v3404, %v3403
        %v3448 = vpack.c.b16 %v3406, %v3405
        %v3449 = vpack.c.b16 %v3408, %v3407
        %v3450 = vpack.c.b16 %v3410, %v3409
        %v3451 = vpack.c.b16 %v3412, %v3411
        %v3452 = vpack.c.b16 %v3414, %v3413
        %v3453 = vpack.c.b16 %v3416, %v3415
        %v3454 = vpack.c.b16 %v3418, %v3417
        %v3455 = vpack.c.b16 %v3420, %v3419
        %v3456 = vpack.c.b16 %v3422, %v3421
        %v3457 = vpack.c.b16 %v3424, %v3423
        %v3458 = vpack.c.b16 %v3426, %v3425
        %3491 = vmatprep.subr.bf16.mxu0 0
        %3492 = vmatpush1.bf16.msra.mxu0 %v3427
        %3493 = vmatprep.subr.bf16.mxu0 0
        %3494 = vmatpush1.bf16.msra.mxu0 %v3428
        %3495 = vmatprep.subr.bf16.mxu0 0
        %3496 = vmatpush1.bf16.msra.mxu0 %v3429
        %3497 = vmatprep.subr.bf16.mxu0 0
        %3498 = vmatpush1.bf16.msra.mxu0 %v3430
        %3499 = vmatprep.subr.bf16.mxu0 0
        %3500 = vmatpush1.bf16.msra.mxu0 %v3431
        %3501 = vmatprep.subr.bf16.mxu0 0
        %3502 = vmatpush1.bf16.msra.mxu0 %v3432
        %3503 = vmatprep.subr.bf16.mxu0 0
        %3504 = vmatpush1.bf16.msra.mxu0 %v3433
        %3505 = vmatprep.subr.bf16.mxu0 0
        %3506 = vmatpush1.bf16.msra.mxu0 %v3434
        %3507 = vmatprep.subr.bf16.mxu0 0
        %3508 = vmatpush1.bf16.msra.mxu0 %v3435
        %3509 = vmatprep.subr.bf16.mxu0 0
        %3510 = vmatpush1.bf16.msra.mxu0 %v3436
        %3511 = vmatprep.subr.bf16.mxu0 0
        %3512 = vmatpush1.bf16.msra.mxu0 %v3437
        %3513 = vmatprep.subr.bf16.mxu0 0
        %3514 = vmatpush1.bf16.msra.mxu0 %v3438
        %3515 = vmatprep.subr.bf16.mxu0 0
        %3516 = vmatpush1.bf16.msra.mxu0 %v3439
        %3517 = vmatprep.subr.bf16.mxu0 0
        %3518 = vmatpush1.bf16.msra.mxu0 %v3440
        %3519 = vmatprep.subr.bf16.mxu0 0
        %3520 = vmatpush1.bf16.msra.mxu0 %v3441
        %3521 = vmatprep.subr.bf16.mxu0 0
        %3522 = vmatpush1.bf16.msra.mxu0 %v3442
        %3523 = vmatprep.mubr.bf16.mxu0 %v3232
        %3524 = vmatmul.mubr.bf16.gmra.mrb[0].mxu0 %v3231
        %v3525 = vpop.f32.mrb[0].mxu0
        %v3526 = vadd.f32 0.0, %v3525
        %v3527 = vpop.f32.mrb[0].mxu0
        %v3528 = vpop.f32.mrb[0].mxu0
        %v3529 = vadd.f32 0.0, %v3528
        %v3530 = vpop.f32.mrb[0].mxu0
        %3531 = vdwg.mxu0
        %3532 = vmatprep.subr.bf16.mxu0 0
        %3533 = vmatpush1.bf16.msra.mxu0 %v3443
        %3534 = vmatprep.subr.bf16.mxu0 0
        %3535 = vmatpush1.bf16.msra.mxu0 %v3444
        %3536 = vmatprep.subr.bf16.mxu0 0
        %3537 = vmatpush1.bf16.msra.mxu0 %v3445
        %3538 = vmatprep.subr.bf16.mxu0 0
        %3539 = vmatpush1.bf16.msra.mxu0 %v3446
        %3540 = vmatprep.subr.bf16.mxu0 0
        %3541 = vmatpush1.bf16.msra.mxu0 %v3447
        %3542 = vmatprep.subr.bf16.mxu0 0
        %3543 = vmatpush1.bf16.msra.mxu0 %v3448
        %3544 = vmatprep.subr.bf16.mxu0 0
        %3545 = vmatpush1.bf16.msra.mxu0 %v3449
        %3546 = vmatprep.subr.bf16.mxu0 0
        %3547 = vmatpush1.bf16.msra.mxu0 %v3450
        %3548 = vmatprep.subr.bf16.mxu0 0
        %3549 = vmatpush1.bf16.msra.mxu0 %v3451
        %3550 = vmatprep.subr.bf16.mxu0 0
        %3551 = vmatpush1.bf16.msra.mxu0 %v3452
        %3552 = vmatprep.subr.bf16.mxu0 0
        %3553 = vmatpush1.bf16.msra.mxu0 %v3453
        %3554 = vmatprep.subr.bf16.mxu0 0
        %3555 = vmatpush1.bf16.msra.mxu0 %v3454
        %3556 = vmatprep.subr.bf16.mxu0 0
        %3557 = vmatpush1.bf16.msra.mxu0 %v3455
        %3558 = vmatprep.subr.bf16.mxu0 0
        %3559 = vmatpush1.bf16.msra.mxu0 %v3456
        %3560 = vmatprep.subr.bf16.mxu0 0
        %3561 = vmatpush1.bf16.msra.mxu0 %v3457
        %3562 = vmatprep.subr.bf16.mxu0 0
        %3563 = vmatpush1.bf16.msra.mxu0 %v3458
        %3564 = vmatprep.mubr.bf16.mxu0 %v3234
        %3565 = vmatmul.mubr.bf16.gmra.mrb[0].mxu0 %v3233
        %v3566 = vpop.f32.mrb[0].mxu0
        %v3567 = vadd.f32 %v3526, %v3566
        %v3568 = vpop.f32.mrb[0].mxu0
        %v3569 = vpop.f32.mrb[0].mxu0
        %v3570 = vadd.f32 %v3529, %v3569
        %v3571 = vpop.f32.mrb[0].mxu0
        %3572 = vdwg.mxu0
        %v3573 = vadd.f32 %v2880, %v3567
        %v3574 = vadd.f32 %v2881, %v3570
        %v3575 = vld [vmem:[%s779] sm:$0x1]
        %v3577 = vlaneseq
        %v3578 = vshrl.u32 %v3577, 7
        %v3579 = vsub.s32 0, %v3578
        %v3580 = vrot.slane %v3575, %v3579
        %v3582 = vadd.f32 %v3573, %v3580
        %v3583 = vadd.f32 %v3574, %v3580
        %3584 = vst [vmem:[#allocation2] sm:$0xff] %v3582
        %3585 = vst [vmem:[#allocation2 + $0x8] sm:$0xff] %v3583
        %p3586 = scmp.eq.s32.totalorder %s44, 1
        // Predicated region
        $region105: #{tpu_custom_call.1} parent=71 // pred_check
          %p3587 = pneg %p3586
        $region106: #{tpu_custom_call.1} parent=71 // pred_check_branch
          %3589 = sbr.rel (%p3587) target = $region108
        $region107: #{tpu_custom_call.1} parent=71 // pred_region
          %3590 = vst [vmem:[%s759] sm:$0xff] %v3582
          %3591 = vst [vmem:[%s759 + $0x8] sm:$0xff] %v3583
        $region108: #{tpu_custom_call.1} parent=71 // pred_fallthru
          _
        %s3592 = sand.u32 %s397, 1
        %s3593 = scalar_lea.sflag [#allocation5], %s3592
        %s3594 = sand.u32 %s397, 1
        %s3595 = smul.addr %s3594, 16
        %s3596 = scalar_lea.vmem [#allocation15], %s3595
        // Predicated region
        $region109: #{tpu_custom_call.1} parent=71 // pred_check
          %p3597 = pneg %p407
        $region110: #{tpu_custom_call.1} parent=71 // pred_check_branch
          %3599 = sbr.rel (%p3597) target = $region112
        $region111: #{tpu_custom_call.1} parent=71 // pred_region
          %s3601 = ssub.s32 256, 256
          %3602 = vsyncadd %s3593, %s3601
          %s3603 = smul.addr %s43, 2
          %s3604 = smul.addr %s3603, 128
          %s3605 = scalar_lea.hbm %s13, %s3604
          %s3606 = sshll.u32 %s3596, 4
          %s3607 = int_to_ptr.vmem [resolvable:$true] %s3606
          %3612 = dma.vmem_to_hbm [thread:$0]  %s3607, 256, %s3605, %s3593, 128, 128, 8
        $region112: #{tpu_custom_call.1} parent=71 // pred_fallthru
          _
      $region72: #{tpu_custom_call.1} parent=5 // pred_fallthru
        _
      %p3613 = scmp.le.s32.totalorder 2, %s34
      // Predicated region
      $region113: #{tpu_custom_call.1} parent=5 // pred_check
        %p3614 = pneg %p3613
      $region114: #{tpu_custom_call.1} parent=5 // pred_check_branch
        %3616 = sbr.rel (%p3614) target = $region116
      $region115: #{tpu_custom_call.1} parent=5 // pred_region
        %s3617 = ssub.s32 %s34, 2
        // Predicated region
        $region117: #{tpu_custom_call.1} parent=115 // pred_check
          %p3618 = pneg %p413
        $region118: #{tpu_custom_call.1} parent=115 // pred_check_branch
          %3620 = sbr.rel (%p3618) target = $region120
        $region119: #{tpu_custom_call.1} parent=115 // pred_region
          %s3621 = sand.u32 %s398, 1
          %s3622 = scalar_lea.sflag [#allocation5], %s3621
          %s3623 = sand.u32 %s398, 1
          %s3624 = smul.addr %s3623, 16
          %s3625 = scalar_lea.vmem [#allocation15], %s3624
          %3626 = dma.done %s3622, 256
        $region120: #{tpu_custom_call.1} parent=115 // pred_fallthru
          _
      $region116: #{tpu_custom_call.1} parent=5 // pred_fallthru
        _
    $region6: #{tpu_custom_call.1} parent=1 // loop_footer
      %s38 = sadd.s32 1, %s34
    $region7: #{tpu_custom_call.1} parent=1 // loop_footer_branch
      %33 = sbr.rel target = $region3
    $region8: #{tpu_custom_call.1} parent=1 // loop_exit
      _
    %3627 = vsyncpa [#allocation4], 1
    %s3628 = scalar_lea.sflag [#allocation4], 1
    %3629 = vsyncpa %s3628, 1
    %3630 = vsyncpa [#allocation7], 1
    %s3631 = scalar_lea.sflag [#allocation7], 1
    %3632 = vsyncpa %s3631, 1
    %3633 = vsyncpa [#allocation10], 1
    %s3634 = scalar_lea.sflag [#allocation10], 1
    %3635 = vsyncpa %s3634, 1
    %3636 = vsyncpa [#allocation13], 1
    %s3637 = scalar_lea.sflag [#allocation13], 1
    %3638 = vsyncpa %s3637, 1
    %3639 = vsyncpa [#allocation5], 1
    %s3640 = scalar_lea.sflag [#allocation5], 1
    %3641 = vsyncpa %s3640, 1

</llo_original>
